<compile_context>
chip_gen: v7x
topology: tpu7x:2x2x1
jax: 0.10.0
libtpu: 0.0.40
codegen_flags: <defaults>
</compile_context>

<pallas_src>
import functools

import jax
import jax.numpy as jnp
from jax.experimental import pallas as pl
from jax.experimental.pallas import tpu as pltpu

# ---- model hyperparameters (small, consistent with the module) ----
BATCH = 2
SEQ = 16
EMBED = 64
NUM_HEADS = 4
HEAD_DIM = EMBED // NUM_HEADS
MLP_RATIO = 4.0
MLP_HIDDEN = int(EMBED * MLP_RATIO)
LN_EPS = 1e-5


def _layer_norm(x, w, b):
    # Two-pass variance (matches torch / avoids mean(x^2)-mu^2 cancellation).
    mu = jnp.mean(x, axis=-1, keepdims=True)
    xc = x - mu
    var = jnp.mean(xc * xc, axis=-1, keepdims=True)
    return xc * jax.lax.rsqrt(var + LN_EPS) * w + b


def _gelu_exact(x):
    # torch nn.GELU() default = exact erf form.  erf via A&S 7.1.26
    # (|err| <= 1.5e-7); uses only exp/mul/add/div/where so it always lowers.
    z = x * 0.7071067811865476
    az = jnp.abs(z)
    t = 1.0 / (1.0 + 0.3275911 * az)
    poly = ((((1.061405429 * t - 1.453152027) * t + 1.421413741) * t
             - 0.284496736) * t + 0.254829592) * t
    erf_az = 1.0 - poly * jnp.exp(-az * az)
    erf_z = jnp.where(z >= 0.0, erf_az, -erf_az)
    return 0.5 * x * (1.0 + erf_z)


_NT_DIMS = (((1,), (1,)), ((), ()))   # q @ k^T without materializing k^T


def _transformer_block_kernel(
    x_ref,                       # (R, E) f32, R = batch_per_step * seq_len
    ln1w_ref, ln1b_ref,          # (1, E) f32
    wqkv_ref, bqkv_ref,          # (E, 3E) bf16 / (1, 3E) f32 (scale in Q third)
    wproj_ref, bproj_ref,        # (E, E) bf16 / (1, E) f32
    ln2w_ref, ln2b_ref,          # (1, E) f32
    w1_ref, b1_ref,              # (E, M) bf16 / (1, M) f32
    w2_ref, b2_ref,              # (M, E) bf16 / (1, E) f32
    out_ref,                     # (R, E) f32
    qkv_ref,                     # (R, 3E) f32 VMEM scratch
    ctx_ref,                     # (R, E)  f32 VMEM scratch (merged-head context)
    *, seq_len, num_heads, head_dim,
):
    x = x_ref[...]
    rows, embed = x.shape
    nb = rows // seq_len

    # ---- LayerNorm 1 (pre-norm) ----
    xn = _layer_norm(x, ln1w_ref[...], ln1b_ref[...])

    # ---- fused QKV projection: one lane-dense bf16 matmul, f32 accumulate ----
    qkv_ref[...] = jnp.dot(xn.astype(jnp.bfloat16), wqkv_ref[...],
                           preferred_element_type=jnp.float32) + bqkv_ref[...]

    # ---- attention core: static unroll over (batch, head) ----
    # Same MXU op count as a head-batched einsum at these shapes; all head
    # slicing is masked VMEM loads/stores, no major<->sublane relayouts.
    for b in range(nb):
        r0 = b * seq_len
        for h in range(num_heads):
            c0 = h * head_dim
            q = qkv_ref[r0:r0 + seq_len, c0:c0 + head_dim]              # pre-scaled
            k = qkv_ref[r0:r0 + seq_len, embed + c0:embed + c0 + head_dim]
            v = qkv_ref[r0:r0 + seq_len, 2 * embed + c0:2 * embed + c0 + head_dim]
            s = jax.lax.dot_general(q, k, _NT_DIMS,
                                    preferred_element_type=jnp.float32)  # (S, S)
            s = s - jnp.max(s, axis=-1, keepdims=True)
            p = jnp.exp(s)
            p = p * pl.reciprocal(jnp.sum(p, axis=-1, keepdims=True), approx=True)
            ctx_ref[r0:r0 + seq_len, c0:c0 + head_dim] = jnp.dot(
                p, v, preferred_element_type=jnp.float32)

    # ---- output projection: single K=E contraction (heads merged in lanes) ----
    attn_out = jnp.dot(ctx_ref[...].astype(jnp.bfloat16), wproj_ref[...],
                       preferred_element_type=jnp.float32) + bproj_ref[...]

    # ---- residual 1, LayerNorm 2, MLP (exact GELU), residual 2 ----
    x1 = x + attn_out
    x1n = _layer_norm(x1, ln2w_ref[...], ln2b_ref[...])
    h1 = jnp.dot(x1n.astype(jnp.bfloat16), w1_ref[...],
                 preferred_element_type=jnp.float32) + b1_ref[...]
    h1 = _gelu_exact(h1)
    mlp_out = jnp.dot(h1.astype(jnp.bfloat16), w2_ref[...],
                      preferred_element_type=jnp.float32) + b2_ref[...]
    out_ref[...] = x1 + mlp_out


def _tensorcores_per_device():
    # v7x (and v4/v5p megacore) expose 2 TensorCores per JAX device; a
    # "parallel" grid dim is the only way this pallas_call can use both.
    try:
        kind = jax.devices()[0].device_kind.lower()
    except Exception:
        return 1
    return 2 if any(tag in kind for tag in ("v7", "v4", "v5p")) else 1


def transformer_block(x, params, *, batch_per_step=None):
    B, S, E = x.shape
    H, hd, M = NUM_HEADS, HEAD_DIM, MLP_HIDDEN
    assert E == H * hd

    # Grid choice: collapse batch into one step on single-TC chips; keep one
    # batch element per ("parallel") step on 2-TC chips so both cores work.
    if batch_per_step is None:
        batch_per_step = 1 if _tensorcores_per_device() >= 2 else B
    batch_per_step = max(1, min(batch_per_step, B))
    assert B % batch_per_step == 0
    steps = B // batch_per_step
    R = batch_per_step * S

    # ---- host-side weight prep (tiny; constant-foldable under jit) ----
    scale = float(hd) ** -0.5                      # 0.25: exact power of two
    qscale = jnp.concatenate([jnp.full((E,), scale, jnp.float32),
                              jnp.ones((2 * E,), jnp.float32)])
    w_qkv = (params["w_qkv"] * qscale[None, :]).astype(jnp.bfloat16)   # (E, 3E)
    b_qkv = (params["b_qkv"] * qscale[None, :]).astype(jnp.float32)    # (1, 3E)
    w_proj = params["w_proj"].astype(jnp.bfloat16)
    w1 = params["w_fc1"].astype(jnp.bfloat16)
    w2 = params["w_fc2"].astype(jnp.bfloat16)

    # (B,S,E)->(B*S,E) is a free row-major reshape done in the wrapper so the
    # kernel only ever sees 2-D, lane-dense operands.
    x2d = x.reshape(B * S, E)

    def rep(shape):
        # Grid-invariant (replicated) block: same block every step.
        return pl.BlockSpec(shape, lambda i, _n=len(shape): (0,) * _n)

    in_specs = [
        pl.BlockSpec((R, E), lambda i: (i, 0)),     # x rows for this step
        rep((1, E)), rep((1, E)),                   # ln1 w, b
        rep((E, 3 * E)), rep((1, 3 * E)),           # fused qkv W, b
        rep((E, E)), rep((1, E)),                   # proj W, b
        rep((1, E)), rep((1, E)),                   # ln2 w, b
        rep((E, M)), rep((1, M)),                   # fc1 W, b
        rep((M, E)), rep((1, E)),                   # fc2 W, b
    ]

    kernel = functools.partial(_transformer_block_kernel,
                               seq_len=S, num_heads=H, head_dim=hd)

    out2d = pl.pallas_call(
        kernel,
        out_shape=jax.ShapeDtypeStruct((B * S, E), jnp.float32),
        grid_spec=pltpu.PrefetchScalarGridSpec(
            num_scalar_prefetch=0,
            grid=(steps,),
            in_specs=in_specs,
            out_specs=pl.BlockSpec((R, E), lambda i: (i, 0)),
            scratch_shapes=[pltpu.VMEM((R, 3 * E), jnp.float32),
                            pltpu.VMEM((R, E), jnp.float32)],
        ),
        compiler_params=pltpu.CompilerParams(
            dimension_semantics=("parallel",),
        ),
    )(
        x2d,
        params["ln1_w"], params["ln1_b"],
        w_qkv, b_qkv,
        w_proj, params["b_proj"],
        params["ln2_w"], params["ln2_b"],
        w1, params["b_fc1"],
        w2, params["b_fc2"],
    )
    return out2d.reshape(B, S, E)


def _reference(x, p, *, cast_bf16=False):
    """Pure-JAX reference mirroring the PyTorch forward (eval, no mask).

    cast_bf16=True mirrors the kernel's bf16 MXU operands (weights + matmul
    LHS activations round-tripped through bf16, f32 accumulation) so a tight
    tolerance check catches layout/indexing bugs rather than expected casts.
    """
    def mc(a):
        return a.astype(jnp.bfloat16).astype(jnp.float32) if cast_bf16 else a

    def ln(z, w, b):
        mu = jnp.mean(z, axis=-1, keepdims=True)
        var = jnp.mean((z - mu) ** 2, axis=-1, keepdims=True)
        return (z - mu) / jnp.sqrt(var + LN_EPS) * w[0] + b[0]

    B, S, E = x.shape
    w_qkv, w_proj = mc(p["w_qkv"]), mc(p["w_proj"])
    w1, w2 = mc(p["w_fc1"]), mc(p["w_fc2"])

    xn = ln(x, p["ln1_w"], p["ln1_b"])
    qkv = mc(xn) @ w_qkv + p["b_qkv"][0]
    qkv = qkv.reshape(B, S, 3, NUM_HEADS, HEAD_DIM).transpose(2, 0, 3, 1, 4)
    q, k, v = qkv[0], qkv[1], qkv[2]                      # (B, H, S, hd)
    attn = (q @ jnp.swapaxes(k, -2, -1)) * (HEAD_DIM ** -0.5)
    attn = jax.nn.softmax(attn, axis=-1)
    ctx = (attn @ v).transpose(0, 2, 1, 3).reshape(B, S, E)
    x = x + (mc(ctx) @ w_proj + p["b_proj"][0])
    xn2 = ln(x, p["ln2_w"], p["ln2_b"])
    h = jax.nn.gelu(mc(xn2) @ w1 + p["b_fc1"][0], approximate=False)
    return x + (mc(h) @ w2 + p["b_fc2"][0])


def _init_params(key):
    ks = jax.random.split(key, 8)
    s = 0.02
    return {
        "ln1_w": jnp.ones((1, EMBED), jnp.float32),
        "ln1_b": jnp.zeros((1, EMBED), jnp.float32),
        "w_qkv": (s * jax.random.normal(ks[0], (EMBED, 3 * EMBED))).astype(jnp.float32),
        "b_qkv": (s * jax.random.normal(ks[1], (1, 3 * EMBED))).astype(jnp.float32),
        "w_proj": (s * jax.random.normal(ks[2], (EMBED, EMBED))).astype(jnp.float32),
        "b_proj": (s * jax.random.normal(ks[3], (1, EMBED))).astype(jnp.float32),
        "ln2_w": jnp.ones((1, EMBED), jnp.float32),
        "ln2_b": jnp.zeros((1, EMBED), jnp.float32),
        "w_fc1": (s * jax.random.normal(ks[4], (EMBED, MLP_HIDDEN))).astype(jnp.float32),
        "b_fc1": (s * jax.random.normal(ks[5], (1, MLP_HIDDEN))).astype(jnp.float32),
        "w_fc2": (s * jax.random.normal(ks[6], (MLP_HIDDEN, EMBED))).astype(jnp.float32),
        "b_fc2": (s * jax.random.normal(ks[7], (1, EMBED))).astype(jnp.float32),
    }


if __name__ == "__main__":
    key = jax.random.PRNGKey(0)
    k_x, k_p = jax.random.split(key)
    x = jax.random.normal(k_x, (BATCH, SEQ, EMBED), dtype=jnp.float32)
    params = _init_params(k_p)

    out = jax.block_until_ready(transformer_block(x, params))
    assert out.shape == (BATCH, SEQ, EMBED)

    ref_bf16 = _reference(x, params, cast_bf16=True)    # mirrors kernel casts
    ref_f32 = _reference(x, params, cast_bf16=False)    # exact-f32 semantics

    err_bf16 = float(jnp.max(jnp.abs(out - ref_bf16)))
    err_f32 = float(jnp.max(jnp.abs(out - ref_f32)))
    # Tight check vs the bf16-mirrored reference (catches layout/index bugs);
    # residual diffs are the approx softmax reciprocal + accumulation order.
    assert jnp.allclose(out, ref_bf16, atol=5e-3, rtol=5e-3), (
        f"mismatch vs bf16-weight reference (max |err| = {err_bf16})")
    # Loose check vs the pure-f32 reference (expected bf16-cast deviation).
    assert jnp.allclose(out, ref_f32, atol=2e-2, rtol=2e-2), (
        f"mismatch vs f32 reference (max |err| = {err_f32})")

    print("KERNEL_OK")
</pallas_src>

<mosaic_0001>
module attributes {stable_mosaic.version = 11 : i64} {
  func.func @_transformer_block_kernel(%arg0: i32, %arg1: memref<32x64xf32, #tpu.memory_space<vmem>>, %arg2: memref<1x64xf32, #tpu.memory_space<vmem>>, %arg3: memref<1x64xf32, #tpu.memory_space<vmem>>, %arg4: memref<64x192xbf16, #tpu.memory_space<vmem>>, %arg5: memref<1x192xf32, #tpu.memory_space<vmem>>, %arg6: memref<64x64xbf16, #tpu.memory_space<vmem>>, %arg7: memref<1x64xf32, #tpu.memory_space<vmem>>, %arg8: memref<1x64xf32, #tpu.memory_space<vmem>>, %arg9: memref<1x64xf32, #tpu.memory_space<vmem>>, %arg10: memref<64x256xbf16, #tpu.memory_space<vmem>>, %arg11: memref<1x256xf32, #tpu.memory_space<vmem>>, %arg12: memref<256x64xbf16, #tpu.memory_space<vmem>>, %arg13: memref<1x64xf32, #tpu.memory_space<vmem>>, %arg14: memref<32x64xf32, #tpu.memory_space<vmem>>, %arg15: memref<32x192xf32, #tpu.memory_space<vmem>>, %arg16: memref<32x64xf32, #tpu.memory_space<vmem>>) attributes {dimension_semantics = [#tpu.dimension_semantics<parallel>], iteration_bounds = array<i64: 1>, scalar_prefetch = 0 : i64, scratch_operands = 2 : i64, tpu.core_type = #tpu.core_type<tc>, window_params = [{transform_indices = @transform_0, window_bounds = array<i64: 32, 64>}, {pipeline_mode = #tpu.pipeline_mode<synchronous>, transform_indices = @transform_1, window_bounds = array<i64: 1, 64>}, {pipeline_mode = #tpu.pipeline_mode<synchronous>, transform_indices = @transform_2, window_bounds = array<i64: 1, 64>}, {pipeline_mode = #tpu.pipeline_mode<synchronous>, transform_indices = @transform_3, window_bounds = array<i64: 64, 192>}, {pipeline_mode = #tpu.pipeline_mode<synchronous>, transform_indices = @transform_4, window_bounds = array<i64: 1, 192>}, {pipeline_mode = #tpu.pipeline_mode<synchronous>, transform_indices = @transform_5, window_bounds = array<i64: 64, 64>}, {pipeline_mode = #tpu.pipeline_mode<synchronous>, transform_indices = @transform_6, window_bounds = array<i64: 1, 64>}, {pipeline_mode = #tpu.pipeline_mode<synchronous>, transform_indices = @transform_7, window_bounds = array<i64: 1, 64>}, {pipeline_mode = #tpu.pipeline_mode<synchronous>, transform_indices = @transform_8, window_bounds = array<i64: 1, 64>}, {pipeline_mode = #tpu.pipeline_mode<synchronous>, transform_indices = @transform_9, window_bounds = array<i64: 64, 256>}, {pipeline_mode = #tpu.pipeline_mode<synchronous>, transform_indices = @transform_10, window_bounds = array<i64: 1, 256>}, {pipeline_mode = #tpu.pipeline_mode<synchronous>, transform_indices = @transform_11, window_bounds = array<i64: 256, 64>}, {pipeline_mode = #tpu.pipeline_mode<synchronous>, transform_indices = @transform_12, window_bounds = array<i64: 1, 64>}, {transform_indices = @transform_13, window_bounds = array<i64: 32, 64>}]} {
    %c0 = arith.constant 0 : index
    %c0_0 = arith.constant 0 : index
    %0 = vector.load %arg1[%c0, %c0_0] : memref<32x64xf32, #tpu.memory_space<vmem>>, vector<32x64xf32>
    %c0_1 = arith.constant 0 : index
    %c0_2 = arith.constant 0 : index
    %1 = vector.load %arg2[%c0_1, %c0_2] : memref<1x64xf32, #tpu.memory_space<vmem>>, vector<1x64xf32>
    %c0_3 = arith.constant 0 : index
    %c0_4 = arith.constant 0 : index
    %2 = vector.load %arg3[%c0_3, %c0_4] : memref<1x64xf32, #tpu.memory_space<vmem>>, vector<1x64xf32>
    %cst = arith.constant dense<0.000000e+00> : vector<32xf32>
    %3 = vector.multi_reduction <add>, %0, %cst [1] : vector<32x64xf32> to vector<32xf32>
    %4 = vector.shape_cast %3 : vector<32xf32> to vector<32x1xf32>
    %cst_5 = arith.constant 6.400000e+01 : f32
    %5 = vector.broadcast %cst_5 : f32 to vector<32x1xf32>
    %6 = arith.divf %4, %5 : vector<32x1xf32>
    %7 = vector.broadcast %6 : vector<32x1xf32> to vector<32x64xf32>
    %8 = arith.subf %0, %7 : vector<32x64xf32>
    %9 = arith.mulf %8, %8 : vector<32x64xf32>
    %cst_6 = arith.constant dense<0.000000e+00> : vector<32xf32>
    %10 = vector.multi_reduction <add>, %9, %cst_6 [1] : vector<32x64xf32> to vector<32xf32>
    %11 = vector.shape_cast %10 : vector<32xf32> to vector<32x1xf32>
    %cst_7 = arith.constant 6.400000e+01 : f32
    %12 = vector.broadcast %cst_7 : f32 to vector<32x1xf32>
    %13 = arith.divf %11, %12 : vector<32x1xf32>
    %cst_8 = arith.constant 9.99999974E-6 : f32
    %14 = vector.broadcast %cst_8 : f32 to vector<32x1xf32>
    %15 = arith.addf %13, %14 : vector<32x1xf32>
    %16 = math.rsqrt %15 : vector<32x1xf32>
    %17 = vector.broadcast %16 : vector<32x1xf32> to vector<32x64xf32>
    %18 = arith.mulf %8, %17 : vector<32x64xf32>
    %19 = vector.broadcast %1 : vector<1x64xf32> to vector<32x64xf32>
    %20 = arith.mulf %18, %19 : vector<32x64xf32>
    %21 = vector.broadcast %2 : vector<1x64xf32> to vector<32x64xf32>
    %22 = arith.addf %20, %21 : vector<32x64xf32>
    %23 = arith.truncf %22 : vector<32x64xf32> to vector<32x64xbf16>
    %c0_9 = arith.constant 0 : index
    %c0_10 = arith.constant 0 : index
    %24 = vector.load %arg4[%c0_9, %c0_10] : memref<64x192xbf16, #tpu.memory_space<vmem>>, vector<64x192xbf16>
    %cst_11 = arith.constant dense<0.000000e+00> : vector<32x192xf32>
    %25 = tpu.matmul %23, %24, %cst_11 {dimension_numbers = #tpu.dot_dimension_numbers<[1], [0], [0], [1], [0, 0, 1, 1], [], []>} : vector<32x64xbf16>, vector<64x192xbf16>, vector<32x192xf32> -> vector<32x192xf32>
    %c0_12 = arith.constant 0 : index
    %c0_13 = arith.constant 0 : index
    %26 = vector.load %arg5[%c0_12, %c0_13] : memref<1x192xf32, #tpu.memory_space<vmem>>, vector<1x192xf32>
    %27 = vector.broadcast %26 : vector<1x192xf32> to vector<32x192xf32>
    %28 = arith.addf %25, %27 : vector<32x192xf32>
    %c0_14 = arith.constant 0 : index
    %c0_15 = arith.constant 0 : index
    %29 = vector.load %arg15[%c0_14, %c0_15] : memref<32x192xf32, #tpu.memory_space<vmem>>, vector<32x192xf32>
    tpu.vector_store %arg15[%c0_14, %c0_15], %28 {strides = array<i32>} : memref<32x192xf32, #tpu.memory_space<vmem>>, vector<32x192xf32>,
    %c0_16 = arith.constant 0 : index
    %c0_17 = arith.constant 0 : index
    %30 = vector.load %arg15[%c0_16, %c0_17] : memref<32x192xf32, #tpu.memory_space<vmem>>, vector<16x16xf32>
    %c0_18 = arith.constant 0 : index
    %c64 = arith.constant 64 : index
    %31 = vector.load %arg15[%c0_18, %c64] : memref<32x192xf32, #tpu.memory_space<vmem>>, vector<16x16xf32>
    %c0_19 = arith.constant 0 : index
    %c128 = arith.constant 128 : index
    %32 = vector.load %arg15[%c0_19, %c128] : memref<32x192xf32, #tpu.memory_space<vmem>>, vector<16x16xf32>
    %cst_20 = arith.constant dense<0.000000e+00> : vector<16x16xf32>
    %33 = tpu.matmul %30, %31, %cst_20 {dimension_numbers = #tpu.dot_dimension_numbers<[1], [1], [0], [0], [0, 0, 1, 0], [], []>} : vector<16x16xf32>, vector<16x16xf32>, vector<16x16xf32> -> vector<16x16xf32>
    %cst_21 = arith.constant dense<0xFF800000> : vector<16xf32>
    %34 = vector.multi_reduction <maximumf>, %33, %cst_21 [1] : vector<16x16xf32> to vector<16xf32>
    %35 = vector.shape_cast %34 : vector<16xf32> to vector<16x1xf32>
    %36 = vector.broadcast %35 : vector<16x1xf32> to vector<16x16xf32>
    %37 = arith.subf %33, %36 : vector<16x16xf32>
    %38 = math.exp %37 : vector<16x16xf32>
    %cst_22 = arith.constant dense<0.000000e+00> : vector<16xf32>
    %39 = vector.multi_reduction <add>, %38, %cst_22 [1] : vector<16x16xf32> to vector<16xf32>
    %40 = vector.shape_cast %39 : vector<16xf32> to vector<16x1xf32>
    %41 = tpu.reciprocal %40 {approx = true} : vector<16x1xf32> -> vector<16x1xf32>
    %42 = vector.broadcast %41 : vector<16x1xf32> to vector<16x16xf32>
    %43 = arith.mulf %38, %42 : vector<16x16xf32>
    %cst_23 = arith.constant dense<0.000000e+00> : vector<16x16xf32>
    %44 = tpu.matmul %43, %32, %cst_23 {dimension_numbers = #tpu.dot_dimension_numbers<[1], [0], [0], [1], [0, 0, 1, 1], [], []>} : vector<16x16xf32>, vector<16x16xf32>, vector<16x16xf32> -> vector<16x16xf32>
    %c0_24 = arith.constant 0 : index
    %c0_25 = arith.constant 0 : index
    %45 = vector.load %arg16[%c0_24, %c0_25] : memref<32x64xf32, #tpu.memory_space<vmem>>, vector<16x16xf32>
    tpu.vector_store %arg16[%c0_24, %c0_25], %44 {strides = array<i32>} : memref<32x64xf32, #tpu.memory_space<vmem>>, vector<16x16xf32>,
    %c0_26 = arith.constant 0 : index
    %c16 = arith.constant 16 : index
    %46 = vector.load %arg15[%c0_26, %c16] : memref<32x192xf32, #tpu.memory_space<vmem>>, vector<16x16xf32>
    %c0_27 = arith.constant 0 : index
    %c80 = arith.constant 80 : index
    %47 = vector.load %arg15[%c0_27, %c80] : memref<32x192xf32, #tpu.memory_space<vmem>>, vector<16x16xf32>
    %c0_28 = arith.constant 0 : index
    %c144 = arith.constant 144 : index
    %48 = vector.load %arg15[%c0_28, %c144] : memref<32x192xf32, #tpu.memory_space<vmem>>, vector<16x16xf32>
    %cst_29 = arith.constant dense<0.000000e+00> : vector<16x16xf32>
    %49 = tpu.matmul %46, %47, %cst_29 {dimension_numbers = #tpu.dot_dimension_numbers<[1], [1], [0], [0], [0, 0, 1, 0], [], []>} : vector<16x16xf32>, vector<16x16xf32>, vector<16x16xf32> -> vector<16x16xf32>
    %cst_30 = arith.constant dense<0xFF800000> : vector<16xf32>
    %50 = vector.multi_reduction <maximumf>, %49, %cst_30 [1] : vector<16x16xf32> to vector<16xf32>
    %51 = vector.shape_cast %50 : vector<16xf32> to vector<16x1xf32>
    %52 = vector.broadcast %51 : vector<16x1xf32> to vector<16x16xf32>
    %53 = arith.subf %49, %52 : vector<16x16xf32>
    %54 = math.exp %53 : vector<16x16xf32>
    %cst_31 = arith.constant dense<0.000000e+00> : vector<16xf32>
    %55 = vector.multi_reduction <add>, %54, %cst_31 [1] : vector<16x16xf32> to vector<16xf32>
    %56 = vector.shape_cast %55 : vector<16xf32> to vector<16x1xf32>
    %57 = tpu.reciprocal %56 {approx = true} : vector<16x1xf32> -> vector<16x1xf32>
    %58 = vector.broadcast %57 : vector<16x1xf32> to vector<16x16xf32>
    %59 = arith.mulf %54, %58 : vector<16x16xf32>
    %cst_32 = arith.constant dense<0.000000e+00> : vector<16x16xf32>
    %60 = tpu.matmul %59, %48, %cst_32 {dimension_numbers = #tpu.dot_dimension_numbers<[1], [0], [0], [1], [0, 0, 1, 1], [], []>} : vector<16x16xf32>, vector<16x16xf32>, vector<16x16xf32> -> vector<16x16xf32>
    %c0_33 = arith.constant 0 : index
    %c16_34 = arith.constant 16 : index
    %61 = vector.load %arg16[%c0_33, %c16_34] : memref<32x64xf32, #tpu.memory_space<vmem>>, vector<16x16xf32>
    tpu.vector_store %arg16[%c0_33, %c16_34], %60 {strides = array<i32>} : memref<32x64xf32, #tpu.memory_space<vmem>>, vector<16x16xf32>,
    %c0_35 = arith.constant 0 : index
    %c32 = arith.constant 32 : index
    %62 = vector.load %arg15[%c0_35, %c32] : memref<32x192xf32, #tpu.memory_space<vmem>>, vector<16x16xf32>
    %c0_36 = arith.constant 0 : index
    %c96 = arith.constant 96 : index
    %63 = vector.load %arg15[%c0_36, %c96] : memref<32x192xf32, #tpu.memory_space<vmem>>, vector<16x16xf32>
    %c0_37 = arith.constant 0 : index
    %c160 = arith.constant 160 : index
    %64 = vector.load %arg15[%c0_37, %c160] : memref<32x192xf32, #tpu.memory_space<vmem>>, vector<16x16xf32>
    %cst_38 = arith.constant dense<0.000000e+00> : vector<16x16xf32>
    %65 = tpu.matmul %62, %63, %cst_38 {dimension_numbers = #tpu.dot_dimension_numbers<[1], [1], [0], [0], [0, 0, 1, 0], [], []>} : vector<16x16xf32>, vector<16x16xf32>, vector<16x16xf32> -> vector<16x16xf32>
    %cst_39 = arith.constant dense<0xFF800000> : vector<16xf32>
    %66 = vector.multi_reduction <maximumf>, %65, %cst_39 [1] : vector<16x16xf32> to vector<16xf32>
    %67 = vector.shape_cast %66 : vector<16xf32> to vector<16x1xf32>
    %68 = vector.broadcast %67 : vector<16x1xf32> to vector<16x16xf32>
    %69 = arith.subf %65, %68 : vector<16x16xf32>
    %70 = math.exp %69 : vector<16x16xf32>
    %cst_40 = arith.constant dense<0.000000e+00> : vector<16xf32>
    %71 = vector.multi_reduction <add>, %70, %cst_40 [1] : vector<16x16xf32> to vector<16xf32>
    %72 = vector.shape_cast %71 : vector<16xf32> to vector<16x1xf32>
    %73 = tpu.reciprocal %72 {approx = true} : vector<16x1xf32> -> vector<16x1xf32>
    %74 = vector.broadcast %73 : vector<16x1xf32> to vector<16x16xf32>
    %75 = arith.mulf %70, %74 : vector<16x16xf32>
    %cst_41 = arith.constant dense<0.000000e+00> : vector<16x16xf32>
    %76 = tpu.matmul %75, %64, %cst_41 {dimension_numbers = #tpu.dot_dimension_numbers<[1], [0], [0], [1], [0, 0, 1, 1], [], []>} : vector<16x16xf32>, vector<16x16xf32>, vector<16x16xf32> -> vector<16x16xf32>
    %c0_42 = arith.constant 0 : index
    %c32_43 = arith.constant 32 : index
    %77 = vector.load %arg16[%c0_42, %c32_43] : memref<32x64xf32, #tpu.memory_space<vmem>>, vector<16x16xf32>
    tpu.vector_store %arg16[%c0_42, %c32_43], %76 {strides = array<i32>} : memref<32x64xf32, #tpu.memory_space<vmem>>, vector<16x16xf32>,
    %c0_44 = arith.constant 0 : index
    %c48 = arith.constant 48 : index
    %78 = vector.load %arg15[%c0_44, %c48] : memref<32x192xf32, #tpu.memory_space<vmem>>, vector<16x16xf32>
    %c0_45 = arith.constant 0 : index
    %c112 = arith.constant 112 : index
    %79 = vector.load %arg15[%c0_45, %c112] : memref<32x192xf32, #tpu.memory_space<vmem>>, vector<16x16xf32>
    %c0_46 = arith.constant 0 : index
    %c176 = arith.constant 176 : index
    %80 = vector.load %arg15[%c0_46, %c176] : memref<32x192xf32, #tpu.memory_space<vmem>>, vector<16x16xf32>
    %cst_47 = arith.constant dense<0.000000e+00> : vector<16x16xf32>
    %81 = tpu.matmul %78, %79, %cst_47 {dimension_numbers = #tpu.dot_dimension_numbers<[1], [1], [0], [0], [0, 0, 1, 0], [], []>} : vector<16x16xf32>, vector<16x16xf32>, vector<16x16xf32> -> vector<16x16xf32>
    %cst_48 = arith.constant dense<0xFF800000> : vector<16xf32>
    %82 = vector.multi_reduction <maximumf>, %81, %cst_48 [1] : vector<16x16xf32> to vector<16xf32>
    %83 = vector.shape_cast %82 : vector<16xf32> to vector<16x1xf32>
    %84 = vector.broadcast %83 : vector<16x1xf32> to vector<16x16xf32>
    %85 = arith.subf %81, %84 : vector<16x16xf32>
    %86 = math.exp %85 : vector<16x16xf32>
    %cst_49 = arith.constant dense<0.000000e+00> : vector<16xf32>
    %87 = vector.multi_reduction <add>, %86, %cst_49 [1] : vector<16x16xf32> to vector<16xf32>
    %88 = vector.shape_cast %87 : vector<16xf32> to vector<16x1xf32>
    %89 = tpu.reciprocal %88 {approx = true} : vector<16x1xf32> -> vector<16x1xf32>
    %90 = vector.broadcast %89 : vector<16x1xf32> to vector<16x16xf32>
    %91 = arith.mulf %86, %90 : vector<16x16xf32>
    %cst_50 = arith.constant dense<0.000000e+00> : vector<16x16xf32>
    %92 = tpu.matmul %91, %80, %cst_50 {dimension_numbers = #tpu.dot_dimension_numbers<[1], [0], [0], [1], [0, 0, 1, 1], [], []>} : vector<16x16xf32>, vector<16x16xf32>, vector<16x16xf32> -> vector<16x16xf32>
    %c0_51 = arith.constant 0 : index
    %c48_52 = arith.constant 48 : index
    %93 = vector.load %arg16[%c0_51, %c48_52] : memref<32x64xf32, #tpu.memory_space<vmem>>, vector<16x16xf32>
    tpu.vector_store %arg16[%c0_51, %c48_52], %92 {strides = array<i32>} : memref<32x64xf32, #tpu.memory_space<vmem>>, vector<16x16xf32>,
    %c16_53 = arith.constant 16 : index
    %c0_54 = arith.constant 0 : index
    %94 = vector.load %arg15[%c16_53, %c0_54] : memref<32x192xf32, #tpu.memory_space<vmem>>, vector<16x16xf32>
    %c16_55 = arith.constant 16 : index
    %c64_56 = arith.constant 64 : index
    %95 = vector.load %arg15[%c16_55, %c64_56] : memref<32x192xf32, #tpu.memory_space<vmem>>, vector<16x16xf32>
    %c16_57 = arith.constant 16 : index
    %c128_58 = arith.constant 128 : index
    %96 = vector.load %arg15[%c16_57, %c128_58] : memref<32x192xf32, #tpu.memory_space<vmem>>, vector<16x16xf32>
    %cst_59 = arith.constant dense<0.000000e+00> : vector<16x16xf32>
    %97 = tpu.matmul %94, %95, %cst_59 {dimension_numbers = #tpu.dot_dimension_numbers<[1], [1], [0], [0], [0, 0, 1, 0], [], []>} : vector<16x16xf32>, vector<16x16xf32>, vector<16x16xf32> -> vector<16x16xf32>
    %cst_60 = arith.constant dense<0xFF800000> : vector<16xf32>
    %98 = vector.multi_reduction <maximumf>, %97, %cst_60 [1] : vector<16x16xf32> to vector<16xf32>
    %99 = vector.shape_cast %98 : vector<16xf32> to vector<16x1xf32>
    %100 = vector.broadcast %99 : vector<16x1xf32> to vector<16x16xf32>
    %101 = arith.subf %97, %100 : vector<16x16xf32>
    %102 = math.exp %101 : vector<16x16xf32>
    %cst_61 = arith.constant dense<0.000000e+00> : vector<16xf32>
    %103 = vector.multi_reduction <add>, %102, %cst_61 [1] : vector<16x16xf32> to vector<16xf32>
    %104 = vector.shape_cast %103 : vector<16xf32> to vector<16x1xf32>
    %105 = tpu.reciprocal %104 {approx = true} : vector<16x1xf32> -> vector<16x1xf32>
    %106 = vector.broadcast %105 : vector<16x1xf32> to vector<16x16xf32>
    %107 = arith.mulf %102, %106 : vector<16x16xf32>
    %cst_62 = arith.constant dense<0.000000e+00> : vector<16x16xf32>
    %108 = tpu.matmul %107, %96, %cst_62 {dimension_numbers = #tpu.dot_dimension_numbers<[1], [0], [0], [1], [0, 0, 1, 1], [], []>} : vector<16x16xf32>, vector<16x16xf32>, vector<16x16xf32> -> vector<16x16xf32>
    %c16_63 = arith.constant 16 : index
    %c0_64 = arith.constant 0 : index
    %109 = vector.load %arg16[%c16_63, %c0_64] : memref<32x64xf32, #tpu.memory_space<vmem>>, vector<16x16xf32>
    tpu.vector_store %arg16[%c16_63, %c0_64], %108 {strides = array<i32>} : memref<32x64xf32, #tpu.memory_space<vmem>>, vector<16x16xf32>,
    %c16_65 = arith.constant 16 : index
    %c16_66 = arith.constant 16 : index
    %110 = vector.load %arg15[%c16_65, %c16_66] : memref<32x192xf32, #tpu.memory_space<vmem>>, vector<16x16xf32>
    %c16_67 = arith.constant 16 : index
    %c80_68 = arith.constant 80 : index
    %111 = vector.load %arg15[%c16_67, %c80_68] : memref<32x192xf32, #tpu.memory_space<vmem>>, vector<16x16xf32>
    %c16_69 = arith.constant 16 : index
    %c144_70 = arith.constant 144 : index
    %112 = vector.load %arg15[%c16_69, %c144_70] : memref<32x192xf32, #tpu.memory_space<vmem>>, vector<16x16xf32>
    %cst_71 = arith.constant dense<0.000000e+00> : vector<16x16xf32>
    %113 = tpu.matmul %110, %111, %cst_71 {dimension_numbers = #tpu.dot_dimension_numbers<[1], [1], [0], [0], [0, 0, 1, 0], [], []>} : vector<16x16xf32>, vector<16x16xf32>, vector<16x16xf32> -> vector<16x16xf32>
    %cst_72 = arith.constant dense<0xFF800000> : vector<16xf32>
    %114 = vector.multi_reduction <maximumf>, %113, %cst_72 [1] : vector<16x16xf32> to vector<16xf32>
    %115 = vector.shape_cast %114 : vector<16xf32> to vector<16x1xf32>
    %116 = vector.broadcast %115 : vector<16x1xf32> to vector<16x16xf32>
    %117 = arith.subf %113, %116 : vector<16x16xf32>
    %118 = math.exp %117 : vector<16x16xf32>
    %cst_73 = arith.constant dense<0.000000e+00> : vector<16xf32>
    %119 = vector.multi_reduction <add>, %118, %cst_73 [1] : vector<16x16xf32> to vector<16xf32>
    %120 = vector.shape_cast %119 : vector<16xf32> to vector<16x1xf32>
    %121 = tpu.reciprocal %120 {approx = true} : vector<16x1xf32> -> vector<16x1xf32>
    %122 = vector.broadcast %121 : vector<16x1xf32> to vector<16x16xf32>
    %123 = arith.mulf %118, %122 : vector<16x16xf32>
    %cst_74 = arith.constant dense<0.000000e+00> : vector<16x16xf32>
    %124 = tpu.matmul %123, %112, %cst_74 {dimension_numbers = #tpu.dot_dimension_numbers<[1], [0], [0], [1], [0, 0, 1, 1], [], []>} : vector<16x16xf32>, vector<16x16xf32>, vector<16x16xf32> -> vector<16x16xf32>
    %c16_75 = arith.constant 16 : index
    %c16_76 = arith.constant 16 : index
    %125 = vector.load %arg16[%c16_75, %c16_76] : memref<32x64xf32, #tpu.memory_space<vmem>>, vector<16x16xf32>
    tpu.vector_store %arg16[%c16_75, %c16_76], %124 {strides = array<i32>} : memref<32x64xf32, #tpu.memory_space<vmem>>, vector<16x16xf32>,
    %c16_77 = arith.constant 16 : index
    %c32_78 = arith.constant 32 : index
    %126 = vector.load %arg15[%c16_77, %c32_78] : memref<32x192xf32, #tpu.memory_space<vmem>>, vector<16x16xf32>
    %c16_79 = arith.constant 16 : index
    %c96_80 = arith.constant 96 : index
    %127 = vector.load %arg15[%c16_79, %c96_80] : memref<32x192xf32, #tpu.memory_space<vmem>>, vector<16x16xf32>
    %c16_81 = arith.constant 16 : index
    %c160_82 = arith.constant 160 : index
    %128 = vector.load %arg15[%c16_81, %c160_82] : memref<32x192xf32, #tpu.memory_space<vmem>>, vector<16x16xf32>
    %cst_83 = arith.constant dense<0.000000e+00> : vector<16x16xf32>
    %129 = tpu.matmul %126, %127, %cst_83 {dimension_numbers = #tpu.dot_dimension_numbers<[1], [1], [0], [0], [0, 0, 1, 0], [], []>} : vector<16x16xf32>, vector<16x16xf32>, vector<16x16xf32> -> vector<16x16xf32>
    %cst_84 = arith.constant dense<0xFF800000> : vector<16xf32>
    %130 = vector.multi_reduction <maximumf>, %129, %cst_84 [1] : vector<16x16xf32> to vector<16xf32>
    %131 = vector.shape_cast %130 : vector<16xf32> to vector<16x1xf32>
    %132 = vector.broadcast %131 : vector<16x1xf32> to vector<16x16xf32>
    %133 = arith.subf %129, %132 : vector<16x16xf32>
    %134 = math.exp %133 : vector<16x16xf32>
    %cst_85 = arith.constant dense<0.000000e+00> : vector<16xf32>
    %135 = vector.multi_reduction <add>, %134, %cst_85 [1] : vector<16x16xf32> to vector<16xf32>
    %136 = vector.shape_cast %135 : vector<16xf32> to vector<16x1xf32>
    %137 = tpu.reciprocal %136 {approx = true} : vector<16x1xf32> -> vector<16x1xf32>
    %138 = vector.broadcast %137 : vector<16x1xf32> to vector<16x16xf32>
    %139 = arith.mulf %134, %138 : vector<16x16xf32>
    %cst_86 = arith.constant dense<0.000000e+00> : vector<16x16xf32>
    %140 = tpu.matmul %139, %128, %cst_86 {dimension_numbers = #tpu.dot_dimension_numbers<[1], [0], [0], [1], [0, 0, 1, 1], [], []>} : vector<16x16xf32>, vector<16x16xf32>, vector<16x16xf32> -> vector<16x16xf32>
    %c16_87 = arith.constant 16 : index
    %c32_88 = arith.constant 32 : index
    %141 = vector.load %arg16[%c16_87, %c32_88] : memref<32x64xf32, #tpu.memory_space<vmem>>, vector<16x16xf32>
    tpu.vector_store %arg16[%c16_87, %c32_88], %140 {strides = array<i32>} : memref<32x64xf32, #tpu.memory_space<vmem>>, vector<16x16xf32>,
    %c16_89 = arith.constant 16 : index
    %c48_90 = arith.constant 48 : index
    %142 = vector.load %arg15[%c16_89, %c48_90] : memref<32x192xf32, #tpu.memory_space<vmem>>, vector<16x16xf32>
    %c16_91 = arith.constant 16 : index
    %c112_92 = arith.constant 112 : index
    %143 = vector.load %arg15[%c16_91, %c112_92] : memref<32x192xf32, #tpu.memory_space<vmem>>, vector<16x16xf32>
    %c16_93 = arith.constant 16 : index
    %c176_94 = arith.constant 176 : index
    %144 = vector.load %arg15[%c16_93, %c176_94] : memref<32x192xf32, #tpu.memory_space<vmem>>, vector<16x16xf32>
    %cst_95 = arith.constant dense<0.000000e+00> : vector<16x16xf32>
    %145 = tpu.matmul %142, %143, %cst_95 {dimension_numbers = #tpu.dot_dimension_numbers<[1], [1], [0], [0], [0, 0, 1, 0], [], []>} : vector<16x16xf32>, vector<16x16xf32>, vector<16x16xf32> -> vector<16x16xf32>
    %cst_96 = arith.constant dense<0xFF800000> : vector<16xf32>
    %146 = vector.multi_reduction <maximumf>, %145, %cst_96 [1] : vector<16x16xf32> to vector<16xf32>
    %147 = vector.shape_cast %146 : vector<16xf32> to vector<16x1xf32>
    %148 = vector.broadcast %147 : vector<16x1xf32> to vector<16x16xf32>
    %149 = arith.subf %145, %148 : vector<16x16xf32>
    %150 = math.exp %149 : vector<16x16xf32>
    %cst_97 = arith.constant dense<0.000000e+00> : vector<16xf32>
    %151 = vector.multi_reduction <add>, %150, %cst_97 [1] : vector<16x16xf32> to vector<16xf32>
    %152 = vector.shape_cast %151 : vector<16xf32> to vector<16x1xf32>
    %153 = tpu.reciprocal %152 {approx = true} : vector<16x1xf32> -> vector<16x1xf32>
    %154 = vector.broadcast %153 : vector<16x1xf32> to vector<16x16xf32>
    %155 = arith.mulf %150, %154 : vector<16x16xf32>
    %cst_98 = arith.constant dense<0.000000e+00> : vector<16x16xf32>
    %156 = tpu.matmul %155, %144, %cst_98 {dimension_numbers = #tpu.dot_dimension_numbers<[1], [0], [0], [1], [0, 0, 1, 1], [], []>} : vector<16x16xf32>, vector<16x16xf32>, vector<16x16xf32> -> vector<16x16xf32>
    %c16_99 = arith.constant 16 : index
    %c48_100 = arith.constant 48 : index
    %157 = vector.load %arg16[%c16_99, %c48_100] : memref<32x64xf32, #tpu.memory_space<vmem>>, vector<16x16xf32>
    tpu.vector_store %arg16[%c16_99, %c48_100], %156 {strides = array<i32>} : memref<32x64xf32, #tpu.memory_space<vmem>>, vector<16x16xf32>,
    %c0_101 = arith.constant 0 : index
    %c0_102 = arith.constant 0 : index
    %158 = vector.load %arg16[%c0_101, %c0_102] : memref<32x64xf32, #tpu.memory_space<vmem>>, vector<32x64xf32>
    %159 = arith.truncf %158 : vector<32x64xf32> to vector<32x64xbf16>
    %c0_103 = arith.constant 0 : index
    %c0_104 = arith.constant 0 : index
    %160 = vector.load %arg6[%c0_103, %c0_104] : memref<64x64xbf16, #tpu.memory_space<vmem>>, vector<64x64xbf16>
    %cst_105 = arith.constant dense<0.000000e+00> : vector<32x64xf32>
    %161 = tpu.matmul %159, %160, %cst_105 {dimension_numbers = #tpu.dot_dimension_numbers<[1], [0], [0], [1], [0, 0, 1, 1], [], []>} : vector<32x64xbf16>, vector<64x64xbf16>, vector<32x64xf32> -> vector<32x64xf32>
    %c0_106 = arith.constant 0 : index
    %c0_107 = arith.constant 0 : index
    %162 = vector.load %arg7[%c0_106, %c0_107] : memref<1x64xf32, #tpu.memory_space<vmem>>, vector<1x64xf32>
    %163 = vector.broadcast %162 : vector<1x64xf32> to vector<32x64xf32>
    %164 = arith.addf %161, %163 : vector<32x64xf32>
    %165 = arith.addf %0, %164 : vector<32x64xf32>
    %c0_108 = arith.constant 0 : index
    %c0_109 = arith.constant 0 : index
    %166 = vector.load %arg8[%c0_108, %c0_109] : memref<1x64xf32, #tpu.memory_space<vmem>>, vector<1x64xf32>
    %c0_110 = arith.constant 0 : index
    %c0_111 = arith.constant 0 : index
    %167 = vector.load %arg9[%c0_110, %c0_111] : memref<1x64xf32, #tpu.memory_space<vmem>>, vector<1x64xf32>
    %cst_112 = arith.constant dense<0.000000e+00> : vector<32xf32>
    %168 = vector.multi_reduction <add>, %165, %cst_112 [1] : vector<32x64xf32> to vector<32xf32>
    %169 = vector.shape_cast %168 : vector<32xf32> to vector<32x1xf32>
    %cst_113 = arith.constant 6.400000e+01 : f32
    %170 = vector.broadcast %cst_113 : f32 to vector<32x1xf32>
    %171 = arith.divf %169, %170 : vector<32x1xf32>
    %172 = vector.broadcast %171 : vector<32x1xf32> to vector<32x64xf32>
    %173 = arith.subf %165, %172 : vector<32x64xf32>
    %174 = arith.mulf %173, %173 : vector<32x64xf32>
    %cst_114 = arith.constant dense<0.000000e+00> : vector<32xf32>
    %175 = vector.multi_reduction <add>, %174, %cst_114 [1] : vector<32x64xf32> to vector<32xf32>
    %176 = vector.shape_cast %175 : vector<32xf32> to vector<32x1xf32>
    %cst_115 = arith.constant 6.400000e+01 : f32
    %177 = vector.broadcast %cst_115 : f32 to vector<32x1xf32>
    %178 = arith.divf %176, %177 : vector<32x1xf32>
    %cst_116 = arith.constant 9.99999974E-6 : f32
    %179 = vector.broadcast %cst_116 : f32 to vector<32x1xf32>
    %180 = arith.addf %178, %179 : vector<32x1xf32>
    %181 = math.rsqrt %180 : vector<32x1xf32>
    %182 = vector.broadcast %181 : vector<32x1xf32> to vector<32x64xf32>
    %183 = arith.mulf %173, %182 : vector<32x64xf32>
    %184 = vector.broadcast %166 : vector<1x64xf32> to vector<32x64xf32>
    %185 = arith.mulf %183, %184 : vector<32x64xf32>
    %186 = vector.broadcast %167 : vector<1x64xf32> to vector<32x64xf32>
    %187 = arith.addf %185, %186 : vector<32x64xf32>
    %188 = arith.truncf %187 : vector<32x64xf32> to vector<32x64xbf16>
    %c0_117 = arith.constant 0 : index
    %c0_118 = arith.constant 0 : index
    %189 = vector.load %arg10[%c0_117, %c0_118] : memref<64x256xbf16, #tpu.memory_space<vmem>>, vector<64x256xbf16>
    %cst_119 = arith.constant dense<0.000000e+00> : vector<32x256xf32>
    %190 = tpu.matmul %188, %189, %cst_119 {dimension_numbers = #tpu.dot_dimension_numbers<[1], [0], [0], [1], [0, 0, 1, 1], [], []>} : vector<32x64xbf16>, vector<64x256xbf16>, vector<32x256xf32> -> vector<32x256xf32>
    %c0_120 = arith.constant 0 : index
    %c0_121 = arith.constant 0 : index
    %191 = vector.load %arg11[%c0_120, %c0_121] : memref<1x256xf32, #tpu.memory_space<vmem>>, vector<1x256xf32>
    %192 = vector.broadcast %191 : vector<1x256xf32> to vector<32x256xf32>
    %193 = arith.addf %190, %192 : vector<32x256xf32>
    %cst_122 = arith.constant 0.707106769 : f32
    %194 = vector.broadcast %cst_122 : f32 to vector<32x256xf32>
    %195 = arith.mulf %193, %194 : vector<32x256xf32>
    %196 = math.absf %195 : vector<32x256xf32>
    %cst_123 = arith.constant 0.327591091 : f32
    %197 = vector.broadcast %cst_123 : f32 to vector<32x256xf32>
    %198 = arith.mulf %197, %196 : vector<32x256xf32>
    %cst_124 = arith.constant 1.000000e+00 : f32
    %199 = vector.broadcast %cst_124 : f32 to vector<32x256xf32>
    %200 = arith.addf %199, %198 : vector<32x256xf32>
    %cst_125 = arith.constant 1.000000e+00 : f32
    %201 = vector.broadcast %cst_125 : f32 to vector<32x256xf32>
    %202 = arith.divf %201, %200 : vector<32x256xf32>
    %cst_126 = arith.constant 1.06140542 : f32
    %203 = vector.broadcast %cst_126 : f32 to vector<32x256xf32>
    %204 = arith.mulf %203, %202 : vector<32x256xf32>
    %cst_127 = arith.constant 1.45315206 : f32
    %205 = vector.broadcast %cst_127 : f32 to vector<32x256xf32>
    %206 = arith.subf %204, %205 : vector<32x256xf32>
    %207 = arith.mulf %206, %202 : vector<32x256xf32>
    %cst_128 = arith.constant 1.42141378 : f32
    %208 = vector.broadcast %cst_128 : f32 to vector<32x256xf32>
    %209 = arith.addf %207, %208 : vector<32x256xf32>
    %210 = arith.mulf %209, %202 : vector<32x256xf32>
    %cst_129 = arith.constant 0.284496725 : f32
    %211 = vector.broadcast %cst_129 : f32 to vector<32x256xf32>
    %212 = arith.subf %210, %211 : vector<32x256xf32>
    %213 = arith.mulf %212, %202 : vector<32x256xf32>
    %cst_130 = arith.constant 0.254829586 : f32
    %214 = vector.broadcast %cst_130 : f32 to vector<32x256xf32>
    %215 = arith.addf %213, %214 : vector<32x256xf32>
    %216 = arith.mulf %215, %202 : vector<32x256xf32>
    %cst_131 = arith.constant 0.000000e+00 : f32
    %217 = vector.broadcast %cst_131 : f32 to vector<32x256xf32>
    %218 = arith.subf %217, %196 : vector<32x256xf32>
    %219 = arith.mulf %218, %196 : vector<32x256xf32>
    %220 = math.exp %219 : vector<32x256xf32>
    %221 = arith.mulf %216, %220 : vector<32x256xf32>
    %cst_132 = arith.constant 1.000000e+00 : f32
    %222 = vector.broadcast %cst_132 : f32 to vector<32x256xf32>
    %223 = arith.subf %222, %221 : vector<32x256xf32>
    %cst_133 = arith.constant 0.000000e+00 : f32
    %224 = vector.broadcast %cst_133 : f32 to vector<32x256xf32>
    %225 = arith.cmpf oge, %195, %224 : vector<32x256xf32>
    %cst_134 = arith.constant 0.000000e+00 : f32
    %226 = vector.broadcast %cst_134 : f32 to vector<32x256xf32>
    %227 = arith.subf %226, %223 : vector<32x256xf32>
    %228 = arith.select %225, %223, %227 : vector<32x256xi1>, vector<32x256xf32>
    %cst_135 = arith.constant 5.000000e-01 : f32
    %229 = vector.broadcast %cst_135 : f32 to vector<32x256xf32>
    %230 = arith.mulf %229, %193 : vector<32x256xf32>
    %cst_136 = arith.constant 1.000000e+00 : f32
    %231 = vector.broadcast %cst_136 : f32 to vector<32x256xf32>
    %232 = arith.addf %231, %228 : vector<32x256xf32>
    %233 = arith.mulf %230, %232 : vector<32x256xf32>
    %234 = arith.truncf %233 : vector<32x256xf32> to vector<32x256xbf16>
    %c0_137 = arith.constant 0 : index
    %c0_138 = arith.constant 0 : index
    %235 = vector.load %arg12[%c0_137, %c0_138] : memref<256x64xbf16, #tpu.memory_space<vmem>>, vector<256x64xbf16>
    %cst_139 = arith.constant dense<0.000000e+00> : vector<32x64xf32>
    %236 = tpu.matmul %234, %235, %cst_139 {dimension_numbers = #tpu.dot_dimension_numbers<[1], [0], [0], [1], [0, 0, 1, 1], [], []>} : vector<32x256xbf16>, vector<256x64xbf16>, vector<32x64xf32> -> vector<32x64xf32>
    %c0_140 = arith.constant 0 : index
    %c0_141 = arith.constant 0 : index
    %237 = vector.load %arg13[%c0_140, %c0_141] : memref<1x64xf32, #tpu.memory_space<vmem>>, vector<1x64xf32>
    %238 = vector.broadcast %237 : vector<1x64xf32> to vector<32x64xf32>
    %239 = arith.addf %236, %238 : vector<32x64xf32>
    %240 = arith.addf %165, %239 : vector<32x64xf32>
    %c0_142 = arith.constant 0 : index
    %c0_143 = arith.constant 0 : index
    %241 = vector.load %arg14[%c0_142, %c0_143] : memref<32x64xf32, #tpu.memory_space<vmem>>, vector<32x64xf32>
    tpu.vector_store %arg14[%c0_142, %c0_143], %240 {strides = array<i32>} : memref<32x64xf32, #tpu.memory_space<vmem>>, vector<32x64xf32>,
    return
  }
  func.func @transform_0(%arg0: i32) -> (i32, i32) {
    %c0_i32 = arith.constant 0 : i32
    %c0_i32_0 = arith.constant 0 : i32
    return %arg0, %c0_i32 : i32, i32
  }
  func.func @transform_1(%arg0: i32) -> (i32, i32) {
    %c0_i32 = arith.constant 0 : i32
    %c0_i32_0 = arith.constant 0 : i32
    %c0_i32_1 = arith.constant 0 : i32
    return %c0_i32, %c0_i32_0 : i32, i32
  }
  func.func @transform_2(%arg0: i32) -> (i32, i32) {
    %c0_i32 = arith.constant 0 : i32
    %c0_i32_0 = arith.constant 0 : i32
    %c0_i32_1 = arith.constant 0 : i32
    return %c0_i32, %c0_i32_0 : i32, i32
  }
  func.func @transform_3(%arg0: i32) -> (i32, i32) {
    %c0_i32 = arith.constant 0 : i32
    %c0_i32_0 = arith.constant 0 : i32
    %c0_i32_1 = arith.constant 0 : i32
    return %c0_i32, %c0_i32_0 : i32, i32
  }
  func.func @transform_4(%arg0: i32) -> (i32, i32) {
    %c0_i32 = arith.constant 0 : i32
    %c0_i32_0 = arith.constant 0 : i32
    %c0_i32_1 = arith.constant 0 : i32
    return %c0_i32, %c0_i32_0 : i32, i32
  }
  func.func @transform_5(%arg0: i32) -> (i32, i32) {
    %c0_i32 = arith.constant 0 : i32
    %c0_i32_0 = arith.constant 0 : i32
    %c0_i32_1 = arith.constant 0 : i32
    return %c0_i32, %c0_i32_0 : i32, i32
  }
  func.func @transform_6(%arg0: i32) -> (i32, i32) {
    %c0_i32 = arith.constant 0 : i32
    %c0_i32_0 = arith.constant 0 : i32
    %c0_i32_1 = arith.constant 0 : i32
    return %c0_i32, %c0_i32_0 : i32, i32
  }
  func.func @transform_7(%arg0: i32) -> (i32, i32) {
    %c0_i32 = arith.constant 0 : i32
    %c0_i32_0 = arith.constant 0 : i32
    %c0_i32_1 = arith.constant 0 : i32
    return %c0_i32, %c0_i32_0 : i32, i32
  }
  func.func @transform_8(%arg0: i32) -> (i32, i32) {
    %c0_i32 = arith.constant 0 : i32
    %c0_i32_0 = arith.constant 0 : i32
    %c0_i32_1 = arith.constant 0 : i32
    return %c0_i32, %c0_i32_0 : i32, i32
  }
  func.func @transform_9(%arg0: i32) -> (i32, i32) {
    %c0_i32 = arith.constant 0 : i32
    %c0_i32_0 = arith.constant 0 : i32
    %c0_i32_1 = arith.constant 0 : i32
    return %c0_i32, %c0_i32_0 : i32, i32
  }
  func.func @transform_10(%arg0: i32) -> (i32, i32) {
    %c0_i32 = arith.constant 0 : i32
    %c0_i32_0 = arith.constant 0 : i32
    %c0_i32_1 = arith.constant 0 : i32
    return %c0_i32, %c0_i32_0 : i32, i32
  }
  func.func @transform_11(%arg0: i32) -> (i32, i32) {
    %c0_i32 = arith.constant 0 : i32
    %c0_i32_0 = arith.constant 0 : i32
    %c0_i32_1 = arith.constant 0 : i32
    return %c0_i32, %c0_i32_0 : i32, i32
  }
  func.func @transform_12(%arg0: i32) -> (i32, i32) {
    %c0_i32 = arith.constant 0 : i32
    %c0_i32_0 = arith.constant 0 : i32
    %c0_i32_1 = arith.constant 0 : i32
    return %c0_i32, %c0_i32_0 : i32, i32
  }
  func.func @transform_13(%arg0: i32) -> (i32, i32) {
    %c0_i32 = arith.constant 0 : i32
    %c0_i32_0 = arith.constant 0 : i32
    return %arg0, %c0_i32 : i32, i32
  }
}

</mosaic_0001>

<llo_original>
// kernel: tpu_custom_call.1
$region0: #{tpu_custom_call.1}
  #allocation0 [shape = 'u32[]', space=smem, size = 0x4, offset = 0x4, fixed_abs, tag = 'smem constant byte address 0x4 - core index']
  #allocation1 [shape = 'u32[144,128]{1,0:T(1,128)}', space=vmem, size = 0x12000, scoped, tag = 'internal scratch']
  #allocation2 [shape = 'f32[32,192]{1,0:T(8,128)}', space=vmem, size = 0x8000, scoped, tag = 'scratch operand']
  #allocation3 [shape = 'f32[32,64]{1,0:T(8,128)}', space=vmem, size = 0x4000, scoped, tag = 'scratch operand']
  %s0 = inlined_call_operand.vmem [shape: f32[32,64], index: 0, kind: input, shape index: {}]
  %s1 = inlined_call_operand.vmem [shape: f32[1,64], index: 1, kind: input, shape index: {}]
  %s2 = inlined_call_operand.vmem [shape: f32[1,64], index: 2, kind: input, shape index: {}]
  %s3 = inlined_call_operand.vmem [shape: bf16[64,192], index: 3, kind: input, shape index: {}]
  %s4 = inlined_call_operand.vmem [shape: f32[1,192], index: 4, kind: input, shape index: {}]
  %s5 = inlined_call_operand.vmem [shape: bf16[64,64], index: 5, kind: input, shape index: {}]
  %s6 = inlined_call_operand.vmem [shape: f32[1,64], index: 6, kind: input, shape index: {}]
  %s7 = inlined_call_operand.vmem [shape: f32[1,64], index: 7, kind: input, shape index: {}]
  %s8 = inlined_call_operand.vmem [shape: f32[1,64], index: 8, kind: input, shape index: {}]
  %s9 = inlined_call_operand.vmem [shape: bf16[64,256], index: 9, kind: input, shape index: {}]
  %s10 = inlined_call_operand.vmem [shape: f32[1,256], index: 10, kind: input, shape index: {}]
  %s11 = inlined_call_operand.vmem [shape: bf16[256,64], index: 11, kind: input, shape index: {}]
  %s12 = inlined_call_operand.vmem [shape: f32[1,64], index: 12, kind: input, shape index: {}]
  %s13 = inlined_call_operand.hbm [shape: f32[32,64], index: 13, kind: output, shape index: {}]
  %s14 = sld [smem:[#allocation0]]
  $region62: #{tpu_custom_call.1} parent=0
    _
  %s16 = ssub.s32 1, %s14
  %s17 = scalar_select 0, %s16, %s14
  $region1: #{tpu_custom_call.1} parent=0
    #allocation4 [shape = 'u8[16384]{0}', space=vmem, size = 0x4000, scoped, tag = 'output window, operand 0, single buffered']
    #allocation5 [shape = 's32[1]{0}', space=sflag, size = 0x4, scoped, tag = 'scoped memory for tpu_custom_call.1']
    %18 = vsyncpa [#allocation5], 0
    // Predicated region
    $region2: #{tpu_custom_call.1} parent=1 // pred_check
      _
    $region3: #{tpu_custom_call.1} parent=1 // pred_check_branch
      %20 = sbr.rel (0) target = $region5
    $region4: #{tpu_custom_call.1} parent=1 // pred_region
      _
    $region5: #{tpu_custom_call.1} parent=1 // pred_fallthru
      _
    // Predicated region
    $region6: #{tpu_custom_call.1} parent=1 // pred_check
      _
    $region7: #{tpu_custom_call.1} parent=1 // pred_check_branch
      %22 = sbr.rel (0) target = $region9
    $region8: #{tpu_custom_call.1} parent=1 // pred_region
      _
    $region9: #{tpu_custom_call.1} parent=1 // pred_fallthru
      _
    // Predicated region
    $region10: #{tpu_custom_call.1} parent=1 // pred_check
      _
    $region11: #{tpu_custom_call.1} parent=1 // pred_check_branch
      %24 = sbr.rel (0) target = $region13
    $region12: #{tpu_custom_call.1} parent=1 // pred_region
      _
    $region13: #{tpu_custom_call.1} parent=1 // pred_fallthru
      _
    // Predicated region
    $region14: #{tpu_custom_call.1} parent=1 // pred_check
      _
    $region15: #{tpu_custom_call.1} parent=1 // pred_check_branch
      %26 = sbr.rel (0) target = $region17
    $region16: #{tpu_custom_call.1} parent=1 // pred_region
      _
    $region17: #{tpu_custom_call.1} parent=1 // pred_fallthru
      _
    // Predicated region
    $region18: #{tpu_custom_call.1} parent=1 // pred_check
      _
    $region19: #{tpu_custom_call.1} parent=1 // pred_check_branch
      %28 = sbr.rel (0) target = $region21
    $region20: #{tpu_custom_call.1} parent=1 // pred_region
      _
    $region21: #{tpu_custom_call.1} parent=1 // pred_fallthru
      _
    // Predicated region
    $region22: #{tpu_custom_call.1} parent=1 // pred_check
      _
    $region23: #{tpu_custom_call.1} parent=1 // pred_check_branch
      %30 = sbr.rel (0) target = $region25
    $region24: #{tpu_custom_call.1} parent=1 // pred_region
      _
    $region25: #{tpu_custom_call.1} parent=1 // pred_fallthru
      _
    // Predicated region
    $region26: #{tpu_custom_call.1} parent=1 // pred_check
      _
    $region27: #{tpu_custom_call.1} parent=1 // pred_check_branch
      %32 = sbr.rel (0) target = $region29
    $region28: #{tpu_custom_call.1} parent=1 // pred_region
      _
    $region29: #{tpu_custom_call.1} parent=1 // pred_fallthru
      _
    // Predicated region
    $region30: #{tpu_custom_call.1} parent=1 // pred_check
      _
    $region31: #{tpu_custom_call.1} parent=1 // pred_check_branch
      %34 = sbr.rel (0) target = $region33
    $region32: #{tpu_custom_call.1} parent=1 // pred_region
      _
    $region33: #{tpu_custom_call.1} parent=1 // pred_fallthru
      _
    // Predicated region
    $region34: #{tpu_custom_call.1} parent=1 // pred_check
      _
    $region35: #{tpu_custom_call.1} parent=1 // pred_check_branch
      %36 = sbr.rel (0) target = $region37
    $region36: #{tpu_custom_call.1} parent=1 // pred_region
      _
    $region37: #{tpu_custom_call.1} parent=1 // pred_fallthru
      _
    // Predicated region
    $region38: #{tpu_custom_call.1} parent=1 // pred_check
      _
    $region39: #{tpu_custom_call.1} parent=1 // pred_check_branch
      %38 = sbr.rel (0) target = $region41
    $region40: #{tpu_custom_call.1} parent=1 // pred_region
      _
    $region41: #{tpu_custom_call.1} parent=1 // pred_fallthru
      _
    // Predicated region
    $region42: #{tpu_custom_call.1} parent=1 // pred_check
      _
    $region43: #{tpu_custom_call.1} parent=1 // pred_check_branch
      %40 = sbr.rel (0) target = $region45
    $region44: #{tpu_custom_call.1} parent=1 // pred_region
      _
    $region45: #{tpu_custom_call.1} parent=1 // pred_fallthru
      _
    // Predicated region
    $region46: #{tpu_custom_call.1} parent=1 // pred_check
      _
    $region47: #{tpu_custom_call.1} parent=1 // pred_check_branch
      %42 = sbr.rel (0) target = $region49
    $region48: #{tpu_custom_call.1} parent=1 // pred_region
      _
    $region49: #{tpu_custom_call.1} parent=1 // pred_fallthru
      _
    // Predicated region
    $region50: #{tpu_custom_call.1} parent=1 // pred_check
      _
    $region51: #{tpu_custom_call.1} parent=1 // pred_check_branch
      %44 = sbr.rel (0) target = $region53
    $region52: #{tpu_custom_call.1} parent=1 // pred_region
      _
    $region53: #{tpu_custom_call.1} parent=1 // pred_fallthru
      _
    %v46 = vld [vmem:[%s0] sm:$0xff]
    %v47 = vld [vmem:[%s0 + $0x8] sm:$0xff]
    %v48 = vld [vmem:[%s0 + $0x10] sm:$0xff]
    %v49 = vld [vmem:[%s0 + $0x18] sm:$0xff]
    %v50 = vld [vmem:[%s1] sm:$0x1]
    %v51 = vld [vmem:[%s2] sm:$0x1]
    %vm52 = vcmask 523264
    %v53 = vsel %vm52, %v46, 0.0
    %54 = vadd.xlane.f32.xlu0 %v53
    %v55 = vpop.xlane.xlu0 %54
    %v56 = vsel %vm52, %v47, 0.0
    %57 = vadd.xlane.f32.xlu0 %v56
    %v58 = vpop.xlane.xlu0 %57
    %v59 = vsel %vm52, %v48, 0.0
    %60 = vadd.xlane.f32.xlu0 %v59
    %v61 = vpop.xlane.xlu0 %60
    %v62 = vsel %vm52, %v49, 0.0
    %63 = vadd.xlane.f32.xlu0 %v62
    %v64 = vpop.xlane.xlu0 %63
    %v65 = vrcp.pop 64.0
    %v66 = vmul.f32 %v55, %v65
    %v67 = vmul.f32 %v58, %v65
    %v68 = vmul.f32 %v61, %v65
    %v69 = vmul.f32 %v64, %v65
    %v70 = vsub.f32 %v46, %v66
    %v71 = vsub.f32 %v47, %v67
    %v72 = vsub.f32 %v48, %v68
    %v73 = vsub.f32 %v49, %v69
    %v74 = vmul.f32 %v70, %v70
    %v75 = vmul.f32 %v71, %v71
    %v76 = vmul.f32 %v72, %v72
    %v77 = vmul.f32 %v73, %v73
    %v78 = vsel %vm52, %v74, 0.0
    %79 = vadd.xlane.f32.xlu0 %v78
    %v80 = vpop.xlane.xlu0 %79
    %v81 = vsel %vm52, %v75, 0.0
    %82 = vadd.xlane.f32.xlu0 %v81
    %v83 = vpop.xlane.xlu0 %82
    %v84 = vsel %vm52, %v76, 0.0
    %85 = vadd.xlane.f32.xlu0 %v84
    %v86 = vpop.xlane.xlu0 %85
    %v87 = vsel %vm52, %v77, 0.0
    %88 = vadd.xlane.f32.xlu0 %v87
    %v89 = vpop.xlane.xlu0 %88
    %v90 = vmul.f32 %v80, %v65
    %v91 = vmul.f32 %v83, %v65
    %v92 = vmul.f32 %v86, %v65
    %v93 = vmul.f32 %v89, %v65
    %v94 = vadd.f32 %v90, 1e-05
    %v95 = vadd.f32 %v91, 1e-05
    %v96 = vadd.f32 %v92, 1e-05
    %v97 = vadd.f32 %v93, 1e-05
    %v98 = vrsqrt.pop %v94
    %v99 = vrsqrt.pop %v95
    %v100 = vrsqrt.pop %v96
    %v101 = vrsqrt.pop %v97
    %v102 = vmul.f32 %v70, %v98
    %v103 = vmul.f32 %v71, %v99
    %v104 = vmul.f32 %v72, %v100
    %v105 = vmul.f32 %v73, %v101
    %v107 = vlaneseq
    %v108 = vshrl.u32 %v107, 7
    %v109 = vsub.s32 0, %v108
    %v110 = vrot.slane %v50, %v109
    %v112 = vmul.f32 %v102, %v110
    %v113 = vmul.f32 %v103, %v110
    %v114 = vmul.f32 %v104, %v110
    %v115 = vmul.f32 %v105, %v110
    %v117 = vlaneseq
    %v118 = vshrl.u32 %v117, 7
    %v119 = vsub.s32 0, %v118
    %v120 = vrot.slane %v51, %v119
    %v122 = vadd.f32 %v112, %v120
    %v123 = vadd.f32 %v113, %v120
    %v124 = vadd.f32 %v114, %v120
    %v125 = vadd.f32 %v115, %v120
    %v126 = vpack.c.bf16 %v123, %v122
    %v127 = vpack.c.bf16 %v125, %v124
    %v128 = vld [vmem:[%s3] sm:$0xff]
    %v129 = vld [vmem:[%s3 + $0x8] sm:$0xff]
    %v130 = vld [vmem:[%s3 + $0x10] sm:$0xff]
    %v131 = vld [vmem:[%s3 + $0x18] sm:$0xff]
    %v132 = vld [vmem:[%s3 + $0x20] sm:$0xff]
    %v133 = vld [vmem:[%s3 + $0x28] sm:$0xff]
    %v134 = vld [vmem:[%s3 + $0x30] sm:$0xff]
    %v135 = vld [vmem:[%s3 + $0x38] sm:$0xff]
    %v136 = vld [vmem:[%s4] sm:$0x3]
    %v138 = vlaneseq
    %v139 = vshrl.u32 %v138, 7
    %v140 = vsub.s32 0, %v139
    %v141 = vrot.slane %v136, %v140
    %v142 = vlaneseq
    %v143 = vshrl.u32 %v142, 7
    %v144 = vsub.s32 1, %v143
    %v145 = vrot.slane %v136, %v144
    %v156 = vunpack.c.l.b16 %v128
    %v157 = vunpack.c.h.b16 %v128
    %v158 = vunpack.c.l.b16 %v129
    %v159 = vunpack.c.h.b16 %v129
    %v160 = vunpack.c.l.b16 %v130
    %v161 = vunpack.c.h.b16 %v130
    %v162 = vunpack.c.l.b16 %v131
    %v163 = vunpack.c.h.b16 %v131
    %v164 = vunpack.c.l.b16 %v132
    %v165 = vunpack.c.h.b16 %v132
    %v166 = vunpack.c.l.b16 %v133
    %v167 = vunpack.c.h.b16 %v133
    %v168 = vunpack.c.l.b16 %v134
    %v169 = vunpack.c.h.b16 %v134
    %v170 = vunpack.c.l.b16 %v135
    %v171 = vunpack.c.h.b16 %v135
    %v172 = vpack.c.b16 %v158, %v156
    %v173 = vpack.c.b16 %v159, %v157
    %v174 = vpack.c.b16 %v162, %v160
    %v175 = vpack.c.b16 %v163, %v161
    %v176 = vpack.c.b16 %v166, %v164
    %v177 = vpack.c.b16 %v167, %v165
    %v178 = vpack.c.b16 %v170, %v168
    %v179 = vpack.c.b16 %v171, %v169
    %v189 = vsel %vm52, %v126, 0
    %v192 = vsel %vm52, %v127, 0
    %194 = vmatprep.subr.bf16.mxu0 %v173
    %195 = vmatpush1.bf16.msra.mxu0 %v172
    %196 = vmatprep.subr.bf16.mxu0 %v175
    %197 = vmatpush1.bf16.msra.mxu0 %v174
    %198 = vmatprep.subr.bf16.mxu0 %v177
    %199 = vmatpush1.bf16.msra.mxu0 %v176
    %200 = vmatprep.subr.bf16.mxu0 %v179
    %201 = vmatpush1.bf16.msra.mxu0 %v178
    %202 = vmatprep.subr.bf16.mxu0 0
    %203 = vmatpush1.bf16.msra.mxu0 0
    %204 = vmatprep.subr.bf16.mxu0 0
    %205 = vmatpush1.bf16.msra.mxu0 0
    %206 = vmatprep.subr.bf16.mxu0 0
    %207 = vmatpush1.bf16.msra.mxu0 0
    %208 = vmatprep.subr.bf16.mxu0 0
    %209 = vmatpush1.bf16.msra.mxu0 0
    %210 = vmatprep.subr.bf16.mxu0 0
    %211 = vmatpush1.bf16.msra.mxu0 0
    %212 = vmatprep.subr.bf16.mxu0 0
    %213 = vmatpush1.bf16.msra.mxu0 0
    %214 = vmatprep.subr.bf16.mxu0 0
    %215 = vmatpush1.bf16.msra.mxu0 0
    %216 = vmatprep.subr.bf16.mxu0 0
    %217 = vmatpush1.bf16.msra.mxu0 0
    %218 = vmatprep.subr.bf16.mxu0 0
    %219 = vmatpush1.bf16.msra.mxu0 0
    %220 = vmatprep.subr.bf16.mxu0 0
    %221 = vmatpush1.bf16.msra.mxu0 0
    %222 = vmatprep.subr.bf16.mxu0 0
    %223 = vmatpush1.bf16.msra.mxu0 0
    %224 = vmatprep.subr.bf16.mxu0 0
    %225 = vmatpush1.bf16.msra.mxu0 0
    %226 = vmatprep.mubr.bf16.mxu0 0
    %227 = vmatmul.mubr.bf16.gmra.mrb[0].mxu0 %v189
    %v228 = vpop.f32.mrb[0].mxu0
    %v229 = vadd.f32 %v141, %v228
    %v230 = vpop.f32.mrb[0].mxu0
    %v231 = vadd.f32 %v145, %v230
    %v232 = vpop.f32.mrb[0].mxu0
    %v233 = vadd.f32 %v141, %v232
    %v234 = vpop.f32.mrb[0].mxu0
    %v235 = vadd.f32 %v145, %v234
    %236 = vmatprep.mubr.bf16.mxu0 0
    %237 = vmatmul.mubr.bf16.gmra.mrb[0].mxu0 %v192
    %v238 = vpop.f32.mrb[0].mxu0
    %v239 = vadd.f32 %v141, %v238
    %v240 = vpop.f32.mrb[0].mxu0
    %v241 = vadd.f32 %v145, %v240
    %v242 = vpop.f32.mrb[0].mxu0
    %v243 = vadd.f32 %v141, %v242
    %v244 = vpop.f32.mrb[0].mxu0
    %v245 = vadd.f32 %v145, %v244
    %246 = vdwg.mxu0
    %247 = vst [vmem:[#allocation2] sm:$0xff] %v229
    %248 = vst.msk [vmem:[#allocation2 + $0x8] sm:$0xff] %vm52, %v231
    %249 = vst [vmem:[#allocation2 + $0x10] sm:$0xff] %v233
    %250 = vst.msk [vmem:[#allocation2 + $0x18] sm:$0xff] %vm52, %v235
    %251 = vst [vmem:[#allocation2 + $0x20] sm:$0xff] %v239
    %252 = vst.msk [vmem:[#allocation2 + $0x28] sm:$0xff] %vm52, %v241
    %253 = vst [vmem:[#allocation2 + $0x30] sm:$0xff] %v243
    %254 = vst.msk [vmem:[#allocation2 + $0x38] sm:$0xff] %vm52, %v245
    %v255 = vld [vmem:[#allocation2] sm:$0xff]
    %v256 = vld [vmem:[#allocation2 + $0x10] sm:$0xff]
    %v257 = vld [vmem:[#allocation2 + $0x8] sm:$0xff]
    %v258 = vld [vmem:[#allocation2 + $0x18] sm:$0xff]
    %261 = vrot.lane.b32.xlu0 %v255, 64
    %v262 = vpop.permute.xlu0 %261
    %263 = vrot.lane.b32.xlu0 %v256, 64
    %v264 = vpop.permute.xlu0 %263
    %vm265 = vcmask 130048
    %v266 = vsel %vm265, %v255, 0
    %v268 = vsel %vm265, %v256, 0
    %v270 = vsel %vm265, %v262, 0
    %v272 = vsel %vm265, %v264, 0
    %274 = vmatprep.subr.mxu0 0.0
    %275 = vmatpush1.xpose.msra.mxu0 %v270
    %276 = vmatprep.subr.mxu0 0.0
    %277 = vmatpush1.xpose.msra.mxu0 %v272
    %278 = vmatprep.subr.mxu0 0.0
    %279 = vmatpush1.xpose.msra.mxu0 0.0
    %280 = vmatprep.subr.mxu0 0.0
    %281 = vmatpush1.xpose.msra.mxu0 0.0
    %282 = vmatprep.subr.mxu0 0.0
    %283 = vmatpush1.xpose.msra.mxu0 0.0
    %284 = vmatprep.subr.mxu0 0.0
    %285 = vmatpush1.xpose.msra.mxu0 0.0
    %286 = vmatprep.subr.mxu0 0.0
    %287 = vmatpush1.xpose.msra.mxu0 0.0
    %288 = vmatprep.subr.mxu0 0.0
    %289 = vmatpush1.xpose.msra.mxu0 0.0
    %290 = vmatprep.subr.mxu0 0.0
    %291 = vmatpush1.xpose.msra.mxu0 0.0
    %292 = vmatprep.subr.mxu0 0.0
    %293 = vmatpush1.xpose.msra.mxu0 0.0
    %294 = vmatprep.subr.mxu0 0.0
    %295 = vmatpush1.xpose.msra.mxu0 0.0
    %296 = vmatprep.subr.mxu0 0.0
    %297 = vmatpush1.xpose.msra.mxu0 0.0
    %298 = vmatprep.subr.mxu0 0.0
    %299 = vmatpush1.xpose.msra.mxu0 0.0
    %300 = vmatprep.subr.mxu0 0.0
    %301 = vmatpush1.xpose.msra.mxu0 0.0
    %302 = vmatprep.subr.mxu0 0.0
    %303 = vmatpush1.xpose.msra.mxu0 0.0
    %304 = vmatprep.subr.mxu0 0.0
    %305 = vmatpush1.xpose.msra.mxu0 0.0
    %306 = vmatprep.subr.mxu0 0.0
    %307 = vmatpush1.xpose.msra.mxu0 0.0
    %308 = vmatprep.subr.mxu0 0.0
    %309 = vmatpush1.xpose.msra.mxu0 0.0
    %310 = vmatprep.subr.mxu0 0.0
    %311 = vmatpush1.xpose.msra.mxu0 0.0
    %312 = vmatprep.subr.mxu0 0.0
    %313 = vmatpush1.xpose.msra.mxu0 0.0
    %314 = vmatprep.subr.mxu0 0.0
    %315 = vmatpush1.xpose.msra.mxu0 0.0
    %316 = vmatprep.subr.mxu0 0.0
    %317 = vmatpush1.xpose.msra.mxu0 0.0
    %318 = vmatprep.subr.mxu0 0.0
    %319 = vmatpush1.xpose.msra.mxu0 0.0
    %320 = vmatprep.subr.mxu0 0.0
    %321 = vmatpush1.xpose.msra.mxu0 0.0
    %322 = vmatprep.subr.mxu0 0.0
    %323 = vmatpush1.xpose.msra.mxu0 0.0
    %324 = vmatprep.subr.mxu0 0.0
    %325 = vmatpush1.xpose.msra.mxu0 0.0
    %326 = vmatprep.subr.mxu0 0.0
    %327 = vmatpush1.xpose.msra.mxu0 0.0
    %328 = vmatprep.subr.mxu0 0.0
    %329 = vmatpush1.xpose.msra.mxu0 0.0
    %330 = vmatprep.subr.mxu0 0.0
    %331 = vmatpush1.xpose.msra.mxu0 0.0
    %332 = vmatprep.subr.mxu0 0.0
    %333 = vmatpush1.xpose.msra.mxu0 0.0
    %334 = vmatprep.subr.mxu0 0.0
    %335 = vmatpush1.xpose.msra.mxu0 0.0
    %336 = vmatprep.subr.mxu0 0.0
    %337 = vmatpush1.xpose.msra.mxu0 0.0
    %338 = vmatprep.mubr.f32.mxu0 0.0
    %339 = vmatmul.mubr.f32.gmra.mrb[0].mxu0 %v266
    %v340 = vpop.f32.mrb[0].mxu0
    %v341 = vadd.f32 0.0, %v340
    %v342 = vpop.f32.mrb[0].mxu0
    %343 = vmatprep.mubr.f32.mxu0 0.0
    %344 = vmatmul.mubr.f32.gmra.mrb[0].mxu0 %v268
    %v345 = vpop.f32.mrb[0].mxu0
    %v346 = vadd.f32 0.0, %v345
    %v347 = vpop.f32.mrb[0].mxu0
    %348 = vdwg.mxu0
    %v349 = vsel %vm265, %v341, -inf
    %350 = vmax.xlane.f32.xlu0 %v349
    %v351 = vpop.xlane.xlu0 %350
    %v352 = vsel %vm265, %v346, -inf
    %353 = vmax.xlane.f32.xlu0 %v352
    %v354 = vpop.xlane.xlu0 %353
    %v355 = vsub.f32 %v341, %v351
    %v356 = vsub.f32 %v346, %v354
    %v357 = vmul.f32 %v355, 1.442695
    %v358 = vpow.pop %v357
    %v359 = vmul.f32 %v356, 1.442695
    %v360 = vpow.pop %v359
    %v361 = vsel %vm265, %v358, 0.0
    %362 = vadd.xlane.f32.xlu0 %v361
    %v363 = vpop.xlane.xlu0 %362
    %v364 = vsel %vm265, %v360, 0.0
    %365 = vadd.xlane.f32.xlu0 %v364
    %v366 = vpop.xlane.xlu0 %365
    %v367 = vrcp.pop %v363
    %v368 = vrcp.pop %v366
    %v369 = vmul.f32 %v358, %v367
    %v370 = vmul.f32 %v360, %v368
    %v372 = vsel %vm265, %v369, 0
    %v375 = vsel %vm265, %v370, 0
    %377 = vmatprep.subr.mxu0 0.0
    %378 = vmatpush1.msra.mxu0 %v257
    %379 = vmatprep.subr.mxu0 0.0
    %380 = vmatpush1.msra.mxu0 %v258
    %381 = vmatprep.subr.mxu0 0.0
    %382 = vmatpush1.msra.mxu0 0.0
    %383 = vmatprep.subr.mxu0 0.0
    %384 = vmatpush1.msra.mxu0 0.0
    %385 = vmatprep.subr.mxu0 0.0
    %386 = vmatpush1.msra.mxu0 0.0
    %387 = vmatprep.subr.mxu0 0.0
    %388 = vmatpush1.msra.mxu0 0.0
    %389 = vmatprep.subr.mxu0 0.0
    %390 = vmatpush1.msra.mxu0 0.0
    %391 = vmatprep.subr.mxu0 0.0
    %392 = vmatpush1.msra.mxu0 0.0
    %393 = vmatprep.subr.mxu0 0.0
    %394 = vmatpush1.msra.mxu0 0.0
    %395 = vmatprep.subr.mxu0 0.0
    %396 = vmatpush1.msra.mxu0 0.0
    %397 = vmatprep.subr.mxu0 0.0
    %398 = vmatpush1.msra.mxu0 0.0
    %399 = vmatprep.subr.mxu0 0.0
    %400 = vmatpush1.msra.mxu0 0.0
    %401 = vmatprep.subr.mxu0 0.0
    %402 = vmatpush1.msra.mxu0 0.0
    %403 = vmatprep.subr.mxu0 0.0
    %404 = vmatpush1.msra.mxu0 0.0
    %405 = vmatprep.subr.mxu0 0.0
    %406 = vmatpush1.msra.mxu0 0.0
    %407 = vmatprep.subr.mxu0 0.0
    %408 = vmatpush1.msra.mxu0 0.0
    %409 = vmatprep.subr.mxu0 0.0
    %410 = vmatpush1.msra.mxu0 0.0
    %411 = vmatprep.subr.mxu0 0.0
    %412 = vmatpush1.msra.mxu0 0.0
    %413 = vmatprep.subr.mxu0 0.0
    %414 = vmatpush1.msra.mxu0 0.0
    %415 = vmatprep.subr.mxu0 0.0
    %416 = vmatpush1.msra.mxu0 0.0
    %417 = vmatprep.subr.mxu0 0.0
    %418 = vmatpush1.msra.mxu0 0.0
    %419 = vmatprep.subr.mxu0 0.0
    %420 = vmatpush1.msra.mxu0 0.0
    %421 = vmatprep.subr.mxu0 0.0
    %422 = vmatpush1.msra.mxu0 0.0
    %423 = vmatprep.subr.mxu0 0.0
    %424 = vmatpush1.msra.mxu0 0.0
    %425 = vmatprep.subr.mxu0 0.0
    %426 = vmatpush1.msra.mxu0 0.0
    %427 = vmatprep.subr.mxu0 0.0
    %428 = vmatpush1.msra.mxu0 0.0
    %429 = vmatprep.subr.mxu0 0.0
    %430 = vmatpush1.msra.mxu0 0.0
    %431 = vmatprep.subr.mxu0 0.0
    %432 = vmatpush1.msra.mxu0 0.0
    %433 = vmatprep.subr.mxu0 0.0
    %434 = vmatpush1.msra.mxu0 0.0
    %435 = vmatprep.subr.mxu0 0.0
    %436 = vmatpush1.msra.mxu0 0.0
    %437 = vmatprep.subr.mxu0 0.0
    %438 = vmatpush1.msra.mxu0 0.0
    %439 = vmatprep.subr.mxu0 0.0
    %440 = vmatpush1.msra.mxu0 0.0
    %441 = vmatprep.mubr.f32.mxu0 0.0
    %442 = vmatmul.mubr.f32.gmra.mrb[0].mxu0 %v372
    %v443 = vpop.f32.mrb[0].mxu0
    %v444 = vadd.f32 0.0, %v443
    %v445 = vpop.f32.mrb[0].mxu0
    %446 = vmatprep.mubr.f32.mxu0 0.0
    %447 = vmatmul.mubr.f32.gmra.mrb[0].mxu0 %v375
    %v448 = vpop.f32.mrb[0].mxu0
    %v449 = vadd.f32 0.0, %v448
    %v450 = vpop.f32.mrb[0].mxu0
    %451 = vdwg.mxu0
    %452 = vst.msk [vmem:[#allocation3] sm:$0xff] %vm265, %v444
    %453 = vst.msk [vmem:[#allocation3 + $0x8] sm:$0xff] %vm265, %v449
    %v454 = vld [vmem:[#allocation2] sm:$0xff]
    %v455 = vld [vmem:[#allocation2 + $0x10] sm:$0xff]
    %v456 = vld [vmem:[#allocation2 + $0x8] sm:$0xff]
    %v457 = vld [vmem:[#allocation2 + $0x18] sm:$0xff]
    %460 = vrot.lane.b32.xlu0 %v454, 112
    %v461 = vpop.permute.xlu0 %460
    %462 = vrot.lane.b32.xlu0 %v455, 112
    %v463 = vpop.permute.xlu0 %462
    %464 = vrot.lane.b32.xlu0 %v454, 48
    %v465 = vpop.permute.xlu0 %464
    %466 = vrot.lane.b32.xlu0 %v455, 48
    %v467 = vpop.permute.xlu0 %466
    %v468 = vsel %vm265, %v461, 0
    %v470 = vsel %vm265, %v463, 0
    %v472 = vsel %vm265, %v465, 0
    %v474 = vsel %vm265, %v467, 0
    %476 = vmatprep.subr.mxu0 0.0
    %477 = vmatpush1.xpose.msra.mxu0 %v472
    %478 = vmatprep.subr.mxu0 0.0
    %479 = vmatpush1.xpose.msra.mxu0 %v474
    %480 = vmatprep.subr.mxu0 0.0
    %481 = vmatpush1.xpose.msra.mxu0 0.0
    %482 = vmatprep.subr.mxu0 0.0
    %483 = vmatpush1.xpose.msra.mxu0 0.0
    %484 = vmatprep.subr.mxu0 0.0
    %485 = vmatpush1.xpose.msra.mxu0 0.0
    %486 = vmatprep.subr.mxu0 0.0
    %487 = vmatpush1.xpose.msra.mxu0 0.0
    %488 = vmatprep.subr.mxu0 0.0
    %489 = vmatpush1.xpose.msra.mxu0 0.0
    %490 = vmatprep.subr.mxu0 0.0
    %491 = vmatpush1.xpose.msra.mxu0 0.0
    %492 = vmatprep.subr.mxu0 0.0
    %493 = vmatpush1.xpose.msra.mxu0 0.0
    %494 = vmatprep.subr.mxu0 0.0
    %495 = vmatpush1.xpose.msra.mxu0 0.0
    %496 = vmatprep.subr.mxu0 0.0
    %497 = vmatpush1.xpose.msra.mxu0 0.0
    %498 = vmatprep.subr.mxu0 0.0
    %499 = vmatpush1.xpose.msra.mxu0 0.0
    %500 = vmatprep.subr.mxu0 0.0
    %501 = vmatpush1.xpose.msra.mxu0 0.0
    %502 = vmatprep.subr.mxu0 0.0
    %503 = vmatpush1.xpose.msra.mxu0 0.0
    %504 = vmatprep.subr.mxu0 0.0
    %505 = vmatpush1.xpose.msra.mxu0 0.0
    %506 = vmatprep.subr.mxu0 0.0
    %507 = vmatpush1.xpose.msra.mxu0 0.0
    %508 = vmatprep.subr.mxu0 0.0
    %509 = vmatpush1.xpose.msra.mxu0 0.0
    %510 = vmatprep.subr.mxu0 0.0
    %511 = vmatpush1.xpose.msra.mxu0 0.0
    %512 = vmatprep.subr.mxu0 0.0
    %513 = vmatpush1.xpose.msra.mxu0 0.0
    %514 = vmatprep.subr.mxu0 0.0
    %515 = vmatpush1.xpose.msra.mxu0 0.0
    %516 = vmatprep.subr.mxu0 0.0
    %517 = vmatpush1.xpose.msra.mxu0 0.0
    %518 = vmatprep.subr.mxu0 0.0
    %519 = vmatpush1.xpose.msra.mxu0 0.0
    %520 = vmatprep.subr.mxu0 0.0
    %521 = vmatpush1.xpose.msra.mxu0 0.0
    %522 = vmatprep.subr.mxu0 0.0
    %523 = vmatpush1.xpose.msra.mxu0 0.0
    %524 = vmatprep.subr.mxu0 0.0
    %525 = vmatpush1.xpose.msra.mxu0 0.0
    %526 = vmatprep.subr.mxu0 0.0
    %527 = vmatpush1.xpose.msra.mxu0 0.0
    %528 = vmatprep.subr.mxu0 0.0
    %529 = vmatpush1.xpose.msra.mxu0 0.0
    %530 = vmatprep.subr.mxu0 0.0
    %531 = vmatpush1.xpose.msra.mxu0 0.0
    %532 = vmatprep.subr.mxu0 0.0
    %533 = vmatpush1.xpose.msra.mxu0 0.0
    %534 = vmatprep.subr.mxu0 0.0
    %535 = vmatpush1.xpose.msra.mxu0 0.0
    %536 = vmatprep.subr.mxu0 0.0
    %537 = vmatpush1.xpose.msra.mxu0 0.0
    %538 = vmatprep.subr.mxu0 0.0
    %539 = vmatpush1.xpose.msra.mxu0 0.0
    %540 = vmatprep.mubr.f32.mxu0 0.0
    %541 = vmatmul.mubr.f32.gmra.mrb[0].mxu0 %v468
    %v542 = vpop.f32.mrb[0].mxu0
    %v543 = vadd.f32 0.0, %v542
    %v544 = vpop.f32.mrb[0].mxu0
    %545 = vmatprep.mubr.f32.mxu0 0.0
    %546 = vmatmul.mubr.f32.gmra.mrb[0].mxu0 %v470
    %v547 = vpop.f32.mrb[0].mxu0
    %v548 = vadd.f32 0.0, %v547
    %v549 = vpop.f32.mrb[0].mxu0
    %550 = vdwg.mxu0
    %v551 = vsel %vm265, %v543, -inf
    %552 = vmax.xlane.f32.xlu0 %v551
    %v553 = vpop.xlane.xlu0 %552
    %v554 = vsel %vm265, %v548, -inf
    %555 = vmax.xlane.f32.xlu0 %v554
    %v556 = vpop.xlane.xlu0 %555
    %v557 = vsub.f32 %v543, %v553
    %v558 = vsub.f32 %v548, %v556
    %v559 = vmul.f32 %v557, 1.442695
    %v560 = vpow.pop %v559
    %v561 = vmul.f32 %v558, 1.442695
    %v562 = vpow.pop %v561
    %v563 = vsel %vm265, %v560, 0.0
    %564 = vadd.xlane.f32.xlu0 %v563
    %v565 = vpop.xlane.xlu0 %564
    %v566 = vsel %vm265, %v562, 0.0
    %567 = vadd.xlane.f32.xlu0 %v566
    %v568 = vpop.xlane.xlu0 %567
    %v569 = vrcp.pop %v565
    %v570 = vrcp.pop %v568
    %v571 = vmul.f32 %v560, %v569
    %v572 = vmul.f32 %v562, %v570
    %575 = vrot.lane.b32.xlu0 %v456, 112
    %v576 = vpop.permute.xlu0 %575
    %577 = vrot.lane.b32.xlu0 %v457, 112
    %v578 = vpop.permute.xlu0 %577
    %v582 = vsel %vm265, %v571, 0
    %v585 = vsel %vm265, %v572, 0
    %587 = vmatprep.subr.mxu0 0.0
    %588 = vmatpush1.msra.mxu0 %v576
    %589 = vmatprep.subr.mxu0 0.0
    %590 = vmatpush1.msra.mxu0 %v578
    %591 = vmatprep.subr.mxu0 0.0
    %592 = vmatpush1.msra.mxu0 0.0
    %593 = vmatprep.subr.mxu0 0.0
    %594 = vmatpush1.msra.mxu0 0.0
    %595 = vmatprep.subr.mxu0 0.0
    %596 = vmatpush1.msra.mxu0 0.0
    %597 = vmatprep.subr.mxu0 0.0
    %598 = vmatpush1.msra.mxu0 0.0
    %599 = vmatprep.subr.mxu0 0.0
    %600 = vmatpush1.msra.mxu0 0.0
    %601 = vmatprep.subr.mxu0 0.0
    %602 = vmatpush1.msra.mxu0 0.0
    %603 = vmatprep.subr.mxu0 0.0
    %604 = vmatpush1.msra.mxu0 0.0
    %605 = vmatprep.subr.mxu0 0.0
    %606 = vmatpush1.msra.mxu0 0.0
    %607 = vmatprep.subr.mxu0 0.0
    %608 = vmatpush1.msra.mxu0 0.0
    %609 = vmatprep.subr.mxu0 0.0
    %610 = vmatpush1.msra.mxu0 0.0
    %611 = vmatprep.subr.mxu0 0.0
    %612 = vmatpush1.msra.mxu0 0.0
    %613 = vmatprep.subr.mxu0 0.0
    %614 = vmatpush1.msra.mxu0 0.0
    %615 = vmatprep.subr.mxu0 0.0
    %616 = vmatpush1.msra.mxu0 0.0
    %617 = vmatprep.subr.mxu0 0.0
    %618 = vmatpush1.msra.mxu0 0.0
    %619 = vmatprep.subr.mxu0 0.0
    %620 = vmatpush1.msra.mxu0 0.0
    %621 = vmatprep.subr.mxu0 0.0
    %622 = vmatpush1.msra.mxu0 0.0
    %623 = vmatprep.subr.mxu0 0.0
    %624 = vmatpush1.msra.mxu0 0.0
    %625 = vmatprep.subr.mxu0 0.0
    %626 = vmatpush1.msra.mxu0 0.0
    %627 = vmatprep.subr.mxu0 0.0
    %628 = vmatpush1.msra.mxu0 0.0
    %629 = vmatprep.subr.mxu0 0.0
    %630 = vmatpush1.msra.mxu0 0.0
    %631 = vmatprep.subr.mxu0 0.0
    %632 = vmatpush1.msra.mxu0 0.0
    %633 = vmatprep.subr.mxu0 0.0
    %634 = vmatpush1.msra.mxu0 0.0
    %635 = vmatprep.subr.mxu0 0.0
    %636 = vmatpush1.msra.mxu0 0.0
    %637 = vmatprep.subr.mxu0 0.0
    %638 = vmatpush1.msra.mxu0 0.0
    %639 = vmatprep.subr.mxu0 0.0
    %640 = vmatpush1.msra.mxu0 0.0
    %641 = vmatprep.subr.mxu0 0.0
    %642 = vmatpush1.msra.mxu0 0.0
    %643 = vmatprep.subr.mxu0 0.0
    %644 = vmatpush1.msra.mxu0 0.0
    %645 = vmatprep.subr.mxu0 0.0
    %646 = vmatpush1.msra.mxu0 0.0
    %647 = vmatprep.subr.mxu0 0.0
    %648 = vmatpush1.msra.mxu0 0.0
    %649 = vmatprep.subr.mxu0 0.0
    %650 = vmatpush1.msra.mxu0 0.0
    %651 = vmatprep.mubr.f32.mxu0 0.0
    %652 = vmatmul.mubr.f32.gmra.mrb[0].mxu0 %v582
    %v653 = vpop.f32.mrb[0].mxu0
    %v654 = vadd.f32 0.0, %v653
    %v655 = vpop.f32.mrb[0].mxu0
    %656 = vmatprep.mubr.f32.mxu0 0.0
    %657 = vmatmul.mubr.f32.gmra.mrb[0].mxu0 %v585
    %v658 = vpop.f32.mrb[0].mxu0
    %v659 = vadd.f32 0.0, %v658
    %v660 = vpop.f32.mrb[0].mxu0
    %661 = vdwg.mxu0
    %664 = vrot.lane.b32.xlu0 %v654, 16
    %v665 = vpop.permute.xlu0 %664
    %666 = vrot.lane.b32.xlu0 %v659, 16
    %v667 = vpop.permute.xlu0 %666
    %vm670 = vcmask 261248
    %671 = vst.msk [vmem:[#allocation3] sm:$0xff] %vm670, %v665
    %672 = vst.msk [vmem:[#allocation3 + $0x8] sm:$0xff] %vm670, %v667
    %v673 = vld [vmem:[#allocation2] sm:$0xff]
    %v674 = vld [vmem:[#allocation2 + $0x10] sm:$0xff]
    %v675 = vld [vmem:[#allocation2 + $0x8] sm:$0xff]
    %v676 = vld [vmem:[#allocation2 + $0x18] sm:$0xff]
    %679 = vrot.lane.b32.xlu0 %v673, 96
    %v680 = vpop.permute.xlu0 %679
    %681 = vrot.lane.b32.xlu0 %v674, 96
    %v682 = vpop.permute.xlu0 %681
    %683 = vrot.lane.b32.xlu0 %v673, 32
    %v684 = vpop.permute.xlu0 %683
    %685 = vrot.lane.b32.xlu0 %v674, 32
    %v686 = vpop.permute.xlu0 %685
    %v687 = vsel %vm265, %v680, 0
    %v689 = vsel %vm265, %v682, 0
    %v691 = vsel %vm265, %v684, 0
    %v693 = vsel %vm265, %v686, 0
    %695 = vmatprep.subr.mxu0 0.0
    %696 = vmatpush1.xpose.msra.mxu0 %v691
    %697 = vmatprep.subr.mxu0 0.0
    %698 = vmatpush1.xpose.msra.mxu0 %v693
    %699 = vmatprep.subr.mxu0 0.0
    %700 = vmatpush1.xpose.msra.mxu0 0.0
    %701 = vmatprep.subr.mxu0 0.0
    %702 = vmatpush1.xpose.msra.mxu0 0.0
    %703 = vmatprep.subr.mxu0 0.0
    %704 = vmatpush1.xpose.msra.mxu0 0.0
    %705 = vmatprep.subr.mxu0 0.0
    %706 = vmatpush1.xpose.msra.mxu0 0.0
    %707 = vmatprep.subr.mxu0 0.0
    %708 = vmatpush1.xpose.msra.mxu0 0.0
    %709 = vmatprep.subr.mxu0 0.0
    %710 = vmatpush1.xpose.msra.mxu0 0.0
    %711 = vmatprep.subr.mxu0 0.0
    %712 = vmatpush1.xpose.msra.mxu0 0.0
    %713 = vmatprep.subr.mxu0 0.0
    %714 = vmatpush1.xpose.msra.mxu0 0.0
    %715 = vmatprep.subr.mxu0 0.0
    %716 = vmatpush1.xpose.msra.mxu0 0.0
    %717 = vmatprep.subr.mxu0 0.0
    %718 = vmatpush1.xpose.msra.mxu0 0.0
    %719 = vmatprep.subr.mxu0 0.0
    %720 = vmatpush1.xpose.msra.mxu0 0.0
    %721 = vmatprep.subr.mxu0 0.0
    %722 = vmatpush1.xpose.msra.mxu0 0.0
    %723 = vmatprep.subr.mxu0 0.0
    %724 = vmatpush1.xpose.msra.mxu0 0.0
    %725 = vmatprep.subr.mxu0 0.0
    %726 = vmatpush1.xpose.msra.mxu0 0.0
    %727 = vmatprep.subr.mxu0 0.0
    %728 = vmatpush1.xpose.msra.mxu0 0.0
    %729 = vmatprep.subr.mxu0 0.0
    %730 = vmatpush1.xpose.msra.mxu0 0.0
    %731 = vmatprep.subr.mxu0 0.0
    %732 = vmatpush1.xpose.msra.mxu0 0.0
    %733 = vmatprep.subr.mxu0 0.0
    %734 = vmatpush1.xpose.msra.mxu0 0.0
    %735 = vmatprep.subr.mxu0 0.0
    %736 = vmatpush1.xpose.msra.mxu0 0.0
    %737 = vmatprep.subr.mxu0 0.0
    %738 = vmatpush1.xpose.msra.mxu0 0.0
    %739 = vmatprep.subr.mxu0 0.0
    %740 = vmatpush1.xpose.msra.mxu0 0.0
    %741 = vmatprep.subr.mxu0 0.0
    %742 = vmatpush1.xpose.msra.mxu0 0.0
    %743 = vmatprep.subr.mxu0 0.0
    %744 = vmatpush1.xpose.msra.mxu0 0.0
    %745 = vmatprep.subr.mxu0 0.0
    %746 = vmatpush1.xpose.msra.mxu0 0.0
    %747 = vmatprep.subr.mxu0 0.0
    %748 = vmatpush1.xpose.msra.mxu0 0.0
    %749 = vmatprep.subr.mxu0 0.0
    %750 = vmatpush1.xpose.msra.mxu0 0.0
    %751 = vmatprep.subr.mxu0 0.0
    %752 = vmatpush1.xpose.msra.mxu0 0.0
    %753 = vmatprep.subr.mxu0 0.0
    %754 = vmatpush1.xpose.msra.mxu0 0.0
    %755 = vmatprep.subr.mxu0 0.0
    %756 = vmatpush1.xpose.msra.mxu0 0.0
    %757 = vmatprep.subr.mxu0 0.0
    %758 = vmatpush1.xpose.msra.mxu0 0.0
    %759 = vmatprep.mubr.f32.mxu0 0.0
    %760 = vmatmul.mubr.f32.gmra.mrb[0].mxu0 %v687
    %v761 = vpop.f32.mrb[0].mxu0
    %v762 = vadd.f32 0.0, %v761
    %v763 = vpop.f32.mrb[0].mxu0
    %764 = vmatprep.mubr.f32.mxu0 0.0
    %765 = vmatmul.mubr.f32.gmra.mrb[0].mxu0 %v689
    %v766 = vpop.f32.mrb[0].mxu0
    %v767 = vadd.f32 0.0, %v766
    %v768 = vpop.f32.mrb[0].mxu0
    %769 = vdwg.mxu0
    %v770 = vsel %vm265, %v762, -inf
    %771 = vmax.xlane.f32.xlu0 %v770
    %v772 = vpop.xlane.xlu0 %771
    %v773 = vsel %vm265, %v767, -inf
    %774 = vmax.xlane.f32.xlu0 %v773
    %v775 = vpop.xlane.xlu0 %774
    %v776 = vsub.f32 %v762, %v772
    %v777 = vsub.f32 %v767, %v775
    %v778 = vmul.f32 %v776, 1.442695
    %v779 = vpow.pop %v778
    %v780 = vmul.f32 %v777, 1.442695
    %v781 = vpow.pop %v780
    %v782 = vsel %vm265, %v779, 0.0
    %783 = vadd.xlane.f32.xlu0 %v782
    %v784 = vpop.xlane.xlu0 %783
    %v785 = vsel %vm265, %v781, 0.0
    %786 = vadd.xlane.f32.xlu0 %v785
    %v787 = vpop.xlane.xlu0 %786
    %v788 = vrcp.pop %v784
    %v789 = vrcp.pop %v787
    %v790 = vmul.f32 %v779, %v788
    %v791 = vmul.f32 %v781, %v789
    %794 = vrot.lane.b32.xlu0 %v675, 96
    %v795 = vpop.permute.xlu0 %794
    %796 = vrot.lane.b32.xlu0 %v676, 96
    %v797 = vpop.permute.xlu0 %796
    %v801 = vsel %vm265, %v790, 0
    %v804 = vsel %vm265, %v791, 0
    %806 = vmatprep.subr.mxu0 0.0
    %807 = vmatpush1.msra.mxu0 %v795
    %808 = vmatprep.subr.mxu0 0.0
    %809 = vmatpush1.msra.mxu0 %v797
    %810 = vmatprep.subr.mxu0 0.0
    %811 = vmatpush1.msra.mxu0 0.0
    %812 = vmatprep.subr.mxu0 0.0
    %813 = vmatpush1.msra.mxu0 0.0
    %814 = vmatprep.subr.mxu0 0.0
    %815 = vmatpush1.msra.mxu0 0.0
    %816 = vmatprep.subr.mxu0 0.0
    %817 = vmatpush1.msra.mxu0 0.0
    %818 = vmatprep.subr.mxu0 0.0
    %819 = vmatpush1.msra.mxu0 0.0
    %820 = vmatprep.subr.mxu0 0.0
    %821 = vmatpush1.msra.mxu0 0.0
    %822 = vmatprep.subr.mxu0 0.0
    %823 = vmatpush1.msra.mxu0 0.0
    %824 = vmatprep.subr.mxu0 0.0
    %825 = vmatpush1.msra.mxu0 0.0
    %826 = vmatprep.subr.mxu0 0.0
    %827 = vmatpush1.msra.mxu0 0.0
    %828 = vmatprep.subr.mxu0 0.0
    %829 = vmatpush1.msra.mxu0 0.0
    %830 = vmatprep.subr.mxu0 0.0
    %831 = vmatpush1.msra.mxu0 0.0
    %832 = vmatprep.subr.mxu0 0.0
    %833 = vmatpush1.msra.mxu0 0.0
    %834 = vmatprep.subr.mxu0 0.0
    %835 = vmatpush1.msra.mxu0 0.0
    %836 = vmatprep.subr.mxu0 0.0
    %837 = vmatpush1.msra.mxu0 0.0
    %838 = vmatprep.subr.mxu0 0.0
    %839 = vmatpush1.msra.mxu0 0.0
    %840 = vmatprep.subr.mxu0 0.0
    %841 = vmatpush1.msra.mxu0 0.0
    %842 = vmatprep.subr.mxu0 0.0
    %843 = vmatpush1.msra.mxu0 0.0
    %844 = vmatprep.subr.mxu0 0.0
    %845 = vmatpush1.msra.mxu0 0.0
    %846 = vmatprep.subr.mxu0 0.0
    %847 = vmatpush1.msra.mxu0 0.0
    %848 = vmatprep.subr.mxu0 0.0
    %849 = vmatpush1.msra.mxu0 0.0
    %850 = vmatprep.subr.mxu0 0.0
    %851 = vmatpush1.msra.mxu0 0.0
    %852 = vmatprep.subr.mxu0 0.0
    %853 = vmatpush1.msra.mxu0 0.0
    %854 = vmatprep.subr.mxu0 0.0
    %855 = vmatpush1.msra.mxu0 0.0
    %856 = vmatprep.subr.mxu0 0.0
    %857 = vmatpush1.msra.mxu0 0.0
    %858 = vmatprep.subr.mxu0 0.0
    %859 = vmatpush1.msra.mxu0 0.0
    %860 = vmatprep.subr.mxu0 0.0
    %861 = vmatpush1.msra.mxu0 0.0
    %862 = vmatprep.subr.mxu0 0.0
    %863 = vmatpush1.msra.mxu0 0.0
    %864 = vmatprep.subr.mxu0 0.0
    %865 = vmatpush1.msra.mxu0 0.0
    %866 = vmatprep.subr.mxu0 0.0
    %867 = vmatpush1.msra.mxu0 0.0
    %868 = vmatprep.subr.mxu0 0.0
    %869 = vmatpush1.msra.mxu0 0.0
    %870 = vmatprep.mubr.f32.mxu0 0.0
    %871 = vmatmul.mubr.f32.gmra.mrb[0].mxu0 %v801
    %v872 = vpop.f32.mrb[0].mxu0
    %v873 = vadd.f32 0.0, %v872
    %v874 = vpop.f32.mrb[0].mxu0
    %875 = vmatprep.mubr.f32.mxu0 0.0
    %876 = vmatmul.mubr.f32.gmra.mrb[0].mxu0 %v804
    %v877 = vpop.f32.mrb[0].mxu0
    %v878 = vadd.f32 0.0, %v877
    %v879 = vpop.f32.mrb[0].mxu0
    %880 = vdwg.mxu0
    %883 = vrot.lane.b32.xlu0 %v873, 32
    %v884 = vpop.permute.xlu0 %883
    %885 = vrot.lane.b32.xlu0 %v878, 32
    %v886 = vpop.permute.xlu0 %885
    %vm889 = vcmask 392448
    %890 = vst.msk [vmem:[#allocation3] sm:$0xff] %vm889, %v884
    %891 = vst.msk [vmem:[#allocation3 + $0x8] sm:$0xff] %vm889, %v886
    %v892 = vld [vmem:[#allocation2] sm:$0xff]
    %v893 = vld [vmem:[#allocation2 + $0x10] sm:$0xff]
    %v894 = vld [vmem:[#allocation2 + $0x8] sm:$0xff]
    %v895 = vld [vmem:[#allocation2 + $0x18] sm:$0xff]
    %898 = vrot.lane.b32.xlu0 %v892, 80
    %v899 = vpop.permute.xlu0 %898
    %900 = vrot.lane.b32.xlu0 %v893, 80
    %v901 = vpop.permute.xlu0 %900
    %902 = vrot.lane.b32.xlu0 %v892, 16
    %v903 = vpop.permute.xlu0 %902
    %904 = vrot.lane.b32.xlu0 %v893, 16
    %v905 = vpop.permute.xlu0 %904
    %v906 = vsel %vm265, %v899, 0
    %v908 = vsel %vm265, %v901, 0
    %v910 = vsel %vm265, %v903, 0
    %v912 = vsel %vm265, %v905, 0
    %914 = vmatprep.subr.mxu0 0.0
    %915 = vmatpush1.xpose.msra.mxu0 %v910
    %916 = vmatprep.subr.mxu0 0.0
    %917 = vmatpush1.xpose.msra.mxu0 %v912
    %918 = vmatprep.subr.mxu0 0.0
    %919 = vmatpush1.xpose.msra.mxu0 0.0
    %920 = vmatprep.subr.mxu0 0.0
    %921 = vmatpush1.xpose.msra.mxu0 0.0
    %922 = vmatprep.subr.mxu0 0.0
    %923 = vmatpush1.xpose.msra.mxu0 0.0
    %924 = vmatprep.subr.mxu0 0.0
    %925 = vmatpush1.xpose.msra.mxu0 0.0
    %926 = vmatprep.subr.mxu0 0.0
    %927 = vmatpush1.xpose.msra.mxu0 0.0
    %928 = vmatprep.subr.mxu0 0.0
    %929 = vmatpush1.xpose.msra.mxu0 0.0
    %930 = vmatprep.subr.mxu0 0.0
    %931 = vmatpush1.xpose.msra.mxu0 0.0
    %932 = vmatprep.subr.mxu0 0.0
    %933 = vmatpush1.xpose.msra.mxu0 0.0
    %934 = vmatprep.subr.mxu0 0.0
    %935 = vmatpush1.xpose.msra.mxu0 0.0
    %936 = vmatprep.subr.mxu0 0.0
    %937 = vmatpush1.xpose.msra.mxu0 0.0
    %938 = vmatprep.subr.mxu0 0.0
    %939 = vmatpush1.xpose.msra.mxu0 0.0
    %940 = vmatprep.subr.mxu0 0.0
    %941 = vmatpush1.xpose.msra.mxu0 0.0
    %942 = vmatprep.subr.mxu0 0.0
    %943 = vmatpush1.xpose.msra.mxu0 0.0
    %944 = vmatprep.subr.mxu0 0.0
    %945 = vmatpush1.xpose.msra.mxu0 0.0
    %946 = vmatprep.subr.mxu0 0.0
    %947 = vmatpush1.xpose.msra.mxu0 0.0
    %948 = vmatprep.subr.mxu0 0.0
    %949 = vmatpush1.xpose.msra.mxu0 0.0
    %950 = vmatprep.subr.mxu0 0.0
    %951 = vmatpush1.xpose.msra.mxu0 0.0
    %952 = vmatprep.subr.mxu0 0.0
    %953 = vmatpush1.xpose.msra.mxu0 0.0
    %954 = vmatprep.subr.mxu0 0.0
    %955 = vmatpush1.xpose.msra.mxu0 0.0
    %956 = vmatprep.subr.mxu0 0.0
    %957 = vmatpush1.xpose.msra.mxu0 0.0
    %958 = vmatprep.subr.mxu0 0.0
    %959 = vmatpush1.xpose.msra.mxu0 0.0
    %960 = vmatprep.subr.mxu0 0.0
    %961 = vmatpush1.xpose.msra.mxu0 0.0
    %962 = vmatprep.subr.mxu0 0.0
    %963 = vmatpush1.xpose.msra.mxu0 0.0
    %964 = vmatprep.subr.mxu0 0.0
    %965 = vmatpush1.xpose.msra.mxu0 0.0
    %966 = vmatprep.subr.mxu0 0.0
    %967 = vmatpush1.xpose.msra.mxu0 0.0
    %968 = vmatprep.subr.mxu0 0.0
    %969 = vmatpush1.xpose.msra.mxu0 0.0
    %970 = vmatprep.subr.mxu0 0.0
    %971 = vmatpush1.xpose.msra.mxu0 0.0
    %972 = vmatprep.subr.mxu0 0.0
    %973 = vmatpush1.xpose.msra.mxu0 0.0
    %974 = vmatprep.subr.mxu0 0.0
    %975 = vmatpush1.xpose.msra.mxu0 0.0
    %976 = vmatprep.subr.mxu0 0.0
    %977 = vmatpush1.xpose.msra.mxu0 0.0
    %978 = vmatprep.mubr.f32.mxu0 0.0
    %979 = vmatmul.mubr.f32.gmra.mrb[0].mxu0 %v906
    %v980 = vpop.f32.mrb[0].mxu0
    %v981 = vadd.f32 0.0, %v980
    %v982 = vpop.f32.mrb[0].mxu0
    %983 = vmatprep.mubr.f32.mxu0 0.0
    %984 = vmatmul.mubr.f32.gmra.mrb[0].mxu0 %v908
    %v985 = vpop.f32.mrb[0].mxu0
    %v986 = vadd.f32 0.0, %v985
    %v987 = vpop.f32.mrb[0].mxu0
    %988 = vdwg.mxu0
    %v989 = vsel %vm265, %v981, -inf
    %990 = vmax.xlane.f32.xlu0 %v989
    %v991 = vpop.xlane.xlu0 %990
    %v992 = vsel %vm265, %v986, -inf
    %993 = vmax.xlane.f32.xlu0 %v992
    %v994 = vpop.xlane.xlu0 %993
    %v995 = vsub.f32 %v981, %v991
    %v996 = vsub.f32 %v986, %v994
    %v997 = vmul.f32 %v995, 1.442695
    %v998 = vpow.pop %v997
    %v999 = vmul.f32 %v996, 1.442695
    %v1000 = vpow.pop %v999
    %v1001 = vsel %vm265, %v998, 0.0
    %1002 = vadd.xlane.f32.xlu0 %v1001
    %v1003 = vpop.xlane.xlu0 %1002
    %v1004 = vsel %vm265, %v1000, 0.0
    %1005 = vadd.xlane.f32.xlu0 %v1004
    %v1006 = vpop.xlane.xlu0 %1005
    %v1007 = vrcp.pop %v1003
    %v1008 = vrcp.pop %v1006
    %v1009 = vmul.f32 %v998, %v1007
    %v1010 = vmul.f32 %v1000, %v1008
    %1013 = vrot.lane.b32.xlu0 %v894, 80
    %v1014 = vpop.permute.xlu0 %1013
    %1015 = vrot.lane.b32.xlu0 %v895, 80
    %v1016 = vpop.permute.xlu0 %1015
    %v1020 = vsel %vm265, %v1009, 0
    %v1023 = vsel %vm265, %v1010, 0
    %1025 = vmatprep.subr.mxu0 0.0
    %1026 = vmatpush1.msra.mxu0 %v1014
    %1027 = vmatprep.subr.mxu0 0.0
    %1028 = vmatpush1.msra.mxu0 %v1016
    %1029 = vmatprep.subr.mxu0 0.0
    %1030 = vmatpush1.msra.mxu0 0.0
    %1031 = vmatprep.subr.mxu0 0.0
    %1032 = vmatpush1.msra.mxu0 0.0
    %1033 = vmatprep.subr.mxu0 0.0
    %1034 = vmatpush1.msra.mxu0 0.0
    %1035 = vmatprep.subr.mxu0 0.0
    %1036 = vmatpush1.msra.mxu0 0.0
    %1037 = vmatprep.subr.mxu0 0.0
    %1038 = vmatpush1.msra.mxu0 0.0
    %1039 = vmatprep.subr.mxu0 0.0
    %1040 = vmatpush1.msra.mxu0 0.0
    %1041 = vmatprep.subr.mxu0 0.0
    %1042 = vmatpush1.msra.mxu0 0.0
    %1043 = vmatprep.subr.mxu0 0.0
    %1044 = vmatpush1.msra.mxu0 0.0
    %1045 = vmatprep.subr.mxu0 0.0
    %1046 = vmatpush1.msra.mxu0 0.0
    %1047 = vmatprep.subr.mxu0 0.0
    %1048 = vmatpush1.msra.mxu0 0.0
    %1049 = vmatprep.subr.mxu0 0.0
    %1050 = vmatpush1.msra.mxu0 0.0
    %1051 = vmatprep.subr.mxu0 0.0
    %1052 = vmatpush1.msra.mxu0 0.0
    %1053 = vmatprep.subr.mxu0 0.0
    %1054 = vmatpush1.msra.mxu0 0.0
    %1055 = vmatprep.subr.mxu0 0.0
    %1056 = vmatpush1.msra.mxu0 0.0
    %1057 = vmatprep.subr.mxu0 0.0
    %1058 = vmatpush1.msra.mxu0 0.0
    %1059 = vmatprep.subr.mxu0 0.0
    %1060 = vmatpush1.msra.mxu0 0.0
    %1061 = vmatprep.subr.mxu0 0.0
    %1062 = vmatpush1.msra.mxu0 0.0
    %1063 = vmatprep.subr.mxu0 0.0
    %1064 = vmatpush1.msra.mxu0 0.0
    %1065 = vmatprep.subr.mxu0 0.0
    %1066 = vmatpush1.msra.mxu0 0.0
    %1067 = vmatprep.subr.mxu0 0.0
    %1068 = vmatpush1.msra.mxu0 0.0
    %1069 = vmatprep.subr.mxu0 0.0
    %1070 = vmatpush1.msra.mxu0 0.0
    %1071 = vmatprep.subr.mxu0 0.0
    %1072 = vmatpush1.msra.mxu0 0.0
    %1073 = vmatprep.subr.mxu0 0.0
    %1074 = vmatpush1.msra.mxu0 0.0
    %1075 = vmatprep.subr.mxu0 0.0
    %1076 = vmatpush1.msra.mxu0 0.0
    %1077 = vmatprep.subr.mxu0 0.0
    %1078 = vmatpush1.msra.mxu0 0.0
    %1079 = vmatprep.subr.mxu0 0.0
    %1080 = vmatpush1.msra.mxu0 0.0
    %1081 = vmatprep.subr.mxu0 0.0
    %1082 = vmatpush1.msra.mxu0 0.0
    %1083 = vmatprep.subr.mxu0 0.0
    %1084 = vmatpush1.msra.mxu0 0.0
    %1085 = vmatprep.subr.mxu0 0.0
    %1086 = vmatpush1.msra.mxu0 0.0
    %1087 = vmatprep.subr.mxu0 0.0
    %1088 = vmatpush1.msra.mxu0 0.0
    %1089 = vmatprep.mubr.f32.mxu0 0.0
    %1090 = vmatmul.mubr.f32.gmra.mrb[0].mxu0 %v1020
    %v1091 = vpop.f32.mrb[0].mxu0
    %v1092 = vadd.f32 0.0, %v1091
    %v1093 = vpop.f32.mrb[0].mxu0
    %1094 = vmatprep.mubr.f32.mxu0 0.0
    %1095 = vmatmul.mubr.f32.gmra.mrb[0].mxu0 %v1023
    %v1096 = vpop.f32.mrb[0].mxu0
    %v1097 = vadd.f32 0.0, %v1096
    %v1098 = vpop.f32.mrb[0].mxu0
    %1099 = vdwg.mxu0
    %1102 = vrot.lane.b32.xlu0 %v1092, 48
    %v1103 = vpop.permute.xlu0 %1102
    %1104 = vrot.lane.b32.xlu0 %v1097, 48
    %v1105 = vpop.permute.xlu0 %1104
    %vm1108 = vcmask 523648
    %1109 = vst.msk [vmem:[#allocation3] sm:$0xff] %vm1108, %v1103
    %1110 = vst.msk [vmem:[#allocation3 + $0x8] sm:$0xff] %vm1108, %v1105
    %v1111 = vld [vmem:[#allocation2 + $0x20] sm:$0xff]
    %v1112 = vld [vmem:[#allocation2 + $0x30] sm:$0xff]
    %v1113 = vld [vmem:[#allocation2 + $0x28] sm:$0xff]
    %v1114 = vld [vmem:[#allocation2 + $0x38] sm:$0xff]
    %1117 = vrot.lane.b32.xlu0 %v1111, 64
    %v1118 = vpop.permute.xlu0 %1117
    %1119 = vrot.lane.b32.xlu0 %v1112, 64
    %v1120 = vpop.permute.xlu0 %1119
    %v1121 = vsel %vm265, %v1111, 0
    %v1123 = vsel %vm265, %v1112, 0
    %v1125 = vsel %vm265, %v1118, 0
    %v1127 = vsel %vm265, %v1120, 0
    %1129 = vmatprep.subr.mxu0 0.0
    %1130 = vmatpush1.xpose.msra.mxu0 %v1125
    %1131 = vmatprep.subr.mxu0 0.0
    %1132 = vmatpush1.xpose.msra.mxu0 %v1127
    %1133 = vmatprep.subr.mxu0 0.0
    %1134 = vmatpush1.xpose.msra.mxu0 0.0
    %1135 = vmatprep.subr.mxu0 0.0
    %1136 = vmatpush1.xpose.msra.mxu0 0.0
    %1137 = vmatprep.subr.mxu0 0.0
    %1138 = vmatpush1.xpose.msra.mxu0 0.0
    %1139 = vmatprep.subr.mxu0 0.0
    %1140 = vmatpush1.xpose.msra.mxu0 0.0
    %1141 = vmatprep.subr.mxu0 0.0
    %1142 = vmatpush1.xpose.msra.mxu0 0.0
    %1143 = vmatprep.subr.mxu0 0.0
    %1144 = vmatpush1.xpose.msra.mxu0 0.0
    %1145 = vmatprep.subr.mxu0 0.0
    %1146 = vmatpush1.xpose.msra.mxu0 0.0
    %1147 = vmatprep.subr.mxu0 0.0
    %1148 = vmatpush1.xpose.msra.mxu0 0.0
    %1149 = vmatprep.subr.mxu0 0.0
    %1150 = vmatpush1.xpose.msra.mxu0 0.0
    %1151 = vmatprep.subr.mxu0 0.0
    %1152 = vmatpush1.xpose.msra.mxu0 0.0
    %1153 = vmatprep.subr.mxu0 0.0
    %1154 = vmatpush1.xpose.msra.mxu0 0.0
    %1155 = vmatprep.subr.mxu0 0.0
    %1156 = vmatpush1.xpose.msra.mxu0 0.0
    %1157 = vmatprep.subr.mxu0 0.0
    %1158 = vmatpush1.xpose.msra.mxu0 0.0
    %1159 = vmatprep.subr.mxu0 0.0
    %1160 = vmatpush1.xpose.msra.mxu0 0.0
    %1161 = vmatprep.subr.mxu0 0.0
    %1162 = vmatpush1.xpose.msra.mxu0 0.0
    %1163 = vmatprep.subr.mxu0 0.0
    %1164 = vmatpush1.xpose.msra.mxu0 0.0
    %1165 = vmatprep.subr.mxu0 0.0
    %1166 = vmatpush1.xpose.msra.mxu0 0.0
    %1167 = vmatprep.subr.mxu0 0.0
    %1168 = vmatpush1.xpose.msra.mxu0 0.0
    %1169 = vmatprep.subr.mxu0 0.0
    %1170 = vmatpush1.xpose.msra.mxu0 0.0
    %1171 = vmatprep.subr.mxu0 0.0
    %1172 = vmatpush1.xpose.msra.mxu0 0.0
    %1173 = vmatprep.subr.mxu0 0.0
    %1174 = vmatpush1.xpose.msra.mxu0 0.0
    %1175 = vmatprep.subr.mxu0 0.0
    %1176 = vmatpush1.xpose.msra.mxu0 0.0
    %1177 = vmatprep.subr.mxu0 0.0
    %1178 = vmatpush1.xpose.msra.mxu0 0.0
    %1179 = vmatprep.subr.mxu0 0.0
    %1180 = vmatpush1.xpose.msra.mxu0 0.0
    %1181 = vmatprep.subr.mxu0 0.0
    %1182 = vmatpush1.xpose.msra.mxu0 0.0
    %1183 = vmatprep.subr.mxu0 0.0
    %1184 = vmatpush1.xpose.msra.mxu0 0.0
    %1185 = vmatprep.subr.mxu0 0.0
    %1186 = vmatpush1.xpose.msra.mxu0 0.0
    %1187 = vmatprep.subr.mxu0 0.0
    %1188 = vmatpush1.xpose.msra.mxu0 0.0
    %1189 = vmatprep.subr.mxu0 0.0
    %1190 = vmatpush1.xpose.msra.mxu0 0.0
    %1191 = vmatprep.subr.mxu0 0.0
    %1192 = vmatpush1.xpose.msra.mxu0 0.0
    %1193 = vmatprep.mubr.f32.mxu0 0.0
    %1194 = vmatmul.mubr.f32.gmra.mrb[0].mxu0 %v1121
    %v1195 = vpop.f32.mrb[0].mxu0
    %v1196 = vadd.f32 0.0, %v1195
    %v1197 = vpop.f32.mrb[0].mxu0
    %1198 = vmatprep.mubr.f32.mxu0 0.0
    %1199 = vmatmul.mubr.f32.gmra.mrb[0].mxu0 %v1123
    %v1200 = vpop.f32.mrb[0].mxu0
    %v1201 = vadd.f32 0.0, %v1200
    %v1202 = vpop.f32.mrb[0].mxu0
    %1203 = vdwg.mxu0
    %v1204 = vsel %vm265, %v1196, -inf
    %1205 = vmax.xlane.f32.xlu0 %v1204
    %v1206 = vpop.xlane.xlu0 %1205
    %v1207 = vsel %vm265, %v1201, -inf
    %1208 = vmax.xlane.f32.xlu0 %v1207
    %v1209 = vpop.xlane.xlu0 %1208
    %v1210 = vsub.f32 %v1196, %v1206
    %v1211 = vsub.f32 %v1201, %v1209
    %v1212 = vmul.f32 %v1210, 1.442695
    %v1213 = vpow.pop %v1212
    %v1214 = vmul.f32 %v1211, 1.442695
    %v1215 = vpow.pop %v1214
    %v1216 = vsel %vm265, %v1213, 0.0
    %1217 = vadd.xlane.f32.xlu0 %v1216
    %v1218 = vpop.xlane.xlu0 %1217
    %v1219 = vsel %vm265, %v1215, 0.0
    %1220 = vadd.xlane.f32.xlu0 %v1219
    %v1221 = vpop.xlane.xlu0 %1220
    %v1222 = vrcp.pop %v1218
    %v1223 = vrcp.pop %v1221
    %v1224 = vmul.f32 %v1213, %v1222
    %v1225 = vmul.f32 %v1215, %v1223
    %v1227 = vsel %vm265, %v1224, 0
    %v1230 = vsel %vm265, %v1225, 0
    %1232 = vmatprep.subr.mxu0 0.0
    %1233 = vmatpush1.msra.mxu0 %v1113
    %1234 = vmatprep.subr.mxu0 0.0
    %1235 = vmatpush1.msra.mxu0 %v1114
    %1236 = vmatprep.subr.mxu0 0.0
    %1237 = vmatpush1.msra.mxu0 0.0
    %1238 = vmatprep.subr.mxu0 0.0
    %1239 = vmatpush1.msra.mxu0 0.0
    %1240 = vmatprep.subr.mxu0 0.0
    %1241 = vmatpush1.msra.mxu0 0.0
    %1242 = vmatprep.subr.mxu0 0.0
    %1243 = vmatpush1.msra.mxu0 0.0
    %1244 = vmatprep.subr.mxu0 0.0
    %1245 = vmatpush1.msra.mxu0 0.0
    %1246 = vmatprep.subr.mxu0 0.0
    %1247 = vmatpush1.msra.mxu0 0.0
    %1248 = vmatprep.subr.mxu0 0.0
    %1249 = vmatpush1.msra.mxu0 0.0
    %1250 = vmatprep.subr.mxu0 0.0
    %1251 = vmatpush1.msra.mxu0 0.0
    %1252 = vmatprep.subr.mxu0 0.0
    %1253 = vmatpush1.msra.mxu0 0.0
    %1254 = vmatprep.subr.mxu0 0.0
    %1255 = vmatpush1.msra.mxu0 0.0
    %1256 = vmatprep.subr.mxu0 0.0
    %1257 = vmatpush1.msra.mxu0 0.0
    %1258 = vmatprep.subr.mxu0 0.0
    %1259 = vmatpush1.msra.mxu0 0.0
    %1260 = vmatprep.subr.mxu0 0.0
    %1261 = vmatpush1.msra.mxu0 0.0
    %1262 = vmatprep.subr.mxu0 0.0
    %1263 = vmatpush1.msra.mxu0 0.0
    %1264 = vmatprep.subr.mxu0 0.0
    %1265 = vmatpush1.msra.mxu0 0.0
    %1266 = vmatprep.subr.mxu0 0.0
    %1267 = vmatpush1.msra.mxu0 0.0
    %1268 = vmatprep.subr.mxu0 0.0
    %1269 = vmatpush1.msra.mxu0 0.0
    %1270 = vmatprep.subr.mxu0 0.0
    %1271 = vmatpush1.msra.mxu0 0.0
    %1272 = vmatprep.subr.mxu0 0.0
    %1273 = vmatpush1.msra.mxu0 0.0
    %1274 = vmatprep.subr.mxu0 0.0
    %1275 = vmatpush1.msra.mxu0 0.0
    %1276 = vmatprep.subr.mxu0 0.0
    %1277 = vmatpush1.msra.mxu0 0.0
    %1278 = vmatprep.subr.mxu0 0.0
    %1279 = vmatpush1.msra.mxu0 0.0
    %1280 = vmatprep.subr.mxu0 0.0
    %1281 = vmatpush1.msra.mxu0 0.0
    %1282 = vmatprep.subr.mxu0 0.0
    %1283 = vmatpush1.msra.mxu0 0.0
    %1284 = vmatprep.subr.mxu0 0.0
    %1285 = vmatpush1.msra.mxu0 0.0
    %1286 = vmatprep.subr.mxu0 0.0
    %1287 = vmatpush1.msra.mxu0 0.0
    %1288 = vmatprep.subr.mxu0 0.0
    %1289 = vmatpush1.msra.mxu0 0.0
    %1290 = vmatprep.subr.mxu0 0.0
    %1291 = vmatpush1.msra.mxu0 0.0
    %1292 = vmatprep.subr.mxu0 0.0
    %1293 = vmatpush1.msra.mxu0 0.0
    %1294 = vmatprep.subr.mxu0 0.0
    %1295 = vmatpush1.msra.mxu0 0.0
    %1296 = vmatprep.mubr.f32.mxu0 0.0
    %1297 = vmatmul.mubr.f32.gmra.mrb[0].mxu0 %v1227
    %v1298 = vpop.f32.mrb[0].mxu0
    %v1299 = vadd.f32 0.0, %v1298
    %v1300 = vpop.f32.mrb[0].mxu0
    %1301 = vmatprep.mubr.f32.mxu0 0.0
    %1302 = vmatmul.mubr.f32.gmra.mrb[0].mxu0 %v1230
    %v1303 = vpop.f32.mrb[0].mxu0
    %v1304 = vadd.f32 0.0, %v1303
    %v1305 = vpop.f32.mrb[0].mxu0
    %1306 = vdwg.mxu0
    %1307 = vst.msk [vmem:[#allocation3 + $0x10] sm:$0xff] %vm265, %v1299
    %1308 = vst.msk [vmem:[#allocation3 + $0x18] sm:$0xff] %vm265, %v1304
    %v1309 = vld [vmem:[#allocation2 + $0x20] sm:$0xff]
    %v1310 = vld [vmem:[#allocation2 + $0x30] sm:$0xff]
    %v1311 = vld [vmem:[#allocation2 + $0x28] sm:$0xff]
    %v1312 = vld [vmem:[#allocation2 + $0x38] sm:$0xff]
    %1315 = vrot.lane.b32.xlu0 %v1309, 112
    %v1316 = vpop.permute.xlu0 %1315
    %1317 = vrot.lane.b32.xlu0 %v1310, 112
    %v1318 = vpop.permute.xlu0 %1317
    %1319 = vrot.lane.b32.xlu0 %v1309, 48
    %v1320 = vpop.permute.xlu0 %1319
    %1321 = vrot.lane.b32.xlu0 %v1310, 48
    %v1322 = vpop.permute.xlu0 %1321
    %v1323 = vsel %vm265, %v1316, 0
    %v1325 = vsel %vm265, %v1318, 0
    %v1327 = vsel %vm265, %v1320, 0
    %v1329 = vsel %vm265, %v1322, 0
    %1331 = vmatprep.subr.mxu0 0.0
    %1332 = vmatpush1.xpose.msra.mxu0 %v1327
    %1333 = vmatprep.subr.mxu0 0.0
    %1334 = vmatpush1.xpose.msra.mxu0 %v1329
    %1335 = vmatprep.subr.mxu0 0.0
    %1336 = vmatpush1.xpose.msra.mxu0 0.0
    %1337 = vmatprep.subr.mxu0 0.0
    %1338 = vmatpush1.xpose.msra.mxu0 0.0
    %1339 = vmatprep.subr.mxu0 0.0
    %1340 = vmatpush1.xpose.msra.mxu0 0.0
    %1341 = vmatprep.subr.mxu0 0.0
    %1342 = vmatpush1.xpose.msra.mxu0 0.0
    %1343 = vmatprep.subr.mxu0 0.0
    %1344 = vmatpush1.xpose.msra.mxu0 0.0
    %1345 = vmatprep.subr.mxu0 0.0
    %1346 = vmatpush1.xpose.msra.mxu0 0.0
    %1347 = vmatprep.subr.mxu0 0.0
    %1348 = vmatpush1.xpose.msra.mxu0 0.0
    %1349 = vmatprep.subr.mxu0 0.0
    %1350 = vmatpush1.xpose.msra.mxu0 0.0
    %1351 = vmatprep.subr.mxu0 0.0
    %1352 = vmatpush1.xpose.msra.mxu0 0.0
    %1353 = vmatprep.subr.mxu0 0.0
    %1354 = vmatpush1.xpose.msra.mxu0 0.0
    %1355 = vmatprep.subr.mxu0 0.0
    %1356 = vmatpush1.xpose.msra.mxu0 0.0
    %1357 = vmatprep.subr.mxu0 0.0
    %1358 = vmatpush1.xpose.msra.mxu0 0.0
    %1359 = vmatprep.subr.mxu0 0.0
    %1360 = vmatpush1.xpose.msra.mxu0 0.0
    %1361 = vmatprep.subr.mxu0 0.0
    %1362 = vmatpush1.xpose.msra.mxu0 0.0
    %1363 = vmatprep.subr.mxu0 0.0
    %1364 = vmatpush1.xpose.msra.mxu0 0.0
    %1365 = vmatprep.subr.mxu0 0.0
    %1366 = vmatpush1.xpose.msra.mxu0 0.0
    %1367 = vmatprep.subr.mxu0 0.0
    %1368 = vmatpush1.xpose.msra.mxu0 0.0
    %1369 = vmatprep.subr.mxu0 0.0
    %1370 = vmatpush1.xpose.msra.mxu0 0.0
    %1371 = vmatprep.subr.mxu0 0.0
    %1372 = vmatpush1.xpose.msra.mxu0 0.0
    %1373 = vmatprep.subr.mxu0 0.0
    %1374 = vmatpush1.xpose.msra.mxu0 0.0
    %1375 = vmatprep.subr.mxu0 0.0
    %1376 = vmatpush1.xpose.msra.mxu0 0.0
    %1377 = vmatprep.subr.mxu0 0.0
    %1378 = vmatpush1.xpose.msra.mxu0 0.0
    %1379 = vmatprep.subr.mxu0 0.0
    %1380 = vmatpush1.xpose.msra.mxu0 0.0
    %1381 = vmatprep.subr.mxu0 0.0
    %1382 = vmatpush1.xpose.msra.mxu0 0.0
    %1383 = vmatprep.subr.mxu0 0.0
    %1384 = vmatpush1.xpose.msra.mxu0 0.0
    %1385 = vmatprep.subr.mxu0 0.0
    %1386 = vmatpush1.xpose.msra.mxu0 0.0
    %1387 = vmatprep.subr.mxu0 0.0
    %1388 = vmatpush1.xpose.msra.mxu0 0.0
    %1389 = vmatprep.subr.mxu0 0.0
    %1390 = vmatpush1.xpose.msra.mxu0 0.0
    %1391 = vmatprep.subr.mxu0 0.0
    %1392 = vmatpush1.xpose.msra.mxu0 0.0
    %1393 = vmatprep.subr.mxu0 0.0
    %1394 = vmatpush1.xpose.msra.mxu0 0.0
    %1395 = vmatprep.mubr.f32.mxu0 0.0
    %1396 = vmatmul.mubr.f32.gmra.mrb[0].mxu0 %v1323
    %v1397 = vpop.f32.mrb[0].mxu0
    %v1398 = vadd.f32 0.0, %v1397
    %v1399 = vpop.f32.mrb[0].mxu0
    %1400 = vmatprep.mubr.f32.mxu0 0.0
    %1401 = vmatmul.mubr.f32.gmra.mrb[0].mxu0 %v1325
    %v1402 = vpop.f32.mrb[0].mxu0
    %v1403 = vadd.f32 0.0, %v1402
    %v1404 = vpop.f32.mrb[0].mxu0
    %1405 = vdwg.mxu0
    %v1406 = vsel %vm265, %v1398, -inf
    %1407 = vmax.xlane.f32.xlu0 %v1406
    %v1408 = vpop.xlane.xlu0 %1407
    %v1409 = vsel %vm265, %v1403, -inf
    %1410 = vmax.xlane.f32.xlu0 %v1409
    %v1411 = vpop.xlane.xlu0 %1410
    %v1412 = vsub.f32 %v1398, %v1408
    %v1413 = vsub.f32 %v1403, %v1411
    %v1414 = vmul.f32 %v1412, 1.442695
    %v1415 = vpow.pop %v1414
    %v1416 = vmul.f32 %v1413, 1.442695
    %v1417 = vpow.pop %v1416
    %v1418 = vsel %vm265, %v1415, 0.0
    %1419 = vadd.xlane.f32.xlu0 %v1418
    %v1420 = vpop.xlane.xlu0 %1419
    %v1421 = vsel %vm265, %v1417, 0.0
    %1422 = vadd.xlane.f32.xlu0 %v1421
    %v1423 = vpop.xlane.xlu0 %1422
    %v1424 = vrcp.pop %v1420
    %v1425 = vrcp.pop %v1423
    %v1426 = vmul.f32 %v1415, %v1424
    %v1427 = vmul.f32 %v1417, %v1425
    %1430 = vrot.lane.b32.xlu0 %v1311, 112
    %v1431 = vpop.permute.xlu0 %1430
    %1432 = vrot.lane.b32.xlu0 %v1312, 112
    %v1433 = vpop.permute.xlu0 %1432
    %v1437 = vsel %vm265, %v1426, 0
    %v1440 = vsel %vm265, %v1427, 0
    %1442 = vmatprep.subr.mxu0 0.0
    %1443 = vmatpush1.msra.mxu0 %v1431
    %1444 = vmatprep.subr.mxu0 0.0
    %1445 = vmatpush1.msra.mxu0 %v1433
    %1446 = vmatprep.subr.mxu0 0.0
    %1447 = vmatpush1.msra.mxu0 0.0
    %1448 = vmatprep.subr.mxu0 0.0
    %1449 = vmatpush1.msra.mxu0 0.0
    %1450 = vmatprep.subr.mxu0 0.0
    %1451 = vmatpush1.msra.mxu0 0.0
    %1452 = vmatprep.subr.mxu0 0.0
    %1453 = vmatpush1.msra.mxu0 0.0
    %1454 = vmatprep.subr.mxu0 0.0
    %1455 = vmatpush1.msra.mxu0 0.0
    %1456 = vmatprep.subr.mxu0 0.0
    %1457 = vmatpush1.msra.mxu0 0.0
    %1458 = vmatprep.subr.mxu0 0.0
    %1459 = vmatpush1.msra.mxu0 0.0
    %1460 = vmatprep.subr.mxu0 0.0
    %1461 = vmatpush1.msra.mxu0 0.0
    %1462 = vmatprep.subr.mxu0 0.0
    %1463 = vmatpush1.msra.mxu0 0.0
    %1464 = vmatprep.subr.mxu0 0.0
    %1465 = vmatpush1.msra.mxu0 0.0
    %1466 = vmatprep.subr.mxu0 0.0
    %1467 = vmatpush1.msra.mxu0 0.0
    %1468 = vmatprep.subr.mxu0 0.0
    %1469 = vmatpush1.msra.mxu0 0.0
    %1470 = vmatprep.subr.mxu0 0.0
    %1471 = vmatpush1.msra.mxu0 0.0
    %1472 = vmatprep.subr.mxu0 0.0
    %1473 = vmatpush1.msra.mxu0 0.0
    %1474 = vmatprep.subr.mxu0 0.0
    %1475 = vmatpush1.msra.mxu0 0.0
    %1476 = vmatprep.subr.mxu0 0.0
    %1477 = vmatpush1.msra.mxu0 0.0
    %1478 = vmatprep.subr.mxu0 0.0
    %1479 = vmatpush1.msra.mxu0 0.0
    %1480 = vmatprep.subr.mxu0 0.0
    %1481 = vmatpush1.msra.mxu0 0.0
    %1482 = vmatprep.subr.mxu0 0.0
    %1483 = vmatpush1.msra.mxu0 0.0
    %1484 = vmatprep.subr.mxu0 0.0
    %1485 = vmatpush1.msra.mxu0 0.0
    %1486 = vmatprep.subr.mxu0 0.0
    %1487 = vmatpush1.msra.mxu0 0.0
    %1488 = vmatprep.subr.mxu0 0.0
    %1489 = vmatpush1.msra.mxu0 0.0
    %1490 = vmatprep.subr.mxu0 0.0
    %1491 = vmatpush1.msra.mxu0 0.0
    %1492 = vmatprep.subr.mxu0 0.0
    %1493 = vmatpush1.msra.mxu0 0.0
    %1494 = vmatprep.subr.mxu0 0.0
    %1495 = vmatpush1.msra.mxu0 0.0
    %1496 = vmatprep.subr.mxu0 0.0
    %1497 = vmatpush1.msra.mxu0 0.0
    %1498 = vmatprep.subr.mxu0 0.0
    %1499 = vmatpush1.msra.mxu0 0.0
    %1500 = vmatprep.subr.mxu0 0.0
    %1501 = vmatpush1.msra.mxu0 0.0
    %1502 = vmatprep.subr.mxu0 0.0
    %1503 = vmatpush1.msra.mxu0 0.0
    %1504 = vmatprep.subr.mxu0 0.0
    %1505 = vmatpush1.msra.mxu0 0.0
    %1506 = vmatprep.mubr.f32.mxu0 0.0
    %1507 = vmatmul.mubr.f32.gmra.mrb[0].mxu0 %v1437
    %v1508 = vpop.f32.mrb[0].mxu0
    %v1509 = vadd.f32 0.0, %v1508
    %v1510 = vpop.f32.mrb[0].mxu0
    %1511 = vmatprep.mubr.f32.mxu0 0.0
    %1512 = vmatmul.mubr.f32.gmra.mrb[0].mxu0 %v1440
    %v1513 = vpop.f32.mrb[0].mxu0
    %v1514 = vadd.f32 0.0, %v1513
    %v1515 = vpop.f32.mrb[0].mxu0
    %1516 = vdwg.mxu0
    %1519 = vrot.lane.b32.xlu0 %v1509, 16
    %v1520 = vpop.permute.xlu0 %1519
    %1521 = vrot.lane.b32.xlu0 %v1514, 16
    %v1522 = vpop.permute.xlu0 %1521
    %1525 = vst.msk [vmem:[#allocation3 + $0x10] sm:$0xff] %vm670, %v1520
    %1526 = vst.msk [vmem:[#allocation3 + $0x18] sm:$0xff] %vm670, %v1522
    %v1527 = vld [vmem:[#allocation2 + $0x20] sm:$0xff]
    %v1528 = vld [vmem:[#allocation2 + $0x30] sm:$0xff]
    %v1529 = vld [vmem:[#allocation2 + $0x28] sm:$0xff]
    %v1530 = vld [vmem:[#allocation2 + $0x38] sm:$0xff]
    %1533 = vrot.lane.b32.xlu0 %v1527, 96
    %v1534 = vpop.permute.xlu0 %1533
    %1535 = vrot.lane.b32.xlu0 %v1528, 96
    %v1536 = vpop.permute.xlu0 %1535
    %1537 = vrot.lane.b32.xlu0 %v1527, 32
    %v1538 = vpop.permute.xlu0 %1537
    %1539 = vrot.lane.b32.xlu0 %v1528, 32
    %v1540 = vpop.permute.xlu0 %1539
    %v1541 = vsel %vm265, %v1534, 0
    %v1543 = vsel %vm265, %v1536, 0
    %v1545 = vsel %vm265, %v1538, 0
    %v1547 = vsel %vm265, %v1540, 0
    %1549 = vmatprep.subr.mxu0 0.0
    %1550 = vmatpush1.xpose.msra.mxu0 %v1545
    %1551 = vmatprep.subr.mxu0 0.0
    %1552 = vmatpush1.xpose.msra.mxu0 %v1547
    %1553 = vmatprep.subr.mxu0 0.0
    %1554 = vmatpush1.xpose.msra.mxu0 0.0
    %1555 = vmatprep.subr.mxu0 0.0
    %1556 = vmatpush1.xpose.msra.mxu0 0.0
    %1557 = vmatprep.subr.mxu0 0.0
    %1558 = vmatpush1.xpose.msra.mxu0 0.0
    %1559 = vmatprep.subr.mxu0 0.0
    %1560 = vmatpush1.xpose.msra.mxu0 0.0
    %1561 = vmatprep.subr.mxu0 0.0
    %1562 = vmatpush1.xpose.msra.mxu0 0.0
    %1563 = vmatprep.subr.mxu0 0.0
    %1564 = vmatpush1.xpose.msra.mxu0 0.0
    %1565 = vmatprep.subr.mxu0 0.0
    %1566 = vmatpush1.xpose.msra.mxu0 0.0
    %1567 = vmatprep.subr.mxu0 0.0
    %1568 = vmatpush1.xpose.msra.mxu0 0.0
    %1569 = vmatprep.subr.mxu0 0.0
    %1570 = vmatpush1.xpose.msra.mxu0 0.0
    %1571 = vmatprep.subr.mxu0 0.0
    %1572 = vmatpush1.xpose.msra.mxu0 0.0
    %1573 = vmatprep.subr.mxu0 0.0
    %1574 = vmatpush1.xpose.msra.mxu0 0.0
    %1575 = vmatprep.subr.mxu0 0.0
    %1576 = vmatpush1.xpose.msra.mxu0 0.0
    %1577 = vmatprep.subr.mxu0 0.0
    %1578 = vmatpush1.xpose.msra.mxu0 0.0
    %1579 = vmatprep.subr.mxu0 0.0
    %1580 = vmatpush1.xpose.msra.mxu0 0.0
    %1581 = vmatprep.subr.mxu0 0.0
    %1582 = vmatpush1.xpose.msra.mxu0 0.0
    %1583 = vmatprep.subr.mxu0 0.0
    %1584 = vmatpush1.xpose.msra.mxu0 0.0
    %1585 = vmatprep.subr.mxu0 0.0
    %1586 = vmatpush1.xpose.msra.mxu0 0.0
    %1587 = vmatprep.subr.mxu0 0.0
    %1588 = vmatpush1.xpose.msra.mxu0 0.0
    %1589 = vmatprep.subr.mxu0 0.0
    %1590 = vmatpush1.xpose.msra.mxu0 0.0
    %1591 = vmatprep.subr.mxu0 0.0
    %1592 = vmatpush1.xpose.msra.mxu0 0.0
    %1593 = vmatprep.subr.mxu0 0.0
    %1594 = vmatpush1.xpose.msra.mxu0 0.0
    %1595 = vmatprep.subr.mxu0 0.0
    %1596 = vmatpush1.xpose.msra.mxu0 0.0
    %1597 = vmatprep.subr.mxu0 0.0
    %1598 = vmatpush1.xpose.msra.mxu0 0.0
    %1599 = vmatprep.subr.mxu0 0.0
    %1600 = vmatpush1.xpose.msra.mxu0 0.0
    %1601 = vmatprep.subr.mxu0 0.0
    %1602 = vmatpush1.xpose.msra.mxu0 0.0
    %1603 = vmatprep.subr.mxu0 0.0
    %1604 = vmatpush1.xpose.msra.mxu0 0.0
    %1605 = vmatprep.subr.mxu0 0.0
    %1606 = vmatpush1.xpose.msra.mxu0 0.0
    %1607 = vmatprep.subr.mxu0 0.0
    %1608 = vmatpush1.xpose.msra.mxu0 0.0
    %1609 = vmatprep.subr.mxu0 0.0
    %1610 = vmatpush1.xpose.msra.mxu0 0.0
    %1611 = vmatprep.subr.mxu0 0.0
    %1612 = vmatpush1.xpose.msra.mxu0 0.0
    %1613 = vmatprep.mubr.f32.mxu0 0.0
    %1614 = vmatmul.mubr.f32.gmra.mrb[0].mxu0 %v1541
    %v1615 = vpop.f32.mrb[0].mxu0
    %v1616 = vadd.f32 0.0, %v1615
    %v1617 = vpop.f32.mrb[0].mxu0
    %1618 = vmatprep.mubr.f32.mxu0 0.0
    %1619 = vmatmul.mubr.f32.gmra.mrb[0].mxu0 %v1543
    %v1620 = vpop.f32.mrb[0].mxu0
    %v1621 = vadd.f32 0.0, %v1620
    %v1622 = vpop.f32.mrb[0].mxu0
    %1623 = vdwg.mxu0
    %v1624 = vsel %vm265, %v1616, -inf
    %1625 = vmax.xlane.f32.xlu0 %v1624
    %v1626 = vpop.xlane.xlu0 %1625
    %v1627 = vsel %vm265, %v1621, -inf
    %1628 = vmax.xlane.f32.xlu0 %v1627
    %v1629 = vpop.xlane.xlu0 %1628
    %v1630 = vsub.f32 %v1616, %v1626
    %v1631 = vsub.f32 %v1621, %v1629
    %v1632 = vmul.f32 %v1630, 1.442695
    %v1633 = vpow.pop %v1632
    %v1634 = vmul.f32 %v1631, 1.442695
    %v1635 = vpow.pop %v1634
    %v1636 = vsel %vm265, %v1633, 0.0
    %1637 = vadd.xlane.f32.xlu0 %v1636
    %v1638 = vpop.xlane.xlu0 %1637
    %v1639 = vsel %vm265, %v1635, 0.0
    %1640 = vadd.xlane.f32.xlu0 %v1639
    %v1641 = vpop.xlane.xlu0 %1640
    %v1642 = vrcp.pop %v1638
    %v1643 = vrcp.pop %v1641
    %v1644 = vmul.f32 %v1633, %v1642
    %v1645 = vmul.f32 %v1635, %v1643
    %1648 = vrot.lane.b32.xlu0 %v1529, 96
    %v1649 = vpop.permute.xlu0 %1648
    %1650 = vrot.lane.b32.xlu0 %v1530, 96
    %v1651 = vpop.permute.xlu0 %1650
    %v1655 = vsel %vm265, %v1644, 0
    %v1658 = vsel %vm265, %v1645, 0
    %1660 = vmatprep.subr.mxu0 0.0
    %1661 = vmatpush1.msra.mxu0 %v1649
    %1662 = vmatprep.subr.mxu0 0.0
    %1663 = vmatpush1.msra.mxu0 %v1651
    %1664 = vmatprep.subr.mxu0 0.0
    %1665 = vmatpush1.msra.mxu0 0.0
    %1666 = vmatprep.subr.mxu0 0.0
    %1667 = vmatpush1.msra.mxu0 0.0
    %1668 = vmatprep.subr.mxu0 0.0
    %1669 = vmatpush1.msra.mxu0 0.0
    %1670 = vmatprep.subr.mxu0 0.0
    %1671 = vmatpush1.msra.mxu0 0.0
    %1672 = vmatprep.subr.mxu0 0.0
    %1673 = vmatpush1.msra.mxu0 0.0
    %1674 = vmatprep.subr.mxu0 0.0
    %1675 = vmatpush1.msra.mxu0 0.0
    %1676 = vmatprep.subr.mxu0 0.0
    %1677 = vmatpush1.msra.mxu0 0.0
    %1678 = vmatprep.subr.mxu0 0.0
    %1679 = vmatpush1.msra.mxu0 0.0
    %1680 = vmatprep.subr.mxu0 0.0
    %1681 = vmatpush1.msra.mxu0 0.0
    %1682 = vmatprep.subr.mxu0 0.0
    %1683 = vmatpush1.msra.mxu0 0.0
    %1684 = vmatprep.subr.mxu0 0.0
    %1685 = vmatpush1.msra.mxu0 0.0
    %1686 = vmatprep.subr.mxu0 0.0
    %1687 = vmatpush1.msra.mxu0 0.0
    %1688 = vmatprep.subr.mxu0 0.0
    %1689 = vmatpush1.msra.mxu0 0.0
    %1690 = vmatprep.subr.mxu0 0.0
    %1691 = vmatpush1.msra.mxu0 0.0
    %1692 = vmatprep.subr.mxu0 0.0
    %1693 = vmatpush1.msra.mxu0 0.0
    %1694 = vmatprep.subr.mxu0 0.0
    %1695 = vmatpush1.msra.mxu0 0.0
    %1696 = vmatprep.subr.mxu0 0.0
    %1697 = vmatpush1.msra.mxu0 0.0
    %1698 = vmatprep.subr.mxu0 0.0
    %1699 = vmatpush1.msra.mxu0 0.0
    %1700 = vmatprep.subr.mxu0 0.0
    %1701 = vmatpush1.msra.mxu0 0.0
    %1702 = vmatprep.subr.mxu0 0.0
    %1703 = vmatpush1.msra.mxu0 0.0
    %1704 = vmatprep.subr.mxu0 0.0
    %1705 = vmatpush1.msra.mxu0 0.0
    %1706 = vmatprep.subr.mxu0 0.0
    %1707 = vmatpush1.msra.mxu0 0.0
    %1708 = vmatprep.subr.mxu0 0.0
    %1709 = vmatpush1.msra.mxu0 0.0
    %1710 = vmatprep.subr.mxu0 0.0
    %1711 = vmatpush1.msra.mxu0 0.0
    %1712 = vmatprep.subr.mxu0 0.0
    %1713 = vmatpush1.msra.mxu0 0.0
    %1714 = vmatprep.subr.mxu0 0.0
    %1715 = vmatpush1.msra.mxu0 0.0
    %1716 = vmatprep.subr.mxu0 0.0
    %1717 = vmatpush1.msra.mxu0 0.0
    %1718 = vmatprep.subr.mxu0 0.0
    %1719 = vmatpush1.msra.mxu0 0.0
    %1720 = vmatprep.subr.mxu0 0.0
    %1721 = vmatpush1.msra.mxu0 0.0
    %1722 = vmatprep.subr.mxu0 0.0
    %1723 = vmatpush1.msra.mxu0 0.0
    %1724 = vmatprep.mubr.f32.mxu0 0.0
    %1725 = vmatmul.mubr.f32.gmra.mrb[0].mxu0 %v1655
    %v1726 = vpop.f32.mrb[0].mxu0
    %v1727 = vadd.f32 0.0, %v1726
    %v1728 = vpop.f32.mrb[0].mxu0
    %1729 = vmatprep.mubr.f32.mxu0 0.0
    %1730 = vmatmul.mubr.f32.gmra.mrb[0].mxu0 %v1658
    %v1731 = vpop.f32.mrb[0].mxu0
    %v1732 = vadd.f32 0.0, %v1731
    %v1733 = vpop.f32.mrb[0].mxu0
    %1734 = vdwg.mxu0
    %1737 = vrot.lane.b32.xlu0 %v1727, 32
    %v1738 = vpop.permute.xlu0 %1737
    %1739 = vrot.lane.b32.xlu0 %v1732, 32
    %v1740 = vpop.permute.xlu0 %1739
    %1743 = vst.msk [vmem:[#allocation3 + $0x10] sm:$0xff] %vm889, %v1738
    %1744 = vst.msk [vmem:[#allocation3 + $0x18] sm:$0xff] %vm889, %v1740
    %v1745 = vld [vmem:[#allocation2 + $0x20] sm:$0xff]
    %v1746 = vld [vmem:[#allocation2 + $0x30] sm:$0xff]
    %v1747 = vld [vmem:[#allocation2 + $0x28] sm:$0xff]
    %v1748 = vld [vmem:[#allocation2 + $0x38] sm:$0xff]
    %1751 = vrot.lane.b32.xlu0 %v1745, 80
    %v1752 = vpop.permute.xlu0 %1751
    %1753 = vrot.lane.b32.xlu0 %v1746, 80
    %v1754 = vpop.permute.xlu0 %1753
    %1755 = vrot.lane.b32.xlu0 %v1745, 16
    %v1756 = vpop.permute.xlu0 %1755
    %1757 = vrot.lane.b32.xlu0 %v1746, 16
    %v1758 = vpop.permute.xlu0 %1757
    %v1759 = vsel %vm265, %v1752, 0
    %v1761 = vsel %vm265, %v1754, 0
    %v1763 = vsel %vm265, %v1756, 0
    %v1765 = vsel %vm265, %v1758, 0
    %1767 = vmatprep.subr.mxu0 0.0
    %1768 = vmatpush1.xpose.msra.mxu0 %v1763
    %1769 = vmatprep.subr.mxu0 0.0
    %1770 = vmatpush1.xpose.msra.mxu0 %v1765
    %1771 = vmatprep.subr.mxu0 0.0
    %1772 = vmatpush1.xpose.msra.mxu0 0.0
    %1773 = vmatprep.subr.mxu0 0.0
    %1774 = vmatpush1.xpose.msra.mxu0 0.0
    %1775 = vmatprep.subr.mxu0 0.0
    %1776 = vmatpush1.xpose.msra.mxu0 0.0
    %1777 = vmatprep.subr.mxu0 0.0
    %1778 = vmatpush1.xpose.msra.mxu0 0.0
    %1779 = vmatprep.subr.mxu0 0.0
    %1780 = vmatpush1.xpose.msra.mxu0 0.0
    %1781 = vmatprep.subr.mxu0 0.0
    %1782 = vmatpush1.xpose.msra.mxu0 0.0
    %1783 = vmatprep.subr.mxu0 0.0
    %1784 = vmatpush1.xpose.msra.mxu0 0.0
    %1785 = vmatprep.subr.mxu0 0.0
    %1786 = vmatpush1.xpose.msra.mxu0 0.0
    %1787 = vmatprep.subr.mxu0 0.0
    %1788 = vmatpush1.xpose.msra.mxu0 0.0
    %1789 = vmatprep.subr.mxu0 0.0
    %1790 = vmatpush1.xpose.msra.mxu0 0.0
    %1791 = vmatprep.subr.mxu0 0.0
    %1792 = vmatpush1.xpose.msra.mxu0 0.0
    %1793 = vmatprep.subr.mxu0 0.0
    %1794 = vmatpush1.xpose.msra.mxu0 0.0
    %1795 = vmatprep.subr.mxu0 0.0
    %1796 = vmatpush1.xpose.msra.mxu0 0.0
    %1797 = vmatprep.subr.mxu0 0.0
    %1798 = vmatpush1.xpose.msra.mxu0 0.0
    %1799 = vmatprep.subr.mxu0 0.0
    %1800 = vmatpush1.xpose.msra.mxu0 0.0
    %1801 = vmatprep.subr.mxu0 0.0
    %1802 = vmatpush1.xpose.msra.mxu0 0.0
    %1803 = vmatprep.subr.mxu0 0.0
    %1804 = vmatpush1.xpose.msra.mxu0 0.0
    %1805 = vmatprep.subr.mxu0 0.0
    %1806 = vmatpush1.xpose.msra.mxu0 0.0
    %1807 = vmatprep.subr.mxu0 0.0
    %1808 = vmatpush1.xpose.msra.mxu0 0.0
    %1809 = vmatprep.subr.mxu0 0.0
    %1810 = vmatpush1.xpose.msra.mxu0 0.0
    %1811 = vmatprep.subr.mxu0 0.0
    %1812 = vmatpush1.xpose.msra.mxu0 0.0
    %1813 = vmatprep.subr.mxu0 0.0
    %1814 = vmatpush1.xpose.msra.mxu0 0.0
    %1815 = vmatprep.subr.mxu0 0.0
    %1816 = vmatpush1.xpose.msra.mxu0 0.0
    %1817 = vmatprep.subr.mxu0 0.0
    %1818 = vmatpush1.xpose.msra.mxu0 0.0
    %1819 = vmatprep.subr.mxu0 0.0
    %1820 = vmatpush1.xpose.msra.mxu0 0.0
    %1821 = vmatprep.subr.mxu0 0.0
    %1822 = vmatpush1.xpose.msra.mxu0 0.0
    %1823 = vmatprep.subr.mxu0 0.0
    %1824 = vmatpush1.xpose.msra.mxu0 0.0
    %1825 = vmatprep.subr.mxu0 0.0
    %1826 = vmatpush1.xpose.msra.mxu0 0.0
    %1827 = vmatprep.subr.mxu0 0.0
    %1828 = vmatpush1.xpose.msra.mxu0 0.0
    %1829 = vmatprep.subr.mxu0 0.0
    %1830 = vmatpush1.xpose.msra.mxu0 0.0
    %1831 = vmatprep.mubr.f32.mxu0 0.0
    %1832 = vmatmul.mubr.f32.gmra.mrb[0].mxu0 %v1759
    %v1833 = vpop.f32.mrb[0].mxu0
    %v1834 = vadd.f32 0.0, %v1833
    %v1835 = vpop.f32.mrb[0].mxu0
    %1836 = vmatprep.mubr.f32.mxu0 0.0
    %1837 = vmatmul.mubr.f32.gmra.mrb[0].mxu0 %v1761
    %v1838 = vpop.f32.mrb[0].mxu0
    %v1839 = vadd.f32 0.0, %v1838
    %v1840 = vpop.f32.mrb[0].mxu0
    %1841 = vdwg.mxu0
    %v1842 = vsel %vm265, %v1834, -inf
    %1843 = vmax.xlane.f32.xlu0 %v1842
    %v1844 = vpop.xlane.xlu0 %1843
    %v1845 = vsel %vm265, %v1839, -inf
    %1846 = vmax.xlane.f32.xlu0 %v1845
    %v1847 = vpop.xlane.xlu0 %1846
    %v1848 = vsub.f32 %v1834, %v1844
    %v1849 = vsub.f32 %v1839, %v1847
    %v1850 = vmul.f32 %v1848, 1.442695
    %v1851 = vpow.pop %v1850
    %v1852 = vmul.f32 %v1849, 1.442695
    %v1853 = vpow.pop %v1852
    %v1854 = vsel %vm265, %v1851, 0.0
    %1855 = vadd.xlane.f32.xlu0 %v1854
    %v1856 = vpop.xlane.xlu0 %1855
    %v1857 = vsel %vm265, %v1853, 0.0
    %1858 = vadd.xlane.f32.xlu0 %v1857
    %v1859 = vpop.xlane.xlu0 %1858
    %v1860 = vrcp.pop %v1856
    %v1861 = vrcp.pop %v1859
    %v1862 = vmul.f32 %v1851, %v1860
    %v1863 = vmul.f32 %v1853, %v1861
    %1866 = vrot.lane.b32.xlu0 %v1747, 80
    %v1867 = vpop.permute.xlu0 %1866
    %1868 = vrot.lane.b32.xlu0 %v1748, 80
    %v1869 = vpop.permute.xlu0 %1868
    %v1873 = vsel %vm265, %v1862, 0
    %v1876 = vsel %vm265, %v1863, 0
    %1878 = vmatprep.subr.mxu0 0.0
    %1879 = vmatpush1.msra.mxu0 %v1867
    %1880 = vmatprep.subr.mxu0 0.0
    %1881 = vmatpush1.msra.mxu0 %v1869
    %1882 = vmatprep.subr.mxu0 0.0
    %1883 = vmatpush1.msra.mxu0 0.0
    %1884 = vmatprep.subr.mxu0 0.0
    %1885 = vmatpush1.msra.mxu0 0.0
    %1886 = vmatprep.subr.mxu0 0.0
    %1887 = vmatpush1.msra.mxu0 0.0
    %1888 = vmatprep.subr.mxu0 0.0
    %1889 = vmatpush1.msra.mxu0 0.0
    %1890 = vmatprep.subr.mxu0 0.0
    %1891 = vmatpush1.msra.mxu0 0.0
    %1892 = vmatprep.subr.mxu0 0.0
    %1893 = vmatpush1.msra.mxu0 0.0
    %1894 = vmatprep.subr.mxu0 0.0
    %1895 = vmatpush1.msra.mxu0 0.0
    %1896 = vmatprep.subr.mxu0 0.0
    %1897 = vmatpush1.msra.mxu0 0.0
    %1898 = vmatprep.subr.mxu0 0.0
    %1899 = vmatpush1.msra.mxu0 0.0
    %1900 = vmatprep.subr.mxu0 0.0
    %1901 = vmatpush1.msra.mxu0 0.0
    %1902 = vmatprep.subr.mxu0 0.0
    %1903 = vmatpush1.msra.mxu0 0.0
    %1904 = vmatprep.subr.mxu0 0.0
    %1905 = vmatpush1.msra.mxu0 0.0
    %1906 = vmatprep.subr.mxu0 0.0
    %1907 = vmatpush1.msra.mxu0 0.0
    %1908 = vmatprep.subr.mxu0 0.0
    %1909 = vmatpush1.msra.mxu0 0.0
    %1910 = vmatprep.subr.mxu0 0.0
    %1911 = vmatpush1.msra.mxu0 0.0
    %1912 = vmatprep.subr.mxu0 0.0
    %1913 = vmatpush1.msra.mxu0 0.0
    %1914 = vmatprep.subr.mxu0 0.0
    %1915 = vmatpush1.msra.mxu0 0.0
    %1916 = vmatprep.subr.mxu0 0.0
    %1917 = vmatpush1.msra.mxu0 0.0
    %1918 = vmatprep.subr.mxu0 0.0
    %1919 = vmatpush1.msra.mxu0 0.0
    %1920 = vmatprep.subr.mxu0 0.0
    %1921 = vmatpush1.msra.mxu0 0.0
    %1922 = vmatprep.subr.mxu0 0.0
    %1923 = vmatpush1.msra.mxu0 0.0
    %1924 = vmatprep.subr.mxu0 0.0
    %1925 = vmatpush1.msra.mxu0 0.0
    %1926 = vmatprep.subr.mxu0 0.0
    %1927 = vmatpush1.msra.mxu0 0.0
    %1928 = vmatprep.subr.mxu0 0.0
    %1929 = vmatpush1.msra.mxu0 0.0
    %1930 = vmatprep.subr.mxu0 0.0
    %1931 = vmatpush1.msra.mxu0 0.0
    %1932 = vmatprep.subr.mxu0 0.0
    %1933 = vmatpush1.msra.mxu0 0.0
    %1934 = vmatprep.subr.mxu0 0.0
    %1935 = vmatpush1.msra.mxu0 0.0
    %1936 = vmatprep.subr.mxu0 0.0
    %1937 = vmatpush1.msra.mxu0 0.0
    %1938 = vmatprep.subr.mxu0 0.0
    %1939 = vmatpush1.msra.mxu0 0.0
    %1940 = vmatprep.subr.mxu0 0.0
    %1941 = vmatpush1.msra.mxu0 0.0
    %1942 = vmatprep.mubr.f32.mxu0 0.0
    %1943 = vmatmul.mubr.f32.gmra.mrb[0].mxu0 %v1873
    %v1944 = vpop.f32.mrb[0].mxu0
    %v1945 = vadd.f32 0.0, %v1944
    %v1946 = vpop.f32.mrb[0].mxu0
    %1947 = vmatprep.mubr.f32.mxu0 0.0
    %1948 = vmatmul.mubr.f32.gmra.mrb[0].mxu0 %v1876
    %v1949 = vpop.f32.mrb[0].mxu0
    %v1950 = vadd.f32 0.0, %v1949
    %v1951 = vpop.f32.mrb[0].mxu0
    %1952 = vdwg.mxu0
    %1955 = vrot.lane.b32.xlu0 %v1945, 48
    %v1956 = vpop.permute.xlu0 %1955
    %1957 = vrot.lane.b32.xlu0 %v1950, 48
    %v1958 = vpop.permute.xlu0 %1957
    %1961 = vst.msk [vmem:[#allocation3 + $0x10] sm:$0xff] %vm1108, %v1956
    %1962 = vst.msk [vmem:[#allocation3 + $0x18] sm:$0xff] %vm1108, %v1958
    %v1963 = vld [vmem:[#allocation3] sm:$0xff]
    %v1964 = vld [vmem:[#allocation3 + $0x8] sm:$0xff]
    %v1965 = vld [vmem:[#allocation3 + $0x10] sm:$0xff]
    %v1966 = vld [vmem:[#allocation3 + $0x18] sm:$0xff]
    %v1967 = vpack.c.bf16 %v1964, %v1963
    %v1968 = vpack.c.bf16 %v1966, %v1965
    %v1969 = vld [vmem:[%s5] sm:$0xf]
    %v1970 = vld [vmem:[%s5 + $0x4] sm:$0xf]
    %v1971 = vld [vmem:[%s5 + $0x8] sm:$0xf]
    %v1972 = vld [vmem:[%s5 + $0xc] sm:$0xf]
    %v1973 = vld [vmem:[%s5 + $0x10] sm:$0xf]
    %v1974 = vld [vmem:[%s5 + $0x14] sm:$0xf]
    %v1975 = vld [vmem:[%s5 + $0x18] sm:$0xf]
    %v1976 = vld [vmem:[%s5 + $0x1c] sm:$0xf]
    %v1977 = vld [vmem:[%s6] sm:$0x1]
    %v1979 = vlaneseq
    %v1980 = vshrl.u32 %v1979, 7
    %v1981 = vsub.s32 0, %v1980
    %v1982 = vrot.slane %v1977, %v1981
    %v1992 = vunpack.c.l.b16 %v1969
    %v1993 = vunpack.c.l.b16 %v1970
    %v1994 = vunpack.c.l.b16 %v1971
    %v1995 = vunpack.c.l.b16 %v1972
    %v1996 = vunpack.c.l.b16 %v1973
    %v1997 = vunpack.c.l.b16 %v1974
    %v1998 = vunpack.c.l.b16 %v1975
    %v1999 = vunpack.c.l.b16 %v1976
    %v2000 = vpack.c.b16 %v1993, %v1992
    %v2001 = vpack.c.b16 %v1995, %v1994
    %v2002 = vpack.c.b16 %v1997, %v1996
    %v2003 = vpack.c.b16 %v1999, %v1998
    %v2009 = vsel %vm52, %v1967, 0
    %v2012 = vsel %vm52, %v1968, 0
    %2014 = vmatprep.subr.bf16.mxu0 0
    %2015 = vmatpush1.bf16.msra.mxu0 %v2000
    %2016 = vmatprep.subr.bf16.mxu0 0
    %2017 = vmatpush1.bf16.msra.mxu0 %v2001
    %2018 = vmatprep.subr.bf16.mxu0 0
    %2019 = vmatpush1.bf16.msra.mxu0 %v2002
    %2020 = vmatprep.subr.bf16.mxu0 0
    %2021 = vmatpush1.bf16.msra.mxu0 %v2003
    %2022 = vmatprep.subr.bf16.mxu0 0
    %2023 = vmatpush1.bf16.msra.mxu0 0
    %2024 = vmatprep.subr.bf16.mxu0 0
    %2025 = vmatpush1.bf16.msra.mxu0 0
    %2026 = vmatprep.subr.bf16.mxu0 0
    %2027 = vmatpush1.bf16.msra.mxu0 0
    %2028 = vmatprep.subr.bf16.mxu0 0
    %2029 = vmatpush1.bf16.msra.mxu0 0
    %2030 = vmatprep.subr.bf16.mxu0 0
    %2031 = vmatpush1.bf16.msra.mxu0 0
    %2032 = vmatprep.subr.bf16.mxu0 0
    %2033 = vmatpush1.bf16.msra.mxu0 0
    %2034 = vmatprep.subr.bf16.mxu0 0
    %2035 = vmatpush1.bf16.msra.mxu0 0
    %2036 = vmatprep.subr.bf16.mxu0 0
    %2037 = vmatpush1.bf16.msra.mxu0 0
    %2038 = vmatprep.subr.bf16.mxu0 0
    %2039 = vmatpush1.bf16.msra.mxu0 0
    %2040 = vmatprep.subr.bf16.mxu0 0
    %2041 = vmatpush1.bf16.msra.mxu0 0
    %2042 = vmatprep.subr.bf16.mxu0 0
    %2043 = vmatpush1.bf16.msra.mxu0 0
    %2044 = vmatprep.subr.bf16.mxu0 0
    %2045 = vmatpush1.bf16.msra.mxu0 0
    %2046 = vmatprep.mubr.bf16.mxu0 0
    %2047 = vmatmul.mubr.bf16.gmra.mrb[0].mxu0 %v2009
    %v2048 = vpop.f32.mrb[0].mxu0
    %v2049 = vadd.f32 %v1982, %v2048
    %v2050 = vpop.f32.mrb[0].mxu0
    %v2051 = vpop.f32.mrb[0].mxu0
    %v2052 = vadd.f32 %v1982, %v2051
    %v2053 = vpop.f32.mrb[0].mxu0
    %2054 = vmatprep.mubr.bf16.mxu0 0
    %2055 = vmatmul.mubr.bf16.gmra.mrb[0].mxu0 %v2012
    %v2056 = vpop.f32.mrb[0].mxu0
    %v2057 = vadd.f32 %v1982, %v2056
    %v2058 = vpop.f32.mrb[0].mxu0
    %v2059 = vpop.f32.mrb[0].mxu0
    %v2060 = vadd.f32 %v1982, %v2059
    %v2061 = vpop.f32.mrb[0].mxu0
    %2062 = vdwg.mxu0
    %v2063 = vadd.f32 %v46, %v2049
    %v2064 = vadd.f32 %v47, %v2052
    %v2065 = vadd.f32 %v48, %v2057
    %v2066 = vadd.f32 %v49, %v2060
    %v2067 = vld [vmem:[%s7] sm:$0x1]
    %v2068 = vld [vmem:[%s8] sm:$0x1]
    %v2069 = vsel %vm52, %v2063, 0.0
    %2070 = vadd.xlane.f32.xlu0 %v2069
    %v2071 = vpop.xlane.xlu0 %2070
    %v2072 = vsel %vm52, %v2064, 0.0
    %2073 = vadd.xlane.f32.xlu0 %v2072
    %v2074 = vpop.xlane.xlu0 %2073
    %v2075 = vsel %vm52, %v2065, 0.0
    %2076 = vadd.xlane.f32.xlu0 %v2075
    %v2077 = vpop.xlane.xlu0 %2076
    %v2078 = vsel %vm52, %v2066, 0.0
    %2079 = vadd.xlane.f32.xlu0 %v2078
    %v2080 = vpop.xlane.xlu0 %2079
    %v2081 = vmul.f32 %v2071, %v65
    %v2082 = vmul.f32 %v2074, %v65
    %v2083 = vmul.f32 %v2077, %v65
    %v2084 = vmul.f32 %v2080, %v65
    %v2085 = vsub.f32 %v2063, %v2081
    %v2086 = vsub.f32 %v2064, %v2082
    %v2087 = vsub.f32 %v2065, %v2083
    %v2088 = vsub.f32 %v2066, %v2084
    %v2089 = vmul.f32 %v2085, %v2085
    %v2090 = vmul.f32 %v2086, %v2086
    %v2091 = vmul.f32 %v2087, %v2087
    %v2092 = vmul.f32 %v2088, %v2088
    %v2093 = vsel %vm52, %v2089, 0.0
    %2094 = vadd.xlane.f32.xlu0 %v2093
    %v2095 = vpop.xlane.xlu0 %2094
    %v2096 = vsel %vm52, %v2090, 0.0
    %2097 = vadd.xlane.f32.xlu0 %v2096
    %v2098 = vpop.xlane.xlu0 %2097
    %v2099 = vsel %vm52, %v2091, 0.0
    %2100 = vadd.xlane.f32.xlu0 %v2099
    %v2101 = vpop.xlane.xlu0 %2100
    %v2102 = vsel %vm52, %v2092, 0.0
    %2103 = vadd.xlane.f32.xlu0 %v2102
    %v2104 = vpop.xlane.xlu0 %2103
    %v2105 = vmul.f32 %v2095, %v65
    %v2106 = vmul.f32 %v2098, %v65
    %v2107 = vmul.f32 %v2101, %v65
    %v2108 = vmul.f32 %v2104, %v65
    %v2109 = vadd.f32 %v2105, 1e-05
    %v2110 = vadd.f32 %v2106, 1e-05
    %v2111 = vadd.f32 %v2107, 1e-05
    %v2112 = vadd.f32 %v2108, 1e-05
    %v2113 = vrsqrt.pop %v2109
    %v2114 = vrsqrt.pop %v2110
    %v2115 = vrsqrt.pop %v2111
    %v2116 = vrsqrt.pop %v2112
    %v2117 = vmul.f32 %v2085, %v2113
    %v2118 = vmul.f32 %v2086, %v2114
    %v2119 = vmul.f32 %v2087, %v2115
    %v2120 = vmul.f32 %v2088, %v2116
    %v2122 = vlaneseq
    %v2123 = vshrl.u32 %v2122, 7
    %v2124 = vsub.s32 0, %v2123
    %v2125 = vrot.slane %v2067, %v2124
    %v2127 = vmul.f32 %v2117, %v2125
    %v2128 = vmul.f32 %v2118, %v2125
    %v2129 = vmul.f32 %v2119, %v2125
    %v2130 = vmul.f32 %v2120, %v2125
    %v2132 = vlaneseq
    %v2133 = vshrl.u32 %v2132, 7
    %v2134 = vsub.s32 0, %v2133
    %v2135 = vrot.slane %v2068, %v2134
    %v2137 = vadd.f32 %v2127, %v2135
    %v2138 = vadd.f32 %v2128, %v2135
    %v2139 = vadd.f32 %v2129, %v2135
    %v2140 = vadd.f32 %v2130, %v2135
    %v2141 = vpack.c.bf16 %v2138, %v2137
    %v2142 = vpack.c.bf16 %v2140, %v2139
    %v2143 = vld [vmem:[%s9] sm:$0xff]
    %v2144 = vld [vmem:[%s9 + $0x8] sm:$0xff]
    %v2145 = vld [vmem:[%s9 + $0x10] sm:$0xff]
    %v2146 = vld [vmem:[%s9 + $0x18] sm:$0xff]
    %v2147 = vld [vmem:[%s9 + $0x20] sm:$0xff]
    %v2148 = vld [vmem:[%s9 + $0x28] sm:$0xff]
    %v2149 = vld [vmem:[%s9 + $0x30] sm:$0xff]
    %v2150 = vld [vmem:[%s9 + $0x38] sm:$0xff]
    %v2151 = vld [vmem:[%s10] sm:$0x3]
    %v2153 = vlaneseq
    %v2154 = vshrl.u32 %v2153, 7
    %v2155 = vsub.s32 0, %v2154
    %v2156 = vrot.slane %v2151, %v2155
    %v2157 = vlaneseq
    %v2158 = vshrl.u32 %v2157, 7
    %v2159 = vsub.s32 1, %v2158
    %v2160 = vrot.slane %v2151, %v2159
    %v2171 = vunpack.c.l.b16 %v2143
    %v2172 = vunpack.c.h.b16 %v2143
    %v2173 = vunpack.c.l.b16 %v2144
    %v2174 = vunpack.c.h.b16 %v2144
    %v2175 = vunpack.c.l.b16 %v2145
    %v2176 = vunpack.c.h.b16 %v2145
    %v2177 = vunpack.c.l.b16 %v2146
    %v2178 = vunpack.c.h.b16 %v2146
    %v2179 = vunpack.c.l.b16 %v2147
    %v2180 = vunpack.c.h.b16 %v2147
    %v2181 = vunpack.c.l.b16 %v2148
    %v2182 = vunpack.c.h.b16 %v2148
    %v2183 = vunpack.c.l.b16 %v2149
    %v2184 = vunpack.c.h.b16 %v2149
    %v2185 = vunpack.c.l.b16 %v2150
    %v2186 = vunpack.c.h.b16 %v2150
    %v2187 = vpack.c.b16 %v2173, %v2171
    %v2188 = vpack.c.b16 %v2174, %v2172
    %v2189 = vpack.c.b16 %v2177, %v2175
    %v2190 = vpack.c.b16 %v2178, %v2176
    %v2191 = vpack.c.b16 %v2181, %v2179
    %v2192 = vpack.c.b16 %v2182, %v2180
    %v2193 = vpack.c.b16 %v2185, %v2183
    %v2194 = vpack.c.b16 %v2186, %v2184
    %v2204 = vsel %vm52, %v2141, 0
    %v2207 = vsel %vm52, %v2142, 0
    %2209 = vmatprep.subr.bf16.mxu0 %v2188
    %2210 = vmatpush1.bf16.msra.mxu0 %v2187
    %2211 = vmatprep.subr.bf16.mxu0 %v2190
    %2212 = vmatpush1.bf16.msra.mxu0 %v2189
    %2213 = vmatprep.subr.bf16.mxu0 %v2192
    %2214 = vmatpush1.bf16.msra.mxu0 %v2191
    %2215 = vmatprep.subr.bf16.mxu0 %v2194
    %2216 = vmatpush1.bf16.msra.mxu0 %v2193
    %2217 = vmatprep.subr.bf16.mxu0 0
    %2218 = vmatpush1.bf16.msra.mxu0 0
    %2219 = vmatprep.subr.bf16.mxu0 0
    %2220 = vmatpush1.bf16.msra.mxu0 0
    %2221 = vmatprep.subr.bf16.mxu0 0
    %2222 = vmatpush1.bf16.msra.mxu0 0
    %2223 = vmatprep.subr.bf16.mxu0 0
    %2224 = vmatpush1.bf16.msra.mxu0 0
    %2225 = vmatprep.subr.bf16.mxu0 0
    %2226 = vmatpush1.bf16.msra.mxu0 0
    %2227 = vmatprep.subr.bf16.mxu0 0
    %2228 = vmatpush1.bf16.msra.mxu0 0
    %2229 = vmatprep.subr.bf16.mxu0 0
    %2230 = vmatpush1.bf16.msra.mxu0 0
    %2231 = vmatprep.subr.bf16.mxu0 0
    %2232 = vmatpush1.bf16.msra.mxu0 0
    %2233 = vmatprep.subr.bf16.mxu0 0
    %2234 = vmatpush1.bf16.msra.mxu0 0
    %2235 = vmatprep.subr.bf16.mxu0 0
    %2236 = vmatpush1.bf16.msra.mxu0 0
    %2237 = vmatprep.subr.bf16.mxu0 0
    %2238 = vmatpush1.bf16.msra.mxu0 0
    %2239 = vmatprep.subr.bf16.mxu0 0
    %2240 = vmatpush1.bf16.msra.mxu0 0
    %2241 = vmatprep.mubr.bf16.mxu0 0
    %2242 = vmatmul.mubr.bf16.gmra.mrb[0].mxu0 %v2204
    %v2243 = vpop.f32.mrb[0].mxu0
    %v2244 = vadd.f32 %v2156, %v2243
    %v2245 = vpop.f32.mrb[0].mxu0
    %v2246 = vadd.f32 %v2160, %v2245
    %v2247 = vpop.f32.mrb[0].mxu0
    %v2248 = vadd.f32 %v2156, %v2247
    %v2249 = vpop.f32.mrb[0].mxu0
    %v2250 = vadd.f32 %v2160, %v2249
    %2251 = vmatprep.mubr.bf16.mxu0 0
    %2252 = vmatmul.mubr.bf16.gmra.mrb[0].mxu0 %v2207
    %v2253 = vpop.f32.mrb[0].mxu0
    %v2254 = vadd.f32 %v2156, %v2253
    %v2255 = vpop.f32.mrb[0].mxu0
    %v2256 = vadd.f32 %v2160, %v2255
    %v2257 = vpop.f32.mrb[0].mxu0
    %v2258 = vadd.f32 %v2156, %v2257
    %v2259 = vpop.f32.mrb[0].mxu0
    %v2260 = vadd.f32 %v2160, %v2259
    %2261 = vdwg.mxu0
    %v2262 = vmul.f32 %v2244, 0.70710677
    %v2263 = vmul.f32 %v2246, 0.70710677
    %v2264 = vmul.f32 %v2248, 0.70710677
    %v2265 = vmul.f32 %v2250, 0.70710677
    %v2266 = vmul.f32 %v2254, 0.70710677
    %v2267 = vmul.f32 %v2256, 0.70710677
    %v2268 = vmul.f32 %v2258, 0.70710677
    %v2269 = vmul.f32 %v2260, 0.70710677
    %v2270 = vand.u32 2147483647, %v2262
    %v2271 = vand.u32 2147483647, %v2263
    %v2272 = vand.u32 2147483647, %v2264
    %v2273 = vand.u32 2147483647, %v2265
    %v2274 = vand.u32 2147483647, %v2266
    %v2275 = vand.u32 2147483647, %v2267
    %v2276 = vand.u32 2147483647, %v2268
    %v2277 = vand.u32 2147483647, %v2269
    %v2278 = vmul.f32 %v2270, 0.3275911
    %v2279 = vmul.f32 %v2271, 0.3275911
    %v2280 = vmul.f32 %v2272, 0.3275911
    %v2281 = vmul.f32 %v2273, 0.3275911
    %v2282 = vmul.f32 %v2274, 0.3275911
    %v2283 = vmul.f32 %v2275, 0.3275911
    %v2284 = vmul.f32 %v2276, 0.3275911
    %v2285 = vmul.f32 %v2277, 0.3275911
    %v2286 = vadd.f32 %v2278, 1.0
    %v2287 = vadd.f32 %v2279, 1.0
    %v2288 = vadd.f32 %v2280, 1.0
    %v2289 = vadd.f32 %v2281, 1.0
    %v2290 = vadd.f32 %v2282, 1.0
    %v2291 = vadd.f32 %v2283, 1.0
    %v2292 = vadd.f32 %v2284, 1.0
    %v2293 = vadd.f32 %v2285, 1.0
    %v2294 = vrcp.pop %v2286
    %v2295 = vmul.f32 1.0, %v2294
    %v2296 = vrcp.pop %v2287
    %v2297 = vmul.f32 1.0, %v2296
    %v2298 = vrcp.pop %v2288
    %v2299 = vmul.f32 1.0, %v2298
    %v2300 = vrcp.pop %v2289
    %v2301 = vmul.f32 1.0, %v2300
    %v2302 = vrcp.pop %v2290
    %v2303 = vmul.f32 1.0, %v2302
    %v2304 = vrcp.pop %v2291
    %v2305 = vmul.f32 1.0, %v2304
    %v2306 = vrcp.pop %v2292
    %v2307 = vmul.f32 1.0, %v2306
    %v2308 = vrcp.pop %v2293
    %v2309 = vmul.f32 1.0, %v2308
    %v2310 = vmul.f32 %v2295, 1.0614054
    %v2311 = vmul.f32 %v2297, 1.0614054
    %v2312 = vmul.f32 %v2299, 1.0614054
    %v2313 = vmul.f32 %v2301, 1.0614054
    %v2314 = vmul.f32 %v2303, 1.0614054
    %v2315 = vmul.f32 %v2305, 1.0614054
    %v2316 = vmul.f32 %v2307, 1.0614054
    %v2317 = vmul.f32 %v2309, 1.0614054
    %v2318 = vsub.f32 %v2310, 1.4531521
    %v2319 = vsub.f32 %v2311, 1.4531521
    %v2320 = vsub.f32 %v2312, 1.4531521
    %v2321 = vsub.f32 %v2313, 1.4531521
    %v2322 = vsub.f32 %v2314, 1.4531521
    %v2323 = vsub.f32 %v2315, 1.4531521
    %v2324 = vsub.f32 %v2316, 1.4531521
    %v2325 = vsub.f32 %v2317, 1.4531521
    %v2326 = vmul.f32 %v2318, %v2295
    %v2327 = vmul.f32 %v2319, %v2297
    %v2328 = vmul.f32 %v2320, %v2299
    %v2329 = vmul.f32 %v2321, %v2301
    %v2330 = vmul.f32 %v2322, %v2303
    %v2331 = vmul.f32 %v2323, %v2305
    %v2332 = vmul.f32 %v2324, %v2307
    %v2333 = vmul.f32 %v2325, %v2309
    %v2334 = vadd.f32 %v2326, 1.4214138
    %v2335 = vadd.f32 %v2327, 1.4214138
    %v2336 = vadd.f32 %v2328, 1.4214138
    %v2337 = vadd.f32 %v2329, 1.4214138
    %v2338 = vadd.f32 %v2330, 1.4214138
    %v2339 = vadd.f32 %v2331, 1.4214138
    %v2340 = vadd.f32 %v2332, 1.4214138
    %v2341 = vadd.f32 %v2333, 1.4214138
    %v2342 = vmul.f32 %v2334, %v2295
    %v2343 = vmul.f32 %v2335, %v2297
    %v2344 = vmul.f32 %v2336, %v2299
    %v2345 = vmul.f32 %v2337, %v2301
    %v2346 = vmul.f32 %v2338, %v2303
    %v2347 = vmul.f32 %v2339, %v2305
    %v2348 = vmul.f32 %v2340, %v2307
    %v2349 = vmul.f32 %v2341, %v2309
    %v2350 = vsub.f32 %v2342, 0.28449672
    %v2351 = vsub.f32 %v2343, 0.28449672
    %v2352 = vsub.f32 %v2344, 0.28449672
    %v2353 = vsub.f32 %v2345, 0.28449672
    %v2354 = vsub.f32 %v2346, 0.28449672
    %v2355 = vsub.f32 %v2347, 0.28449672
    %v2356 = vsub.f32 %v2348, 0.28449672
    %v2357 = vsub.f32 %v2349, 0.28449672
    %v2358 = vmul.f32 %v2350, %v2295
    %v2359 = vmul.f32 %v2351, %v2297
    %v2360 = vmul.f32 %v2352, %v2299
    %v2361 = vmul.f32 %v2353, %v2301
    %v2362 = vmul.f32 %v2354, %v2303
    %v2363 = vmul.f32 %v2355, %v2305
    %v2364 = vmul.f32 %v2356, %v2307
    %v2365 = vmul.f32 %v2357, %v2309
    %v2366 = vadd.f32 %v2358, 0.2548296
    %v2367 = vadd.f32 %v2359, 0.2548296
    %v2368 = vadd.f32 %v2360, 0.2548296
    %v2369 = vadd.f32 %v2361, 0.2548296
    %v2370 = vadd.f32 %v2362, 0.2548296
    %v2371 = vadd.f32 %v2363, 0.2548296
    %v2372 = vadd.f32 %v2364, 0.2548296
    %v2373 = vadd.f32 %v2365, 0.2548296
    %v2374 = vmul.f32 %v2366, %v2295
    %v2375 = vmul.f32 %v2367, %v2297
    %v2376 = vmul.f32 %v2368, %v2299
    %v2377 = vmul.f32 %v2369, %v2301
    %v2378 = vmul.f32 %v2370, %v2303
    %v2379 = vmul.f32 %v2371, %v2305
    %v2380 = vmul.f32 %v2372, %v2307
    %v2381 = vmul.f32 %v2373, %v2309
    %v2382 = vsub.f32 0.0, %v2270
    %v2383 = vsub.f32 0.0, %v2271
    %v2384 = vsub.f32 0.0, %v2272
    %v2385 = vsub.f32 0.0, %v2273
    %v2386 = vsub.f32 0.0, %v2274
    %v2387 = vsub.f32 0.0, %v2275
    %v2388 = vsub.f32 0.0, %v2276
    %v2389 = vsub.f32 0.0, %v2277
    %v2390 = vmul.f32 %v2382, %v2270
    %v2391 = vmul.f32 %v2383, %v2271
    %v2392 = vmul.f32 %v2384, %v2272
    %v2393 = vmul.f32 %v2385, %v2273
    %v2394 = vmul.f32 %v2386, %v2274
    %v2395 = vmul.f32 %v2387, %v2275
    %v2396 = vmul.f32 %v2388, %v2276
    %v2397 = vmul.f32 %v2389, %v2277
    %v2398 = vmul.f32 %v2390, 1.442695
    %v2399 = vpow.pop %v2398
    %v2400 = vmul.f32 %v2391, 1.442695
    %v2401 = vpow.pop %v2400
    %v2402 = vmul.f32 %v2392, 1.442695
    %v2403 = vpow.pop %v2402
    %v2404 = vmul.f32 %v2393, 1.442695
    %v2405 = vpow.pop %v2404
    %v2406 = vmul.f32 %v2394, 1.442695
    %v2407 = vpow.pop %v2406
    %v2408 = vmul.f32 %v2395, 1.442695
    %v2409 = vpow.pop %v2408
    %v2410 = vmul.f32 %v2396, 1.442695
    %v2411 = vpow.pop %v2410
    %v2412 = vmul.f32 %v2397, 1.442695
    %v2413 = vpow.pop %v2412
    %v2414 = vmul.f32 %v2374, %v2399
    %v2415 = vmul.f32 %v2375, %v2401
    %v2416 = vmul.f32 %v2376, %v2403
    %v2417 = vmul.f32 %v2377, %v2405
    %v2418 = vmul.f32 %v2378, %v2407
    %v2419 = vmul.f32 %v2379, %v2409
    %v2420 = vmul.f32 %v2380, %v2411
    %v2421 = vmul.f32 %v2381, %v2413
    %v2422 = vsub.f32 1.0, %v2414
    %v2423 = vsub.f32 1.0, %v2415
    %v2424 = vsub.f32 1.0, %v2416
    %v2425 = vsub.f32 1.0, %v2417
    %v2426 = vsub.f32 1.0, %v2418
    %v2427 = vsub.f32 1.0, %v2419
    %v2428 = vsub.f32 1.0, %v2420
    %v2429 = vsub.f32 1.0, %v2421
    %vm2430 = vcmp.ge.f32.partialorder %v2262, 0.0
    %vm2431 = vcmp.ge.f32.partialorder %v2263, 0.0
    %vm2432 = vcmp.ge.f32.partialorder %v2264, 0.0
    %vm2433 = vcmp.ge.f32.partialorder %v2265, 0.0
    %vm2434 = vcmp.ge.f32.partialorder %v2266, 0.0
    %vm2435 = vcmp.ge.f32.partialorder %v2267, 0.0
    %vm2436 = vcmp.ge.f32.partialorder %v2268, 0.0
    %vm2437 = vcmp.ge.f32.partialorder %v2269, 0.0
    %v2438 = vsub.f32 0.0, %v2422
    %v2439 = vsub.f32 0.0, %v2423
    %v2440 = vsub.f32 0.0, %v2424
    %v2441 = vsub.f32 0.0, %v2425
    %v2442 = vsub.f32 0.0, %v2426
    %v2443 = vsub.f32 0.0, %v2427
    %v2444 = vsub.f32 0.0, %v2428
    %v2445 = vsub.f32 0.0, %v2429
    %v2446 = vsel %vm2430, %v2422, %v2438
    %v2447 = vsel %vm2431, %v2423, %v2439
    %v2448 = vsel %vm2432, %v2424, %v2440
    %v2449 = vsel %vm2433, %v2425, %v2441
    %v2450 = vsel %vm2434, %v2426, %v2442
    %v2451 = vsel %vm2435, %v2427, %v2443
    %v2452 = vsel %vm2436, %v2428, %v2444
    %v2453 = vsel %vm2437, %v2429, %v2445
    %v2454 = vmul.f32 %v2244, 0.5
    %v2455 = vmul.f32 %v2246, 0.5
    %v2456 = vmul.f32 %v2248, 0.5
    %v2457 = vmul.f32 %v2250, 0.5
    %v2458 = vmul.f32 %v2254, 0.5
    %v2459 = vmul.f32 %v2256, 0.5
    %v2460 = vmul.f32 %v2258, 0.5
    %v2461 = vmul.f32 %v2260, 0.5
    %v2462 = vadd.f32 %v2446, 1.0
    %v2463 = vadd.f32 %v2447, 1.0
    %v2464 = vadd.f32 %v2448, 1.0
    %v2465 = vadd.f32 %v2449, 1.0
    %v2466 = vadd.f32 %v2450, 1.0
    %v2467 = vadd.f32 %v2451, 1.0
    %v2468 = vadd.f32 %v2452, 1.0
    %v2469 = vadd.f32 %v2453, 1.0
    %v2470 = vmul.f32 %v2454, %v2462
    %v2471 = vmul.f32 %v2455, %v2463
    %v2472 = vmul.f32 %v2456, %v2464
    %v2473 = vmul.f32 %v2457, %v2465
    %v2474 = vmul.f32 %v2458, %v2466
    %v2475 = vmul.f32 %v2459, %v2467
    %v2476 = vmul.f32 %v2460, %v2468
    %v2477 = vmul.f32 %v2461, %v2469
    %v2478 = vpack.c.bf16 %v2472, %v2470
    %v2479 = vpack.c.bf16 %v2473, %v2471
    %v2480 = vpack.c.bf16 %v2476, %v2474
    %v2481 = vpack.c.bf16 %v2477, %v2475
    %v2482 = vld [vmem:[%s11] sm:$0xf]
    %v2483 = vld [vmem:[%s11 + $0x4] sm:$0xf]
    %v2484 = vld [vmem:[%s11 + $0x8] sm:$0xf]
    %v2485 = vld [vmem:[%s11 + $0xc] sm:$0xf]
    %v2486 = vld [vmem:[%s11 + $0x10] sm:$0xf]
    %v2487 = vld [vmem:[%s11 + $0x14] sm:$0xf]
    %v2488 = vld [vmem:[%s11 + $0x18] sm:$0xf]
    %v2489 = vld [vmem:[%s11 + $0x1c] sm:$0xf]
    %v2490 = vld [vmem:[%s11 + $0x20] sm:$0xf]
    %v2491 = vld [vmem:[%s11 + $0x24] sm:$0xf]
    %v2492 = vld [vmem:[%s11 + $0x28] sm:$0xf]
    %v2493 = vld [vmem:[%s11 + $0x2c] sm:$0xf]
    %v2494 = vld [vmem:[%s11 + $0x30] sm:$0xf]
    %v2495 = vld [vmem:[%s11 + $0x34] sm:$0xf]
    %v2496 = vld [vmem:[%s11 + $0x38] sm:$0xf]
    %v2497 = vld [vmem:[%s11 + $0x3c] sm:$0xf]
    %v2498 = vld [vmem:[%s11 + $0x40] sm:$0xf]
    %v2499 = vld [vmem:[%s11 + $0x44] sm:$0xf]
    %v2500 = vld [vmem:[%s11 + $0x48] sm:$0xf]
    %v2501 = vld [vmem:[%s11 + $0x4c] sm:$0xf]
    %v2502 = vld [vmem:[%s11 + $0x50] sm:$0xf]
    %v2503 = vld [vmem:[%s11 + $0x54] sm:$0xf]
    %v2504 = vld [vmem:[%s11 + $0x58] sm:$0xf]
    %v2505 = vld [vmem:[%s11 + $0x5c] sm:$0xf]
    %v2506 = vld [vmem:[%s11 + $0x60] sm:$0xf]
    %v2507 = vld [vmem:[%s11 + $0x64] sm:$0xf]
    %v2508 = vld [vmem:[%s11 + $0x68] sm:$0xf]
    %v2509 = vld [vmem:[%s11 + $0x6c] sm:$0xf]
    %v2510 = vld [vmem:[%s11 + $0x70] sm:$0xf]
    %v2511 = vld [vmem:[%s11 + $0x74] sm:$0xf]
    %v2512 = vld [vmem:[%s11 + $0x78] sm:$0xf]
    %v2513 = vld [vmem:[%s11 + $0x7c] sm:$0xf]
    %v2514 = vld [vmem:[%s12] sm:$0x1]
    %v2516 = vlaneseq
    %v2517 = vshrl.u32 %v2516, 7
    %v2518 = vsub.s32 0, %v2517
    %v2519 = vrot.slane %v2514, %v2518
    %v2553 = vunpack.c.l.b16 %v2482
    %v2554 = vunpack.c.l.b16 %v2483
    %v2555 = vunpack.c.l.b16 %v2484
    %v2556 = vunpack.c.l.b16 %v2485
    %v2557 = vunpack.c.l.b16 %v2486
    %v2558 = vunpack.c.l.b16 %v2487
    %v2559 = vunpack.c.l.b16 %v2488
    %v2560 = vunpack.c.l.b16 %v2489
    %v2561 = vunpack.c.l.b16 %v2490
    %v2562 = vunpack.c.l.b16 %v2491
    %v2563 = vunpack.c.l.b16 %v2492
    %v2564 = vunpack.c.l.b16 %v2493
    %v2565 = vunpack.c.l.b16 %v2494
    %v2566 = vunpack.c.l.b16 %v2495
    %v2567 = vunpack.c.l.b16 %v2496
    %v2568 = vunpack.c.l.b16 %v2497
    %v2569 = vunpack.c.l.b16 %v2498
    %v2570 = vunpack.c.l.b16 %v2499
    %v2571 = vunpack.c.l.b16 %v2500
    %v2572 = vunpack.c.l.b16 %v2501
    %v2573 = vunpack.c.l.b16 %v2502
    %v2574 = vunpack.c.l.b16 %v2503
    %v2575 = vunpack.c.l.b16 %v2504
    %v2576 = vunpack.c.l.b16 %v2505
    %v2577 = vunpack.c.l.b16 %v2506
    %v2578 = vunpack.c.l.b16 %v2507
    %v2579 = vunpack.c.l.b16 %v2508
    %v2580 = vunpack.c.l.b16 %v2509
    %v2581 = vunpack.c.l.b16 %v2510
    %v2582 = vunpack.c.l.b16 %v2511
    %v2583 = vunpack.c.l.b16 %v2512
    %v2584 = vunpack.c.l.b16 %v2513
    %v2585 = vpack.c.b16 %v2554, %v2553
    %v2586 = vpack.c.b16 %v2556, %v2555
    %v2587 = vpack.c.b16 %v2558, %v2557
    %v2588 = vpack.c.b16 %v2560, %v2559
    %v2589 = vpack.c.b16 %v2562, %v2561
    %v2590 = vpack.c.b16 %v2564, %v2563
    %v2591 = vpack.c.b16 %v2566, %v2565
    %v2592 = vpack.c.b16 %v2568, %v2567
    %v2593 = vpack.c.b16 %v2570, %v2569
    %v2594 = vpack.c.b16 %v2572, %v2571
    %v2595 = vpack.c.b16 %v2574, %v2573
    %v2596 = vpack.c.b16 %v2576, %v2575
    %v2597 = vpack.c.b16 %v2578, %v2577
    %v2598 = vpack.c.b16 %v2580, %v2579
    %v2599 = vpack.c.b16 %v2582, %v2581
    %v2600 = vpack.c.b16 %v2584, %v2583
    %2617 = vmatprep.subr.bf16.mxu0 0
    %2618 = vmatpush1.bf16.msra.mxu0 %v2585
    %2619 = vmatprep.subr.bf16.mxu0 0
    %2620 = vmatpush1.bf16.msra.mxu0 %v2586
    %2621 = vmatprep.subr.bf16.mxu0 0
    %2622 = vmatpush1.bf16.msra.mxu0 %v2587
    %2623 = vmatprep.subr.bf16.mxu0 0
    %2624 = vmatpush1.bf16.msra.mxu0 %v2588
    %2625 = vmatprep.subr.bf16.mxu0 0
    %2626 = vmatpush1.bf16.msra.mxu0 %v2589
    %2627 = vmatprep.subr.bf16.mxu0 0
    %2628 = vmatpush1.bf16.msra.mxu0 %v2590
    %2629 = vmatprep.subr.bf16.mxu0 0
    %2630 = vmatpush1.bf16.msra.mxu0 %v2591
    %2631 = vmatprep.subr.bf16.mxu0 0
    %2632 = vmatpush1.bf16.msra.mxu0 %v2592
    %2633 = vmatprep.subr.bf16.mxu0 0
    %2634 = vmatpush1.bf16.msra.mxu0 %v2593
    %2635 = vmatprep.subr.bf16.mxu0 0
    %2636 = vmatpush1.bf16.msra.mxu0 %v2594
    %2637 = vmatprep.subr.bf16.mxu0 0
    %2638 = vmatpush1.bf16.msra.mxu0 %v2595
    %2639 = vmatprep.subr.bf16.mxu0 0
    %2640 = vmatpush1.bf16.msra.mxu0 %v2596
    %2641 = vmatprep.subr.bf16.mxu0 0
    %2642 = vmatpush1.bf16.msra.mxu0 %v2597
    %2643 = vmatprep.subr.bf16.mxu0 0
    %2644 = vmatpush1.bf16.msra.mxu0 %v2598
    %2645 = vmatprep.subr.bf16.mxu0 0
    %2646 = vmatpush1.bf16.msra.mxu0 %v2599
    %2647 = vmatprep.subr.bf16.mxu0 0
    %2648 = vmatpush1.bf16.msra.mxu0 %v2600
    %2649 = vmatprep.mubr.bf16.mxu0 %v2479
    %2650 = vmatmul.mubr.bf16.gmra.mrb[0].mxu0 %v2478
    %v2651 = vpop.f32.mrb[0].mxu0
    %v2652 = vadd.f32 %v2519, %v2651
    %v2653 = vpop.f32.mrb[0].mxu0
    %v2654 = vpop.f32.mrb[0].mxu0
    %v2655 = vadd.f32 %v2519, %v2654
    %v2656 = vpop.f32.mrb[0].mxu0
    %2657 = vmatprep.mubr.bf16.mxu0 %v2481
    %2658 = vmatmul.mubr.bf16.gmra.mrb[0].mxu0 %v2480
    %v2659 = vpop.f32.mrb[0].mxu0
    %v2660 = vadd.f32 %v2519, %v2659
    %v2661 = vpop.f32.mrb[0].mxu0
    %v2662 = vpop.f32.mrb[0].mxu0
    %v2663 = vadd.f32 %v2519, %v2662
    %v2664 = vpop.f32.mrb[0].mxu0
    %2665 = vdwg.mxu0
    %v2666 = vadd.f32 %v2063, %v2652
    %v2667 = vadd.f32 %v2064, %v2655
    %v2668 = vadd.f32 %v2065, %v2660
    %v2669 = vadd.f32 %v2066, %v2663
    %2670 = vst.msk [vmem:[#allocation4] sm:$0xff] %vm52, %v2666
    %2671 = vst.msk [vmem:[#allocation4 + $0x8] sm:$0xff] %vm52, %v2667
    %2672 = vst.msk [vmem:[#allocation4 + $0x10] sm:$0xff] %vm52, %v2668
    %2673 = vst.msk [vmem:[#allocation4 + $0x18] sm:$0xff] %vm52, %v2669
    // Predicated region
    $region54: #{tpu_custom_call.1} parent=1 // pred_check
      _
    $region55: #{tpu_custom_call.1} parent=1 // pred_check_branch
      %2675 = sbr.rel (0) target = $region57
    $region56: #{tpu_custom_call.1} parent=1 // pred_region
      %s2677 = ssub.s32 512, 512
      %2678 = vsyncadd [#allocation5], %s2677
      %s2679 = sshll.u32 [#allocation4], 4
      %s2680 = int_to_ptr.vmem [resolvable:$true] %s2679
      %2685 = dma.vmem_to_hbm [thread:$0]  %s2680, 512, %s13, [#allocation5], 128, 128, 8
    $region57: #{tpu_custom_call.1} parent=1 // pred_fallthru
      _
    // Predicated region
    $region58: #{tpu_custom_call.1} parent=1 // pred_check
      _
    $region59: #{tpu_custom_call.1} parent=1 // pred_check_branch
      %2687 = sbr.rel (0) target = $region61
    $region60: #{tpu_custom_call.1} parent=1 // pred_region
      %2688 = dma.done [#allocation5], 512
    $region61: #{tpu_custom_call.1} parent=1 // pred_fallthru
      _
    %2689 = vsyncpa [#allocation5], 1

</llo_original>
